<compile_context>
chip_gen: v5e
topology: v5e:2x2
jax: 0.10.0
libtpu: 0.0.40
codegen_flags: <defaults>
</compile_context>

<pallas_src>
import math

import numpy as np

import jax
import jax.numpy as jnp
from jax.experimental import pallas as pl
from jax.experimental.pallas import tpu as pltpu


# -----------------------------------------------------------------------------
# Shared helpers
# -----------------------------------------------------------------------------
def _layernorm(x, g, b, eps=1e-5):
    mu = jnp.mean(x, axis=-1, keepdims=True)
    var = jnp.mean((x - mu) ** 2, axis=-1, keepdims=True)
    return (x - mu) * jax.lax.rsqrt(var + eps) * g + b


def _choose_block_batch(batch, seq, target_rows=256):
    """Largest divisor TB of `batch` whose (TB*seq, D) row slab obeys the
    sublane rule (multiple of 8, or the whole array); prefer >= 2 grid steps so
    v7x can shard the batch-tile axis across its two TensorCores."""
    divs = [d for d in range(1, batch + 1) if batch % d == 0]
    ok = [d for d in divs
          if d * seq <= target_rows and (((d * seq) % 8 == 0) or d == batch)]
    if not ok:
        return batch
    multi = [d for d in ok if batch // d >= 2]
    return max(multi) if multi else max(ok)


# -----------------------------------------------------------------------------
# Fused backbone kernel: all transformer layers for one batch tile.
# -----------------------------------------------------------------------------
def make_fused_kernel(*, depth, n_heads, head_dim, emb_dim, hidden_dim,
                      block_batch, seq_len, use_bf16):
    D, H, Dh = emb_dim, n_heads, head_dim
    rows = block_batch * seq_len
    del rows  # shapes are carried by the refs; kept for clarity

    if use_bf16:
        def cast(t):
            return t.astype(jnp.bfloat16)
    else:
        def cast(t):
            return t

    def mm(a, w, b):
        # (M, in) @ (in, out) on the MXU with f32 accumulation, f32 bias add.
        return jnp.dot(cast(a), cast(w), preferred_element_type=jnp.float32) + b

    def softmax_masked(x, bias):
        # additive bias re-applied so masked (cross-batch) keys stay at -1e30
        # through BOTH softmaxes of the reference model.
        x = x + bias
        m = jnp.max(x, axis=-1, keepdims=True)
        e = jnp.exp(x - m)
        return e * pl.reciprocal(jnp.sum(e, axis=-1, keepdims=True), approx=True)

    n_weights = [10 if i == 0 else 12 for i in range(depth)]

    def kernel(x_ref, bias_ref, *refs):
        o_ref = refs[-1]
        w_refs = refs[:-1]

        bias = bias_ref[...]            # (rows, rows) block-diagonal 0 / -1e30
        x = x_ref[...]                  # (rows, D), f32

        off = 0
        for idx in range(depth):
            lw = w_refs[off:off + n_weights[idx]]
            off += n_weights[idx]
            if idx == 0:
                g0 = b0 = None
                wqkv, bqkv, wout, bout, g1, b1, w0, bf0, w1, bf1 = lw
            else:
                g0, b0, wqkv, bqkv, wout, bout, g1, b1, w0, bf0, w1, bf1 = lw

            # ---------------- attention ----------------
            h = _layernorm(x, g0[...], b0[...]) if g0 is not None else x
            qkv = mm(h, wqkv[...], bqkv[...])          # (rows, 3D)

            # torch column layout is [q|k|v] per head: gather each head's 8-wide
            # lane slice and stack heads on a leading batch axis, then run all
            # heads / all rows with two batched contractions.
            q = jnp.stack(
                [qkv[:, hd * 3 * Dh:hd * 3 * Dh + Dh] for hd in range(H)], axis=0)
            k = jnp.stack(
                [qkv[:, hd * 3 * Dh + Dh:hd * 3 * Dh + 2 * Dh] for hd in range(H)], axis=0)
            v = jnp.stack(
                [qkv[:, hd * 3 * Dh + 2 * Dh:hd * 3 * Dh + 3 * Dh] for hd in range(H)], axis=0)

            scores = jnp.einsum("hqd,hkd->hqk", cast(q), cast(k),
                                preferred_element_type=jnp.float32)   # (H, rows, rows)
            att = softmax_masked(scores, bias)
            att = softmax_masked(att, bias)        # reference applies softmax twice
            ctx = jnp.einsum("hqk,hkd->hqd", cast(att), cast(v),
                             preferred_element_type=jnp.float32)      # (H, rows, Dh)

            attn = jnp.concatenate([ctx[hd] for hd in range(H)], axis=-1)  # (rows, D)
            x = x + mm(attn, wout[...], bout[...])

            # ---------------- FFN (reglu) ----------------
            h2 = _layernorm(x, g1[...], b1[...])
            y = mm(h2, w0[...], bf0[...])              # (rows, 2*hidden)
            act = y[:, :hidden_dim] * jnp.maximum(y[:, hidden_dim:], 0.0)
            x = x + mm(act, w1[...], bf1[...])

        o_ref[...] = x.astype(o_ref.dtype)

    return kernel


def fused_backbone(x_tokens, layers, *, n_heads, head_dim, emb_dim, hidden_dim,
                   block_batch=None, use_bf16=True):
    B, S, D = x_tokens.shape
    depth = len(layers)
    TB = block_batch if block_batch is not None else _choose_block_batch(B, S)
    assert B % TB == 0
    rows = TB * S
    n_blocks = B // TB

    # Additive block-diagonal attention bias for the flattened (TB*S) row slab:
    # 0 within a batch element's SxS block, -1e30 across different elements.
    bid = np.arange(rows) // S
    attn_bias = jnp.asarray(
        np.where(bid[:, None] == bid[None, :], 0.0, -1e30).astype(np.float32))

    flat_w = [w for lw in layers for w in lw]
    kernel = make_fused_kernel(depth=depth, n_heads=n_heads, head_dim=head_dim,
                               emb_dim=emb_dim, hidden_dim=hidden_dim,
                               block_batch=TB, seq_len=S, use_bf16=use_bf16)

    def _full_spec(a):
        nd = a.ndim
        return pl.BlockSpec(a.shape, (lambda b, _nd=nd: (0,) * _nd))

    in_specs = ([pl.BlockSpec((rows, D), lambda b: (b, 0)), _full_spec(attn_bias)]
                + [_full_spec(w) for w in flat_w])

    out = pl.pallas_call(
        kernel,
        out_shape=jax.ShapeDtypeStruct((B * S, D), x_tokens.dtype),
        grid=(n_blocks,),
        in_specs=in_specs,
        out_specs=pl.BlockSpec((rows, D), lambda b: (b, 0)),
        # weights/bias use constant index_maps -> fetched once, kept resident.
        compiler_params=pltpu.CompilerParams(dimension_semantics=("parallel",)),
    )(x_tokens.reshape(B * S, D), attn_bias, *flat_w)

    return out.reshape(B, S, D)


# -----------------------------------------------------------------------------
# Parameter prep: fold the reference's score scaling into the q columns.
# -----------------------------------------------------------------------------
def _fold_attention_scale(layers, n_heads, head_dim, emb_dim):
    inv_scale = math.sqrt(emb_dim)  # reference DIVIDES scores by emb_dim**-0.5
    col = jnp.arange(3 * emb_dim)
    qmask = (col % (3 * head_dim)) < head_dim
    scale_row = jnp.where(qmask, inv_scale, 1.0).astype(jnp.float32)[None, :]
    out = []
    for idx, lw in enumerate(layers):
        lw = list(lw)
        w_pos = 0 if idx == 0 else 2      # position of W_qkv inside the layer list
        lw[w_pos] = lw[w_pos] * scale_row
        lw[w_pos + 1] = lw[w_pos + 1] * scale_row
        out.append(lw)
    return out


# -----------------------------------------------------------------------------
# Feature tokenizer (plain-JAX glue: broadcasted scale + embedding gather)
# -----------------------------------------------------------------------------
def tokenize(x_conts, x_cats, tok_weight, tok_bias, cat_weights, category_offsets):
    B = x_conts.shape[0]
    ones = jnp.ones((B, 1), x_conts.dtype)
    xc = jnp.concatenate([ones, x_conts], axis=1)                 # (B, cont+1)
    x = tok_weight[None] * xc[:, :, None]                         # (B, cont+1, D)
    cat_emb = cat_weights[x_cats + category_offsets[None]]        # (B, n_cats, D)
    x = jnp.concatenate([x, cat_emb], axis=1)                     # (B, S, D)
    bias = jnp.concatenate(
        [jnp.zeros((1, tok_bias.shape[1]), tok_bias.dtype), tok_bias], axis=0)
    return x + bias[None]


# -----------------------------------------------------------------------------
# Full model
# -----------------------------------------------------------------------------
def ft_transformer_forward(x_conts, x_cats, params, cfg, *, use_bf16=True,
                           block_batch=None):
    emb_dim, n_heads, hidden_dim = cfg["emb_dim"], cfg["n_heads"], cfg["hidden_dim"]
    head_dim = emb_dim // n_heads
    x = tokenize(x_conts, x_cats, params["tok_weight"], params["tok_bias"],
                 params["cat_weights"], params["category_offsets"])
    layers = _fold_attention_scale(params["layers"], n_heads, head_dim, emb_dim)
    x = fused_backbone(x, layers, n_heads=n_heads, head_dim=head_dim,
                       emb_dim=emb_dim, hidden_dim=hidden_dim,
                       block_batch=block_batch, use_bf16=use_bf16)
    return x[:, 0]  # CLS-style token


# -----------------------------------------------------------------------------
# Pure-JAX reference (mirrors the PyTorch forward exactly) for sanity checking
# -----------------------------------------------------------------------------
def reference_forward(x_conts, x_cats, params, cfg):
    HI = jax.lax.Precision.HIGHEST
    emb_dim, n_heads = cfg["emb_dim"], cfg["n_heads"]
    head_dim = emb_dim // n_heads
    hidden = cfg["hidden_dim"]
    scale = emb_dim ** (-0.5)

    x = tokenize(x_conts, x_cats, params["tok_weight"], params["tok_bias"],
                 params["cat_weights"], params["category_offsets"])

    for idx, lw in enumerate(params["layers"]):
        if idx != 0:
            g0, b0, wqkv, bqkv, wout, bout, g1, b1, w0, bf0, w1, bf1 = lw
        else:
            wqkv, bqkv, wout, bout, g1, b1, w0, bf0, w1, bf1 = lw
            g0 = b0 = None

        h = _layernorm(x, g0, b0) if g0 is not None else x
        B, S, D = h.shape
        qkv = jnp.einsum("bsd,de->bse", h, wqkv, precision=HI) + bqkv
        qkv = qkv.reshape(B, S, n_heads, 3 * head_dim).transpose(0, 2, 1, 3)
        q, k, v = (qkv[..., :head_dim], qkv[..., head_dim:2 * head_dim],
                   qkv[..., 2 * head_dim:])
        att = jax.nn.softmax(
            jnp.einsum("bhqd,bhkd->bhqk", q, k, precision=HI) / scale, axis=-1)
        att = jax.nn.softmax(att, axis=-1)
        o = jnp.einsum("bhqk,bhkd->bhqd", att, v, precision=HI)
        o = o.transpose(0, 2, 1, 3).reshape(B, S, D)
        o = jnp.einsum("bsd,de->bse", o, wout, precision=HI) + bout
        x = x + o

        h2 = _layernorm(x, g1, b1)
        y = jnp.einsum("bsd,de->bse", h2, w0, precision=HI) + bf0
        act = y[..., :hidden] * jnp.maximum(y[..., hidden:], 0.0)
        z = jnp.einsum("bsh,hd->bsd", act, w1, precision=HI) + bf1
        x = x + z
    return x[:, 0]


# -----------------------------------------------------------------------------
# Deterministic parameter construction
# -----------------------------------------------------------------------------
def init_params(key, *, cont_nums, cat_dims, emb_dim, hidden_dim, depth):
    n_cats = len(cat_dims)
    ks = iter(jax.random.split(key, 8 + depth * 8))

    def rnd(k, shape, scale=0.1):
        return jax.random.normal(k, shape, jnp.float32) * scale

    params = {
        "tok_weight": rnd(next(ks), (cont_nums + 1, emb_dim)),
        "tok_bias": rnd(next(ks), (cont_nums + n_cats, emb_dim)),
        "cat_weights": rnd(next(ks), (sum(cat_dims), emb_dim)),
        "category_offsets": jnp.cumsum(
            jnp.array([0] + list(cat_dims[:-1]), jnp.int32)),
        "layers": [],
    }

    for idx in range(depth):
        layer = []
        if idx != 0:
            layer += [jnp.ones((1, emb_dim), jnp.float32),   # norm0 gamma
                      jnp.zeros((1, emb_dim), jnp.float32)]  # norm0 beta
        layer += [
            rnd(next(ks), (emb_dim, 3 * emb_dim)),            # W_qkv (in, out)
            rnd(next(ks), (1, 3 * emb_dim)),                  # b_qkv
            rnd(next(ks), (emb_dim, emb_dim)),                # W_out
            rnd(next(ks), (1, emb_dim)),                      # b_out
            jnp.ones((1, emb_dim), jnp.float32),              # norm1 gamma
            jnp.zeros((1, emb_dim), jnp.float32),             # norm1 beta
            rnd(next(ks), (emb_dim, 2 * hidden_dim)),         # linear0 W
            rnd(next(ks), (1, 2 * hidden_dim)),               # linear0 b
            rnd(next(ks), (hidden_dim, emb_dim)),             # linear1 W
            rnd(next(ks), (1, emb_dim)),                      # linear1 b
        ]
        params["layers"].append(layer)
    return params


# -----------------------------------------------------------------------------
if __name__ == "__main__":
    # Small configuration consistent with the module's constructor.
    B = 8
    cont_nums = 3
    cat_dims = (5, 7)
    emb_dim = 32
    n_heads = 4
    ffn_factor_dim = 2.0
    depth = 2
    hidden_dim = int(emb_dim * ffn_factor_dim)

    cfg = {"emb_dim": emb_dim, "n_heads": n_heads, "hidden_dim": hidden_dim}

    key = jax.random.PRNGKey(0)
    kp, kc, kcat = jax.random.split(key, 3)
    params = init_params(kp, cont_nums=cont_nums, cat_dims=cat_dims,
                         emb_dim=emb_dim, hidden_dim=hidden_dim, depth=depth)

    x_conts = jax.random.normal(kc, (B, cont_nums), jnp.float32)
    x_cats = jnp.stack(
        [jax.random.randint(kcat, (B,), 0, d) for d in cat_dims], axis=1
    ).astype(jnp.int32)

    ref = jax.block_until_ready(reference_forward(x_conts, x_cats, params, cfg))

    # f32-matmul path: tight structural check against the pure-JAX reference.
    out_f32 = jax.block_until_ready(
        ft_transformer_forward(x_conts, x_cats, params, cfg, use_bf16=False))
    if not jnp.allclose(out_f32, ref, atol=2e-2, rtol=2e-2):
        raise AssertionError(
            "f32 Pallas output mismatch vs reference: max abs diff "
            f"{float(jnp.max(jnp.abs(out_f32 - ref)))}")

    # bf16-matmul fast path (default; MXU-native on v5e/v6e/v7x), looser tol.
    out = jax.block_until_ready(
        ft_transformer_forward(x_conts, x_cats, params, cfg, use_bf16=True))
    if not jnp.allclose(out, ref, atol=5e-2, rtol=5e-2):
        raise AssertionError(
            "bf16 Pallas output mismatch vs reference: max abs diff "
            f"{float(jnp.max(jnp.abs(out - ref)))}")

    assert out.shape == (B, emb_dim)
    print("KERNEL_OK")
</pallas_src>

<mosaic_0001>
module attributes {stable_mosaic.version = 11 : i64} {
  func.func @kernel(%arg0: i32, %arg1: memref<24x32xf32, #tpu.memory_space<vmem>>, %arg2: memref<24x24xf32, #tpu.memory_space<vmem>>, %arg3: memref<32x96xf32, #tpu.memory_space<vmem>>, %arg4: memref<1x96xf32, #tpu.memory_space<vmem>>, %arg5: memref<32x32xf32, #tpu.memory_space<vmem>>, %arg6: memref<1x32xf32, #tpu.memory_space<vmem>>, %arg7: memref<1x32xf32, #tpu.memory_space<vmem>>, %arg8: memref<1x32xf32, #tpu.memory_space<vmem>>, %arg9: memref<32x128xf32, #tpu.memory_space<vmem>>, %arg10: memref<1x128xf32, #tpu.memory_space<vmem>>, %arg11: memref<64x32xf32, #tpu.memory_space<vmem>>, %arg12: memref<1x32xf32, #tpu.memory_space<vmem>>, %arg13: memref<1x32xf32, #tpu.memory_space<vmem>>, %arg14: memref<1x32xf32, #tpu.memory_space<vmem>>, %arg15: memref<32x96xf32, #tpu.memory_space<vmem>>, %arg16: memref<1x96xf32, #tpu.memory_space<vmem>>, %arg17: memref<32x32xf32, #tpu.memory_space<vmem>>, %arg18: memref<1x32xf32, #tpu.memory_space<vmem>>, %arg19: memref<1x32xf32, #tpu.memory_space<vmem>>, %arg20: memref<1x32xf32, #tpu.memory_space<vmem>>, %arg21: memref<32x128xf32, #tpu.memory_space<vmem>>, %arg22: memref<1x128xf32, #tpu.memory_space<vmem>>, %arg23: memref<64x32xf32, #tpu.memory_space<vmem>>, %arg24: memref<1x32xf32, #tpu.memory_space<vmem>>, %arg25: memref<24x32xf32, #tpu.memory_space<vmem>>) attributes {dimension_semantics = [#tpu.dimension_semantics<parallel>], iteration_bounds = array<i64: 2>, scalar_prefetch = 0 : i64, scratch_operands = 0 : i64, tpu.core_type = #tpu.core_type<tc>, window_params = [{transform_indices = @transform_0, window_bounds = array<i64: 24, 32>}, {pipeline_mode = #tpu.pipeline_mode<synchronous>, transform_indices = @transform_1, window_bounds = array<i64: 24, 24>}, {pipeline_mode = #tpu.pipeline_mode<synchronous>, transform_indices = @transform_2, window_bounds = array<i64: 32, 96>}, {pipeline_mode = #tpu.pipeline_mode<synchronous>, transform_indices = @transform_3, window_bounds = array<i64: 1, 96>}, {pipeline_mode = #tpu.pipeline_mode<synchronous>, transform_indices = @transform_4, window_bounds = array<i64: 32, 32>}, {pipeline_mode = #tpu.pipeline_mode<synchronous>, transform_indices = @transform_5, window_bounds = array<i64: 1, 32>}, {pipeline_mode = #tpu.pipeline_mode<synchronous>, transform_indices = @transform_6, window_bounds = array<i64: 1, 32>}, {pipeline_mode = #tpu.pipeline_mode<synchronous>, transform_indices = @transform_7, window_bounds = array<i64: 1, 32>}, {pipeline_mode = #tpu.pipeline_mode<synchronous>, transform_indices = @transform_8, window_bounds = array<i64: 32, 128>}, {pipeline_mode = #tpu.pipeline_mode<synchronous>, transform_indices = @transform_9, window_bounds = array<i64: 1, 128>}, {pipeline_mode = #tpu.pipeline_mode<synchronous>, transform_indices = @transform_10, window_bounds = array<i64: 64, 32>}, {pipeline_mode = #tpu.pipeline_mode<synchronous>, transform_indices = @transform_11, window_bounds = array<i64: 1, 32>}, {pipeline_mode = #tpu.pipeline_mode<synchronous>, transform_indices = @transform_12, window_bounds = array<i64: 1, 32>}, {pipeline_mode = #tpu.pipeline_mode<synchronous>, transform_indices = @transform_13, window_bounds = array<i64: 1, 32>}, {pipeline_mode = #tpu.pipeline_mode<synchronous>, transform_indices = @transform_14, window_bounds = array<i64: 32, 96>}, {pipeline_mode = #tpu.pipeline_mode<synchronous>, transform_indices = @transform_15, window_bounds = array<i64: 1, 96>}, {pipeline_mode = #tpu.pipeline_mode<synchronous>, transform_indices = @transform_16, window_bounds = array<i64: 32, 32>}, {pipeline_mode = #tpu.pipeline_mode<synchronous>, transform_indices = @transform_17, window_bounds = array<i64: 1, 32>}, {pipeline_mode = #tpu.pipeline_mode<synchronous>, transform_indices = @transform_18, window_bounds = array<i64: 1, 32>}, {pipeline_mode = #tpu.pipeline_mode<synchronous>, transform_indices = @transform_19, window_bounds = array<i64: 1, 32>}, {pipeline_mode = #tpu.pipeline_mode<synchronous>, transform_indices = @transform_20, window_bounds = array<i64: 32, 128>}, {pipeline_mode = #tpu.pipeline_mode<synchronous>, transform_indices = @transform_21, window_bounds = array<i64: 1, 128>}, {pipeline_mode = #tpu.pipeline_mode<synchronous>, transform_indices = @transform_22, window_bounds = array<i64: 64, 32>}, {pipeline_mode = #tpu.pipeline_mode<synchronous>, transform_indices = @transform_23, window_bounds = array<i64: 1, 32>}, {transform_indices = @transform_24, window_bounds = array<i64: 24, 32>}]} {
    %c0 = arith.constant 0 : index
    %c0_0 = arith.constant 0 : index
    %0 = vector.load %arg2[%c0, %c0_0] : memref<24x24xf32, #tpu.memory_space<vmem>>, vector<24x24xf32>
    %c0_1 = arith.constant 0 : index
    %c0_2 = arith.constant 0 : index
    %1 = vector.load %arg1[%c0_1, %c0_2] : memref<24x32xf32, #tpu.memory_space<vmem>>, vector<24x32xf32>
    %c0_3 = arith.constant 0 : index
    %c0_4 = arith.constant 0 : index
    %2 = vector.load %arg3[%c0_3, %c0_4] : memref<32x96xf32, #tpu.memory_space<vmem>>, vector<32x96xf32>
    %c0_5 = arith.constant 0 : index
    %c0_6 = arith.constant 0 : index
    %3 = vector.load %arg4[%c0_5, %c0_6] : memref<1x96xf32, #tpu.memory_space<vmem>>, vector<1x96xf32>
    %cst = arith.constant dense<0.000000e+00> : vector<24x96xf32>
    %4 = tpu.matmul %1, %2, %cst {dimension_numbers = #tpu.dot_dimension_numbers<[1], [0], [0], [1], [0, 0, 1, 1], [], []>} : vector<24x32xf32>, vector<32x96xf32>, vector<24x96xf32> -> vector<24x96xf32>
    %5 = vector.broadcast %3 : vector<1x96xf32> to vector<24x96xf32>
    %6 = arith.addf %4, %5 : vector<24x96xf32>
    %7 = vector.extract_strided_slice %6 {offsets = [0, 0], sizes = [24, 8], strides = [1, 1]} : vector<24x96xf32> to vector<24x8xf32>
    %8 = vector.extract_strided_slice %6 {offsets = [0, 24], sizes = [24, 8], strides = [1, 1]} : vector<24x96xf32> to vector<24x8xf32>
    %9 = vector.extract_strided_slice %6 {offsets = [0, 48], sizes = [24, 8], strides = [1, 1]} : vector<24x96xf32> to vector<24x8xf32>
    %10 = vector.extract_strided_slice %6 {offsets = [0, 72], sizes = [24, 8], strides = [1, 1]} : vector<24x96xf32> to vector<24x8xf32>
    %11 = vector.shape_cast %7 : vector<24x8xf32> to vector<1x24x8xf32>
    %12 = vector.shape_cast %8 : vector<24x8xf32> to vector<1x24x8xf32>
    %13 = vector.shape_cast %9 : vector<24x8xf32> to vector<1x24x8xf32>
    %14 = vector.shape_cast %10 : vector<24x8xf32> to vector<1x24x8xf32>
    %15 = tpu.concatenate %11, %12, %13, %14 in 0 : vector<1x24x8xf32>, vector<1x24x8xf32>, vector<1x24x8xf32>, vector<1x24x8xf32> -> vector<4x24x8xf32>
    %16 = vector.extract_strided_slice %6 {offsets = [0, 8], sizes = [24, 8], strides = [1, 1]} : vector<24x96xf32> to vector<24x8xf32>
    %17 = vector.extract_strided_slice %6 {offsets = [0, 32], sizes = [24, 8], strides = [1, 1]} : vector<24x96xf32> to vector<24x8xf32>
    %18 = vector.extract_strided_slice %6 {offsets = [0, 56], sizes = [24, 8], strides = [1, 1]} : vector<24x96xf32> to vector<24x8xf32>
    %19 = vector.extract_strided_slice %6 {offsets = [0, 80], sizes = [24, 8], strides = [1, 1]} : vector<24x96xf32> to vector<24x8xf32>
    %20 = vector.shape_cast %16 : vector<24x8xf32> to vector<1x24x8xf32>
    %21 = vector.shape_cast %17 : vector<24x8xf32> to vector<1x24x8xf32>
    %22 = vector.shape_cast %18 : vector<24x8xf32> to vector<1x24x8xf32>
    %23 = vector.shape_cast %19 : vector<24x8xf32> to vector<1x24x8xf32>
    %24 = tpu.concatenate %20, %21, %22, %23 in 0 : vector<1x24x8xf32>, vector<1x24x8xf32>, vector<1x24x8xf32>, vector<1x24x8xf32> -> vector<4x24x8xf32>
    %25 = vector.extract_strided_slice %6 {offsets = [0, 16], sizes = [24, 8], strides = [1, 1]} : vector<24x96xf32> to vector<24x8xf32>
    %26 = vector.extract_strided_slice %6 {offsets = [0, 40], sizes = [24, 8], strides = [1, 1]} : vector<24x96xf32> to vector<24x8xf32>
    %27 = vector.extract_strided_slice %6 {offsets = [0, 64], sizes = [24, 8], strides = [1, 1]} : vector<24x96xf32> to vector<24x8xf32>
    %28 = vector.extract_strided_slice %6 {offsets = [0, 88], sizes = [24, 8], strides = [1, 1]} : vector<24x96xf32> to vector<24x8xf32>
    %29 = vector.shape_cast %25 : vector<24x8xf32> to vector<1x24x8xf32>
    %30 = vector.shape_cast %26 : vector<24x8xf32> to vector<1x24x8xf32>
    %31 = vector.shape_cast %27 : vector<24x8xf32> to vector<1x24x8xf32>
    %32 = vector.shape_cast %28 : vector<24x8xf32> to vector<1x24x8xf32>
    %33 = tpu.concatenate %29, %30, %31, %32 in 0 : vector<1x24x8xf32>, vector<1x24x8xf32>, vector<1x24x8xf32>, vector<1x24x8xf32> -> vector<4x24x8xf32>
    "tpu.trace_start"() <{level = 10 : i32, message = "hqd,hkd->hqk"}> : () -> ()
    %cst_7 = arith.constant dense<0.000000e+00> : vector<4x24x24xf32>
    %34 = tpu.matmul %15, %24, %cst_7 {dimension_numbers = #tpu.dot_dimension_numbers<[2], [2], [1], [1], [0, 0, 0, 1, 1, 1], [0], [0]>} : vector<4x24x8xf32>, vector<4x24x8xf32>, vector<4x24x24xf32> -> vector<4x24x24xf32>
    "tpu.trace_stop"() : () -> ()
    %35 = vector.shape_cast %0 : vector<24x24xf32> to vector<1x24x24xf32>
    %36 = vector.broadcast %35 : vector<1x24x24xf32> to vector<4x24x24xf32>
    %37 = arith.addf %34, %36 : vector<4x24x24xf32>
    %cst_8 = arith.constant dense<0xFF800000> : vector<4x24xf32>
    %38 = vector.multi_reduction <maximumf>, %37, %cst_8 [2] : vector<4x24x24xf32> to vector<4x24xf32>
    %39 = vector.shape_cast %38 : vector<4x24xf32> to vector<4x24x1xf32>
    %40 = vector.broadcast %39 : vector<4x24x1xf32> to vector<4x24x24xf32>
    %41 = arith.subf %37, %40 : vector<4x24x24xf32>
    %42 = math.exp %41 : vector<4x24x24xf32>
    %cst_9 = arith.constant dense<0.000000e+00> : vector<4x24xf32>
    %43 = vector.multi_reduction <add>, %42, %cst_9 [2] : vector<4x24x24xf32> to vector<4x24xf32>
    %44 = vector.shape_cast %43 : vector<4x24xf32> to vector<4x24x1xf32>
    %45 = tpu.reciprocal %44 {approx = true} : vector<4x24x1xf32> -> vector<4x24x1xf32>
    %46 = vector.broadcast %45 : vector<4x24x1xf32> to vector<4x24x24xf32>
    %47 = arith.mulf %42, %46 : vector<4x24x24xf32>
    %48 = vector.shape_cast %0 : vector<24x24xf32> to vector<1x24x24xf32>
    %49 = vector.broadcast %48 : vector<1x24x24xf32> to vector<4x24x24xf32>
    %50 = arith.addf %47, %49 : vector<4x24x24xf32>
    %cst_10 = arith.constant dense<0xFF800000> : vector<4x24xf32>
    %51 = vector.multi_reduction <maximumf>, %50, %cst_10 [2] : vector<4x24x24xf32> to vector<4x24xf32>
    %52 = vector.shape_cast %51 : vector<4x24xf32> to vector<4x24x1xf32>
    %53 = vector.broadcast %52 : vector<4x24x1xf32> to vector<4x24x24xf32>
    %54 = arith.subf %50, %53 : vector<4x24x24xf32>
    %55 = math.exp %54 : vector<4x24x24xf32>
    %cst_11 = arith.constant dense<0.000000e+00> : vector<4x24xf32>
    %56 = vector.multi_reduction <add>, %55, %cst_11 [2] : vector<4x24x24xf32> to vector<4x24xf32>
    %57 = vector.shape_cast %56 : vector<4x24xf32> to vector<4x24x1xf32>
    %58 = tpu.reciprocal %57 {approx = true} : vector<4x24x1xf32> -> vector<4x24x1xf32>
    %59 = vector.broadcast %58 : vector<4x24x1xf32> to vector<4x24x24xf32>
    %60 = arith.mulf %55, %59 : vector<4x24x24xf32>
    "tpu.trace_start"() <{level = 10 : i32, message = "hqk,hkd->hqd"}> : () -> ()
    %cst_12 = arith.constant dense<0.000000e+00> : vector<4x24x8xf32>
    %61 = tpu.matmul %60, %33, %cst_12 {dimension_numbers = #tpu.dot_dimension_numbers<[2], [1], [1], [2], [0, 0, 0, 1, 1, 2], [0], [0]>} : vector<4x24x24xf32>, vector<4x24x8xf32>, vector<4x24x8xf32> -> vector<4x24x8xf32>
    "tpu.trace_stop"() : () -> ()
    %62 = vector.extract_strided_slice %61 {offsets = [0, 0, 0], sizes = [1, 24, 8], strides = [1, 1, 1]} : vector<4x24x8xf32> to vector<1x24x8xf32>
    %63 = vector.shape_cast %62 : vector<1x24x8xf32> to vector<24x8xf32>
    %64 = vector.extract_strided_slice %61 {offsets = [1, 0, 0], sizes = [1, 24, 8], strides = [1, 1, 1]} : vector<4x24x8xf32> to vector<1x24x8xf32>
    %65 = vector.shape_cast %64 : vector<1x24x8xf32> to vector<24x8xf32>
    %66 = vector.extract_strided_slice %61 {offsets = [2, 0, 0], sizes = [1, 24, 8], strides = [1, 1, 1]} : vector<4x24x8xf32> to vector<1x24x8xf32>
    %67 = vector.shape_cast %66 : vector<1x24x8xf32> to vector<24x8xf32>
    %68 = vector.extract_strided_slice %61 {offsets = [3, 0, 0], sizes = [1, 24, 8], strides = [1, 1, 1]} : vector<4x24x8xf32> to vector<1x24x8xf32>
    %69 = vector.shape_cast %68 : vector<1x24x8xf32> to vector<24x8xf32>
    %70 = tpu.concatenate %63, %65, %67, %69 in 1 : vector<24x8xf32>, vector<24x8xf32>, vector<24x8xf32>, vector<24x8xf32> -> vector<24x32xf32>
    %c0_13 = arith.constant 0 : index
    %c0_14 = arith.constant 0 : index
    %71 = vector.load %arg5[%c0_13, %c0_14] : memref<32x32xf32, #tpu.memory_space<vmem>>, vector<32x32xf32>
    %c0_15 = arith.constant 0 : index
    %c0_16 = arith.constant 0 : index
    %72 = vector.load %arg6[%c0_15, %c0_16] : memref<1x32xf32, #tpu.memory_space<vmem>>, vector<1x32xf32>
    %cst_17 = arith.constant dense<0.000000e+00> : vector<24x32xf32>
    %73 = tpu.matmul %70, %71, %cst_17 {dimension_numbers = #tpu.dot_dimension_numbers<[1], [0], [0], [1], [0, 0, 1, 1], [], []>} : vector<24x32xf32>, vector<32x32xf32>, vector<24x32xf32> -> vector<24x32xf32>
    %74 = vector.broadcast %72 : vector<1x32xf32> to vector<24x32xf32>
    %75 = arith.addf %73, %74 : vector<24x32xf32>
    %76 = arith.addf %1, %75 : vector<24x32xf32>
    %c0_18 = arith.constant 0 : index
    %c0_19 = arith.constant 0 : index
    %77 = vector.load %arg7[%c0_18, %c0_19] : memref<1x32xf32, #tpu.memory_space<vmem>>, vector<1x32xf32>
    %c0_20 = arith.constant 0 : index
    %c0_21 = arith.constant 0 : index
    %78 = vector.load %arg8[%c0_20, %c0_21] : memref<1x32xf32, #tpu.memory_space<vmem>>, vector<1x32xf32>
    %cst_22 = arith.constant dense<0.000000e+00> : vector<24xf32>
    %79 = vector.multi_reduction <add>, %76, %cst_22 [1] : vector<24x32xf32> to vector<24xf32>
    %80 = vector.shape_cast %79 : vector<24xf32> to vector<24x1xf32>
    %cst_23 = arith.constant 3.200000e+01 : f32
    %81 = vector.broadcast %cst_23 : f32 to vector<24x1xf32>
    %82 = arith.divf %80, %81 : vector<24x1xf32>
    %83 = vector.broadcast %82 : vector<24x1xf32> to vector<24x32xf32>
    %84 = arith.subf %76, %83 : vector<24x32xf32>
    %85 = arith.mulf %84, %84 : vector<24x32xf32>
    %cst_24 = arith.constant dense<0.000000e+00> : vector<24xf32>
    %86 = vector.multi_reduction <add>, %85, %cst_24 [1] : vector<24x32xf32> to vector<24xf32>
    %87 = vector.shape_cast %86 : vector<24xf32> to vector<24x1xf32>
    %cst_25 = arith.constant 3.200000e+01 : f32
    %88 = vector.broadcast %cst_25 : f32 to vector<24x1xf32>
    %89 = arith.divf %87, %88 : vector<24x1xf32>
    %90 = vector.broadcast %82 : vector<24x1xf32> to vector<24x32xf32>
    %91 = arith.subf %76, %90 : vector<24x32xf32>
    %cst_26 = arith.constant 9.99999974E-6 : f32
    %92 = vector.broadcast %cst_26 : f32 to vector<24x1xf32>
    %93 = arith.addf %89, %92 : vector<24x1xf32>
    %94 = math.rsqrt %93 : vector<24x1xf32>
    %95 = vector.broadcast %94 : vector<24x1xf32> to vector<24x32xf32>
    %96 = arith.mulf %91, %95 : vector<24x32xf32>
    %97 = vector.broadcast %77 : vector<1x32xf32> to vector<24x32xf32>
    %98 = arith.mulf %96, %97 : vector<24x32xf32>
    %99 = vector.broadcast %78 : vector<1x32xf32> to vector<24x32xf32>
    %100 = arith.addf %98, %99 : vector<24x32xf32>
    %c0_27 = arith.constant 0 : index
    %c0_28 = arith.constant 0 : index
    %101 = vector.load %arg9[%c0_27, %c0_28] : memref<32x128xf32, #tpu.memory_space<vmem>>, vector<32x128xf32>
    %c0_29 = arith.constant 0 : index
    %c0_30 = arith.constant 0 : index
    %102 = vector.load %arg10[%c0_29, %c0_30] : memref<1x128xf32, #tpu.memory_space<vmem>>, vector<1x128xf32>
    %cst_31 = arith.constant dense<0.000000e+00> : vector<24x128xf32>
    %103 = tpu.matmul %100, %101, %cst_31 {dimension_numbers = #tpu.dot_dimension_numbers<[1], [0], [0], [1], [0, 0, 1, 1], [], []>} : vector<24x32xf32>, vector<32x128xf32>, vector<24x128xf32> -> vector<24x128xf32>
    %104 = vector.broadcast %102 : vector<1x128xf32> to vector<24x128xf32>
    %105 = arith.addf %103, %104 : vector<24x128xf32>
    %106 = vector.extract_strided_slice %105 {offsets = [0, 0], sizes = [24, 64], strides = [1, 1]} : vector<24x128xf32> to vector<24x64xf32>
    %107 = vector.extract_strided_slice %105 {offsets = [0, 64], sizes = [24, 64], strides = [1, 1]} : vector<24x128xf32> to vector<24x64xf32>
    %cst_32 = arith.constant 0.000000e+00 : f32
    %108 = vector.broadcast %cst_32 : f32 to vector<24x64xf32>
    %109 = arith.maximumf %107, %108 : vector<24x64xf32>
    %110 = arith.mulf %106, %109 : vector<24x64xf32>
    %c0_33 = arith.constant 0 : index
    %c0_34 = arith.constant 0 : index
    %111 = vector.load %arg11[%c0_33, %c0_34] : memref<64x32xf32, #tpu.memory_space<vmem>>, vector<64x32xf32>
    %c0_35 = arith.constant 0 : index
    %c0_36 = arith.constant 0 : index
    %112 = vector.load %arg12[%c0_35, %c0_36] : memref<1x32xf32, #tpu.memory_space<vmem>>, vector<1x32xf32>
    %cst_37 = arith.constant dense<0.000000e+00> : vector<24x32xf32>
    %113 = tpu.matmul %110, %111, %cst_37 {dimension_numbers = #tpu.dot_dimension_numbers<[1], [0], [0], [1], [0, 0, 1, 1], [], []>} : vector<24x64xf32>, vector<64x32xf32>, vector<24x32xf32> -> vector<24x32xf32>
    %114 = vector.broadcast %112 : vector<1x32xf32> to vector<24x32xf32>
    %115 = arith.addf %113, %114 : vector<24x32xf32>
    %116 = arith.addf %76, %115 : vector<24x32xf32>
    %c0_38 = arith.constant 0 : index
    %c0_39 = arith.constant 0 : index
    %117 = vector.load %arg13[%c0_38, %c0_39] : memref<1x32xf32, #tpu.memory_space<vmem>>, vector<1x32xf32>
    %c0_40 = arith.constant 0 : index
    %c0_41 = arith.constant 0 : index
    %118 = vector.load %arg14[%c0_40, %c0_41] : memref<1x32xf32, #tpu.memory_space<vmem>>, vector<1x32xf32>
    %cst_42 = arith.constant dense<0.000000e+00> : vector<24xf32>
    %119 = vector.multi_reduction <add>, %116, %cst_42 [1] : vector<24x32xf32> to vector<24xf32>
    %120 = vector.shape_cast %119 : vector<24xf32> to vector<24x1xf32>
    %cst_43 = arith.constant 3.200000e+01 : f32
    %121 = vector.broadcast %cst_43 : f32 to vector<24x1xf32>
    %122 = arith.divf %120, %121 : vector<24x1xf32>
    %123 = vector.broadcast %122 : vector<24x1xf32> to vector<24x32xf32>
    %124 = arith.subf %116, %123 : vector<24x32xf32>
    %125 = arith.mulf %124, %124 : vector<24x32xf32>
    %cst_44 = arith.constant dense<0.000000e+00> : vector<24xf32>
    %126 = vector.multi_reduction <add>, %125, %cst_44 [1] : vector<24x32xf32> to vector<24xf32>
    %127 = vector.shape_cast %126 : vector<24xf32> to vector<24x1xf32>
    %cst_45 = arith.constant 3.200000e+01 : f32
    %128 = vector.broadcast %cst_45 : f32 to vector<24x1xf32>
    %129 = arith.divf %127, %128 : vector<24x1xf32>
    %130 = vector.broadcast %122 : vector<24x1xf32> to vector<24x32xf32>
    %131 = arith.subf %116, %130 : vector<24x32xf32>
    %cst_46 = arith.constant 9.99999974E-6 : f32
    %132 = vector.broadcast %cst_46 : f32 to vector<24x1xf32>
    %133 = arith.addf %129, %132 : vector<24x1xf32>
    %134 = math.rsqrt %133 : vector<24x1xf32>
    %135 = vector.broadcast %134 : vector<24x1xf32> to vector<24x32xf32>
    %136 = arith.mulf %131, %135 : vector<24x32xf32>
    %137 = vector.broadcast %117 : vector<1x32xf32> to vector<24x32xf32>
    %138 = arith.mulf %136, %137 : vector<24x32xf32>
    %139 = vector.broadcast %118 : vector<1x32xf32> to vector<24x32xf32>
    %140 = arith.addf %138, %139 : vector<24x32xf32>
    %c0_47 = arith.constant 0 : index
    %c0_48 = arith.constant 0 : index
    %141 = vector.load %arg15[%c0_47, %c0_48] : memref<32x96xf32, #tpu.memory_space<vmem>>, vector<32x96xf32>
    %c0_49 = arith.constant 0 : index
    %c0_50 = arith.constant 0 : index
    %142 = vector.load %arg16[%c0_49, %c0_50] : memref<1x96xf32, #tpu.memory_space<vmem>>, vector<1x96xf32>
    %cst_51 = arith.constant dense<0.000000e+00> : vector<24x96xf32>
    %143 = tpu.matmul %140, %141, %cst_51 {dimension_numbers = #tpu.dot_dimension_numbers<[1], [0], [0], [1], [0, 0, 1, 1], [], []>} : vector<24x32xf32>, vector<32x96xf32>, vector<24x96xf32> -> vector<24x96xf32>
    %144 = vector.broadcast %142 : vector<1x96xf32> to vector<24x96xf32>
    %145 = arith.addf %143, %144 : vector<24x96xf32>
    %146 = vector.extract_strided_slice %145 {offsets = [0, 0], sizes = [24, 8], strides = [1, 1]} : vector<24x96xf32> to vector<24x8xf32>
    %147 = vector.extract_strided_slice %145 {offsets = [0, 24], sizes = [24, 8], strides = [1, 1]} : vector<24x96xf32> to vector<24x8xf32>
    %148 = vector.extract_strided_slice %145 {offsets = [0, 48], sizes = [24, 8], strides = [1, 1]} : vector<24x96xf32> to vector<24x8xf32>
    %149 = vector.extract_strided_slice %145 {offsets = [0, 72], sizes = [24, 8], strides = [1, 1]} : vector<24x96xf32> to vector<24x8xf32>
    %150 = vector.shape_cast %146 : vector<24x8xf32> to vector<1x24x8xf32>
    %151 = vector.shape_cast %147 : vector<24x8xf32> to vector<1x24x8xf32>
    %152 = vector.shape_cast %148 : vector<24x8xf32> to vector<1x24x8xf32>
    %153 = vector.shape_cast %149 : vector<24x8xf32> to vector<1x24x8xf32>
    %154 = tpu.concatenate %150, %151, %152, %153 in 0 : vector<1x24x8xf32>, vector<1x24x8xf32>, vector<1x24x8xf32>, vector<1x24x8xf32> -> vector<4x24x8xf32>
    %155 = vector.extract_strided_slice %145 {offsets = [0, 8], sizes = [24, 8], strides = [1, 1]} : vector<24x96xf32> to vector<24x8xf32>
    %156 = vector.extract_strided_slice %145 {offsets = [0, 32], sizes = [24, 8], strides = [1, 1]} : vector<24x96xf32> to vector<24x8xf32>
    %157 = vector.extract_strided_slice %145 {offsets = [0, 56], sizes = [24, 8], strides = [1, 1]} : vector<24x96xf32> to vector<24x8xf32>
    %158 = vector.extract_strided_slice %145 {offsets = [0, 80], sizes = [24, 8], strides = [1, 1]} : vector<24x96xf32> to vector<24x8xf32>
    %159 = vector.shape_cast %155 : vector<24x8xf32> to vector<1x24x8xf32>
    %160 = vector.shape_cast %156 : vector<24x8xf32> to vector<1x24x8xf32>
    %161 = vector.shape_cast %157 : vector<24x8xf32> to vector<1x24x8xf32>
    %162 = vector.shape_cast %158 : vector<24x8xf32> to vector<1x24x8xf32>
    %163 = tpu.concatenate %159, %160, %161, %162 in 0 : vector<1x24x8xf32>, vector<1x24x8xf32>, vector<1x24x8xf32>, vector<1x24x8xf32> -> vector<4x24x8xf32>
    %164 = vector.extract_strided_slice %145 {offsets = [0, 16], sizes = [24, 8], strides = [1, 1]} : vector<24x96xf32> to vector<24x8xf32>
    %165 = vector.extract_strided_slice %145 {offsets = [0, 40], sizes = [24, 8], strides = [1, 1]} : vector<24x96xf32> to vector<24x8xf32>
    %166 = vector.extract_strided_slice %145 {offsets = [0, 64], sizes = [24, 8], strides = [1, 1]} : vector<24x96xf32> to vector<24x8xf32>
    %167 = vector.extract_strided_slice %145 {offsets = [0, 88], sizes = [24, 8], strides = [1, 1]} : vector<24x96xf32> to vector<24x8xf32>
    %168 = vector.shape_cast %164 : vector<24x8xf32> to vector<1x24x8xf32>
    %169 = vector.shape_cast %165 : vector<24x8xf32> to vector<1x24x8xf32>
    %170 = vector.shape_cast %166 : vector<24x8xf32> to vector<1x24x8xf32>
    %171 = vector.shape_cast %167 : vector<24x8xf32> to vector<1x24x8xf32>
    %172 = tpu.concatenate %168, %169, %170, %171 in 0 : vector<1x24x8xf32>, vector<1x24x8xf32>, vector<1x24x8xf32>, vector<1x24x8xf32> -> vector<4x24x8xf32>
    "tpu.trace_start"() <{level = 10 : i32, message = "hqd,hkd->hqk"}> : () -> ()
    %cst_52 = arith.constant dense<0.000000e+00> : vector<4x24x24xf32>
    %173 = tpu.matmul %154, %163, %cst_52 {dimension_numbers = #tpu.dot_dimension_numbers<[2], [2], [1], [1], [0, 0, 0, 1, 1, 1], [0], [0]>} : vector<4x24x8xf32>, vector<4x24x8xf32>, vector<4x24x24xf32> -> vector<4x24x24xf32>
    "tpu.trace_stop"() : () -> ()
    %174 = vector.shape_cast %0 : vector<24x24xf32> to vector<1x24x24xf32>
    %175 = vector.broadcast %174 : vector<1x24x24xf32> to vector<4x24x24xf32>
    %176 = arith.addf %173, %175 : vector<4x24x24xf32>
    %cst_53 = arith.constant dense<0xFF800000> : vector<4x24xf32>
    %177 = vector.multi_reduction <maximumf>, %176, %cst_53 [2] : vector<4x24x24xf32> to vector<4x24xf32>
    %178 = vector.shape_cast %177 : vector<4x24xf32> to vector<4x24x1xf32>
    %179 = vector.broadcast %178 : vector<4x24x1xf32> to vector<4x24x24xf32>
    %180 = arith.subf %176, %179 : vector<4x24x24xf32>
    %181 = math.exp %180 : vector<4x24x24xf32>
    %cst_54 = arith.constant dense<0.000000e+00> : vector<4x24xf32>
    %182 = vector.multi_reduction <add>, %181, %cst_54 [2] : vector<4x24x24xf32> to vector<4x24xf32>
    %183 = vector.shape_cast %182 : vector<4x24xf32> to vector<4x24x1xf32>
    %184 = tpu.reciprocal %183 {approx = true} : vector<4x24x1xf32> -> vector<4x24x1xf32>
    %185 = vector.broadcast %184 : vector<4x24x1xf32> to vector<4x24x24xf32>
    %186 = arith.mulf %181, %185 : vector<4x24x24xf32>
    %187 = vector.shape_cast %0 : vector<24x24xf32> to vector<1x24x24xf32>
    %188 = vector.broadcast %187 : vector<1x24x24xf32> to vector<4x24x24xf32>
    %189 = arith.addf %186, %188 : vector<4x24x24xf32>
    %cst_55 = arith.constant dense<0xFF800000> : vector<4x24xf32>
    %190 = vector.multi_reduction <maximumf>, %189, %cst_55 [2] : vector<4x24x24xf32> to vector<4x24xf32>
    %191 = vector.shape_cast %190 : vector<4x24xf32> to vector<4x24x1xf32>
    %192 = vector.broadcast %191 : vector<4x24x1xf32> to vector<4x24x24xf32>
    %193 = arith.subf %189, %192 : vector<4x24x24xf32>
    %194 = math.exp %193 : vector<4x24x24xf32>
    %cst_56 = arith.constant dense<0.000000e+00> : vector<4x24xf32>
    %195 = vector.multi_reduction <add>, %194, %cst_56 [2] : vector<4x24x24xf32> to vector<4x24xf32>
    %196 = vector.shape_cast %195 : vector<4x24xf32> to vector<4x24x1xf32>
    %197 = tpu.reciprocal %196 {approx = true} : vector<4x24x1xf32> -> vector<4x24x1xf32>
    %198 = vector.broadcast %197 : vector<4x24x1xf32> to vector<4x24x24xf32>
    %199 = arith.mulf %194, %198 : vector<4x24x24xf32>
    "tpu.trace_start"() <{level = 10 : i32, message = "hqk,hkd->hqd"}> : () -> ()
    %cst_57 = arith.constant dense<0.000000e+00> : vector<4x24x8xf32>
    %200 = tpu.matmul %199, %172, %cst_57 {dimension_numbers = #tpu.dot_dimension_numbers<[2], [1], [1], [2], [0, 0, 0, 1, 1, 2], [0], [0]>} : vector<4x24x24xf32>, vector<4x24x8xf32>, vector<4x24x8xf32> -> vector<4x24x8xf32>
    "tpu.trace_stop"() : () -> ()
    %201 = vector.extract_strided_slice %200 {offsets = [0, 0, 0], sizes = [1, 24, 8], strides = [1, 1, 1]} : vector<4x24x8xf32> to vector<1x24x8xf32>
    %202 = vector.shape_cast %201 : vector<1x24x8xf32> to vector<24x8xf32>
    %203 = vector.extract_strided_slice %200 {offsets = [1, 0, 0], sizes = [1, 24, 8], strides = [1, 1, 1]} : vector<4x24x8xf32> to vector<1x24x8xf32>
    %204 = vector.shape_cast %203 : vector<1x24x8xf32> to vector<24x8xf32>
    %205 = vector.extract_strided_slice %200 {offsets = [2, 0, 0], sizes = [1, 24, 8], strides = [1, 1, 1]} : vector<4x24x8xf32> to vector<1x24x8xf32>
    %206 = vector.shape_cast %205 : vector<1x24x8xf32> to vector<24x8xf32>
    %207 = vector.extract_strided_slice %200 {offsets = [3, 0, 0], sizes = [1, 24, 8], strides = [1, 1, 1]} : vector<4x24x8xf32> to vector<1x24x8xf32>
    %208 = vector.shape_cast %207 : vector<1x24x8xf32> to vector<24x8xf32>
    %209 = tpu.concatenate %202, %204, %206, %208 in 1 : vector<24x8xf32>, vector<24x8xf32>, vector<24x8xf32>, vector<24x8xf32> -> vector<24x32xf32>
    %c0_58 = arith.constant 0 : index
    %c0_59 = arith.constant 0 : index
    %210 = vector.load %arg17[%c0_58, %c0_59] : memref<32x32xf32, #tpu.memory_space<vmem>>, vector<32x32xf32>
    %c0_60 = arith.constant 0 : index
    %c0_61 = arith.constant 0 : index
    %211 = vector.load %arg18[%c0_60, %c0_61] : memref<1x32xf32, #tpu.memory_space<vmem>>, vector<1x32xf32>
    %cst_62 = arith.constant dense<0.000000e+00> : vector<24x32xf32>
    %212 = tpu.matmul %209, %210, %cst_62 {dimension_numbers = #tpu.dot_dimension_numbers<[1], [0], [0], [1], [0, 0, 1, 1], [], []>} : vector<24x32xf32>, vector<32x32xf32>, vector<24x32xf32> -> vector<24x32xf32>
    %213 = vector.broadcast %211 : vector<1x32xf32> to vector<24x32xf32>
    %214 = arith.addf %212, %213 : vector<24x32xf32>
    %215 = arith.addf %116, %214 : vector<24x32xf32>
    %c0_63 = arith.constant 0 : index
    %c0_64 = arith.constant 0 : index
    %216 = vector.load %arg19[%c0_63, %c0_64] : memref<1x32xf32, #tpu.memory_space<vmem>>, vector<1x32xf32>
    %c0_65 = arith.constant 0 : index
    %c0_66 = arith.constant 0 : index
    %217 = vector.load %arg20[%c0_65, %c0_66] : memref<1x32xf32, #tpu.memory_space<vmem>>, vector<1x32xf32>
    %cst_67 = arith.constant dense<0.000000e+00> : vector<24xf32>
    %218 = vector.multi_reduction <add>, %215, %cst_67 [1] : vector<24x32xf32> to vector<24xf32>
    %219 = vector.shape_cast %218 : vector<24xf32> to vector<24x1xf32>
    %cst_68 = arith.constant 3.200000e+01 : f32
    %220 = vector.broadcast %cst_68 : f32 to vector<24x1xf32>
    %221 = arith.divf %219, %220 : vector<24x1xf32>
    %222 = vector.broadcast %221 : vector<24x1xf32> to vector<24x32xf32>
    %223 = arith.subf %215, %222 : vector<24x32xf32>
    %224 = arith.mulf %223, %223 : vector<24x32xf32>
    %cst_69 = arith.constant dense<0.000000e+00> : vector<24xf32>
    %225 = vector.multi_reduction <add>, %224, %cst_69 [1] : vector<24x32xf32> to vector<24xf32>
    %226 = vector.shape_cast %225 : vector<24xf32> to vector<24x1xf32>
    %cst_70 = arith.constant 3.200000e+01 : f32
    %227 = vector.broadcast %cst_70 : f32 to vector<24x1xf32>
    %228 = arith.divf %226, %227 : vector<24x1xf32>
    %229 = vector.broadcast %221 : vector<24x1xf32> to vector<24x32xf32>
    %230 = arith.subf %215, %229 : vector<24x32xf32>
    %cst_71 = arith.constant 9.99999974E-6 : f32
    %231 = vector.broadcast %cst_71 : f32 to vector<24x1xf32>
    %232 = arith.addf %228, %231 : vector<24x1xf32>
    %233 = math.rsqrt %232 : vector<24x1xf32>
    %234 = vector.broadcast %233 : vector<24x1xf32> to vector<24x32xf32>
    %235 = arith.mulf %230, %234 : vector<24x32xf32>
    %236 = vector.broadcast %216 : vector<1x32xf32> to vector<24x32xf32>
    %237 = arith.mulf %235, %236 : vector<24x32xf32>
    %238 = vector.broadcast %217 : vector<1x32xf32> to vector<24x32xf32>
    %239 = arith.addf %237, %238 : vector<24x32xf32>
    %c0_72 = arith.constant 0 : index
    %c0_73 = arith.constant 0 : index
    %240 = vector.load %arg21[%c0_72, %c0_73] : memref<32x128xf32, #tpu.memory_space<vmem>>, vector<32x128xf32>
    %c0_74 = arith.constant 0 : index
    %c0_75 = arith.constant 0 : index
    %241 = vector.load %arg22[%c0_74, %c0_75] : memref<1x128xf32, #tpu.memory_space<vmem>>, vector<1x128xf32>
    %cst_76 = arith.constant dense<0.000000e+00> : vector<24x128xf32>
    %242 = tpu.matmul %239, %240, %cst_76 {dimension_numbers = #tpu.dot_dimension_numbers<[1], [0], [0], [1], [0, 0, 1, 1], [], []>} : vector<24x32xf32>, vector<32x128xf32>, vector<24x128xf32> -> vector<24x128xf32>
    %243 = vector.broadcast %241 : vector<1x128xf32> to vector<24x128xf32>
    %244 = arith.addf %242, %243 : vector<24x128xf32>
    %245 = vector.extract_strided_slice %244 {offsets = [0, 0], sizes = [24, 64], strides = [1, 1]} : vector<24x128xf32> to vector<24x64xf32>
    %246 = vector.extract_strided_slice %244 {offsets = [0, 64], sizes = [24, 64], strides = [1, 1]} : vector<24x128xf32> to vector<24x64xf32>
    %cst_77 = arith.constant 0.000000e+00 : f32
    %247 = vector.broadcast %cst_77 : f32 to vector<24x64xf32>
    %248 = arith.maximumf %246, %247 : vector<24x64xf32>
    %249 = arith.mulf %245, %248 : vector<24x64xf32>
    %c0_78 = arith.constant 0 : index
    %c0_79 = arith.constant 0 : index
    %250 = vector.load %arg23[%c0_78, %c0_79] : memref<64x32xf32, #tpu.memory_space<vmem>>, vector<64x32xf32>
    %c0_80 = arith.constant 0 : index
    %c0_81 = arith.constant 0 : index
    %251 = vector.load %arg24[%c0_80, %c0_81] : memref<1x32xf32, #tpu.memory_space<vmem>>, vector<1x32xf32>
    %cst_82 = arith.constant dense<0.000000e+00> : vector<24x32xf32>
    %252 = tpu.matmul %249, %250, %cst_82 {dimension_numbers = #tpu.dot_dimension_numbers<[1], [0], [0], [1], [0, 0, 1, 1], [], []>} : vector<24x64xf32>, vector<64x32xf32>, vector<24x32xf32> -> vector<24x32xf32>
    %253 = vector.broadcast %251 : vector<1x32xf32> to vector<24x32xf32>
    %254 = arith.addf %252, %253 : vector<24x32xf32>
    %255 = arith.addf %215, %254 : vector<24x32xf32>
    %c0_83 = arith.constant 0 : index
    %c0_84 = arith.constant 0 : index
    %256 = vector.load %arg25[%c0_83, %c0_84] : memref<24x32xf32, #tpu.memory_space<vmem>>, vector<24x32xf32>
    tpu.vector_store %arg25[%c0_83, %c0_84], %255 {strides = array<i32>} : memref<24x32xf32, #tpu.memory_space<vmem>>, vector<24x32xf32>,
    return
  }
  func.func @transform_0(%arg0: i32) -> (i32, i32) {
    %c0_i32 = arith.constant 0 : i32
    %c0_i32_0 = arith.constant 0 : i32
    return %arg0, %c0_i32 : i32, i32
  }
  func.func @transform_1(%arg0: i32) -> (i32, i32) {
    %c0_i32 = arith.constant 0 : i32
    %c0_i32_0 = arith.constant 0 : i32
    %c0_i32_1 = arith.constant 0 : i32
    return %c0_i32, %c0_i32_0 : i32, i32
  }
  func.func @transform_2(%arg0: i32) -> (i32, i32) {
    %c0_i32 = arith.constant 0 : i32
    %c0_i32_0 = arith.constant 0 : i32
    %c0_i32_1 = arith.constant 0 : i32
    return %c0_i32, %c0_i32_0 : i32, i32
  }
  func.func @transform_3(%arg0: i32) -> (i32, i32) {
    %c0_i32 = arith.constant 0 : i32
    %c0_i32_0 = arith.constant 0 : i32
    %c0_i32_1 = arith.constant 0 : i32
    return %c0_i32, %c0_i32_0 : i32, i32
  }
  func.func @transform_4(%arg0: i32) -> (i32, i32) {
    %c0_i32 = arith.constant 0 : i32
    %c0_i32_0 = arith.constant 0 : i32
    %c0_i32_1 = arith.constant 0 : i32
    return %c0_i32, %c0_i32_0 : i32, i32
  }
  func.func @transform_5(%arg0: i32) -> (i32, i32) {
    %c0_i32 = arith.constant 0 : i32
    %c0_i32_0 = arith.constant 0 : i32
    %c0_i32_1 = arith.constant 0 : i32
    return %c0_i32, %c0_i32_0 : i32, i32
  }
  func.func @transform_6(%arg0: i32) -> (i32, i32) {
    %c0_i32 = arith.constant 0 : i32
    %c0_i32_0 = arith.constant 0 : i32
    %c0_i32_1 = arith.constant 0 : i32
    return %c0_i32, %c0_i32_0 : i32, i32
  }
  func.func @transform_7(%arg0: i32) -> (i32, i32) {
    %c0_i32 = arith.constant 0 : i32
    %c0_i32_0 = arith.constant 0 : i32
    %c0_i32_1 = arith.constant 0 : i32
    return %c0_i32, %c0_i32_0 : i32, i32
  }
  func.func @transform_8(%arg0: i32) -> (i32, i32) {
    %c0_i32 = arith.constant 0 : i32
    %c0_i32_0 = arith.constant 0 : i32
    %c0_i32_1 = arith.constant 0 : i32
    return %c0_i32, %c0_i32_0 : i32, i32
  }
  func.func @transform_9(%arg0: i32) -> (i32, i32) {
    %c0_i32 = arith.constant 0 : i32
    %c0_i32_0 = arith.constant 0 : i32
    %c0_i32_1 = arith.constant 0 : i32
    return %c0_i32, %c0_i32_0 : i32, i32
  }
  func.func @transform_10(%arg0: i32) -> (i32, i32) {
    %c0_i32 = arith.constant 0 : i32
    %c0_i32_0 = arith.constant 0 : i32
    %c0_i32_1 = arith.constant 0 : i32
    return %c0_i32, %c0_i32_0 : i32, i32
  }
  func.func @transform_11(%arg0: i32) -> (i32, i32) {
    %c0_i32 = arith.constant 0 : i32
    %c0_i32_0 = arith.constant 0 : i32
    %c0_i32_1 = arith.constant 0 : i32
    return %c0_i32, %c0_i32_0 : i32, i32
  }
  func.func @transform_12(%arg0: i32) -> (i32, i32) {
    %c0_i32 = arith.constant 0 : i32
    %c0_i32_0 = arith.constant 0 : i32
    %c0_i32_1 = arith.constant 0 : i32
    return %c0_i32, %c0_i32_0 : i32, i32
  }
  func.func @transform_13(%arg0: i32) -> (i32, i32) {
    %c0_i32 = arith.constant 0 : i32
    %c0_i32_0 = arith.constant 0 : i32
    %c0_i32_1 = arith.constant 0 : i32
    return %c0_i32, %c0_i32_0 : i32, i32
  }
  func.func @transform_14(%arg0: i32) -> (i32, i32) {
    %c0_i32 = arith.constant 0 : i32
    %c0_i32_0 = arith.constant 0 : i32
    %c0_i32_1 = arith.constant 0 : i32
    return %c0_i32, %c0_i32_0 : i32, i32
  }
  func.func @transform_15(%arg0: i32) -> (i32, i32) {
    %c0_i32 = arith.constant 0 : i32
    %c0_i32_0 = arith.constant 0 : i32
    %c0_i32_1 = arith.constant 0 : i32
    return %c0_i32, %c0_i32_0 : i32, i32
  }
  func.func @transform_16(%arg0: i32) -> (i32, i32) {
    %c0_i32 = arith.constant 0 : i32
    %c0_i32_0 = arith.constant 0 : i32
    %c0_i32_1 = arith.constant 0 : i32
    return %c0_i32, %c0_i32_0 : i32, i32
  }
  func.func @transform_17(%arg0: i32) -> (i32, i32) {
    %c0_i32 = arith.constant 0 : i32
    %c0_i32_0 = arith.constant 0 : i32
    %c0_i32_1 = arith.constant 0 : i32
    return %c0_i32, %c0_i32_0 : i32, i32
  }
  func.func @transform_18(%arg0: i32) -> (i32, i32) {
    %c0_i32 = arith.constant 0 : i32
    %c0_i32_0 = arith.constant 0 : i32
    %c0_i32_1 = arith.constant 0 : i32
    return %c0_i32, %c0_i32_0 : i32, i32
  }
  func.func @transform_19(%arg0: i32) -> (i32, i32) {
    %c0_i32 = arith.constant 0 : i32
    %c0_i32_0 = arith.constant 0 : i32
    %c0_i32_1 = arith.constant 0 : i32
    return %c0_i32, %c0_i32_0 : i32, i32
  }
  func.func @transform_20(%arg0: i32) -> (i32, i32) {
    %c0_i32 = arith.constant 0 : i32
    %c0_i32_0 = arith.constant 0 : i32
    %c0_i32_1 = arith.constant 0 : i32
    return %c0_i32, %c0_i32_0 : i32, i32
  }
  func.func @transform_21(%arg0: i32) -> (i32, i32) {
    %c0_i32 = arith.constant 0 : i32
    %c0_i32_0 = arith.constant 0 : i32
    %c0_i32_1 = arith.constant 0 : i32
    return %c0_i32, %c0_i32_0 : i32, i32
  }
  func.func @transform_22(%arg0: i32) -> (i32, i32) {
    %c0_i32 = arith.constant 0 : i32
    %c0_i32_0 = arith.constant 0 : i32
    %c0_i32_1 = arith.constant 0 : i32
    return %c0_i32, %c0_i32_0 : i32, i32
  }
  func.func @transform_23(%arg0: i32) -> (i32, i32) {
    %c0_i32 = arith.constant 0 : i32
    %c0_i32_0 = arith.constant 0 : i32
    %c0_i32_1 = arith.constant 0 : i32
    return %c0_i32, %c0_i32_0 : i32, i32
  }
  func.func @transform_24(%arg0: i32) -> (i32, i32) {
    %c0_i32 = arith.constant 0 : i32
    %c0_i32_0 = arith.constant 0 : i32
    return %arg0, %c0_i32 : i32, i32
  }
}

</mosaic_0001>

<llo_original>
// kernel: tpu_custom_call.1
$region0: #{tpu_custom_call.1}
  #allocation0 [shape = 'u32[]', space=smem, size = 0x4, offset = 0x4, fixed_abs, tag = 'smem constant byte address 0x4 - core index']
  #allocation1 [shape = 'u32[72,128]{1,0:T(1,128)}', space=vmem, size = 0x9000, scoped, tag = 'internal scratch']
  %s0 = inlined_call_operand.vmem [shape: f32[48,32], index: 0, kind: input, shape index: {}]
  %s1 = inlined_call_operand.hbm [shape: f32[24,24], index: 1, kind: input, shape index: {}]
  %s2 = inlined_call_operand.vmem [shape: f32[32,96], index: 2, kind: input, shape index: {}]
  %s3 = inlined_call_operand.vmem [shape: f32[1,96], index: 3, kind: input, shape index: {}]
  %s4 = inlined_call_operand.vmem [shape: f32[32,32], index: 4, kind: input, shape index: {}]
  %s5 = inlined_call_operand.vmem [shape: f32[1,32], index: 5, kind: input, shape index: {}]
  %s6 = inlined_call_operand.vmem [shape: f32[1,32], index: 6, kind: input, shape index: {}]
  %s7 = inlined_call_operand.vmem [shape: f32[1,32], index: 7, kind: input, shape index: {}]
  %s8 = inlined_call_operand.vmem [shape: f32[32,128], index: 8, kind: input, shape index: {}]
  %s9 = inlined_call_operand.vmem [shape: f32[1,128], index: 9, kind: input, shape index: {}]
  %s10 = inlined_call_operand.vmem [shape: f32[64,32], index: 10, kind: input, shape index: {}]
  %s11 = inlined_call_operand.vmem [shape: f32[1,32], index: 11, kind: input, shape index: {}]
  %s12 = inlined_call_operand.vmem [shape: f32[1,32], index: 12, kind: input, shape index: {}]
  %s13 = inlined_call_operand.vmem [shape: f32[1,32], index: 13, kind: input, shape index: {}]
  %s14 = inlined_call_operand.vmem [shape: f32[32,96], index: 14, kind: input, shape index: {}]
  %s15 = inlined_call_operand.vmem [shape: f32[1,96], index: 15, kind: input, shape index: {}]
  %s16 = inlined_call_operand.vmem [shape: f32[32,32], index: 16, kind: input, shape index: {}]
  %s17 = inlined_call_operand.vmem [shape: f32[1,32], index: 17, kind: input, shape index: {}]
  %s18 = inlined_call_operand.vmem [shape: f32[1,32], index: 18, kind: input, shape index: {}]
  %s19 = inlined_call_operand.vmem [shape: f32[1,32], index: 19, kind: input, shape index: {}]
  %s20 = inlined_call_operand.vmem [shape: f32[32,128], index: 20, kind: input, shape index: {}]
  %s21 = inlined_call_operand.vmem [shape: f32[1,128], index: 21, kind: input, shape index: {}]
  %s22 = inlined_call_operand.vmem [shape: f32[64,32], index: 22, kind: input, shape index: {}]
  %s23 = inlined_call_operand.vmem [shape: f32[1,32], index: 23, kind: input, shape index: {}]
  %s24 = inlined_call_operand.vmem [shape: f32[48,32], index: 24, kind: output, shape index: {}]
  %s25 = sld [smem:[#allocation0]]
  $region133: #{tpu_custom_call.1} parent=0
    _
  %s27 = ssub.s32 1, %s25
  %s28 = scalar_select 0, %s27, %s25
  $region1: #{tpu_custom_call.1} parent=0
    #allocation2 [shape = 'u8[12288]{0}', space=vmem, size = 0x3000, scoped, tag = 'input window, operand 1, single buffered']
    #allocation3 [shape = 's32[2]{0}', space=sflag, size = 0x8, scoped, tag = 'scoped memory for tpu_custom_call.1']
    %29 = vsyncpa [#allocation3], 0
    loop: start=0, step=1, limit=4
    $region2: #{tpu_custom_call.1} parent=1 // loop_pre_header
      _
    $region3: #{tpu_custom_call.1} parent=1 // loop_header
      %s31 = sphi 0, %s35
      %p32 = scmp.ge.s32.totalorder %s31, 4
      %s41 = sphi 0, %s43
      %s44 = sphi 0, %s41
      %s45 = sphi 0, %s44
      %s61 = sphi 0, %s45
      %s65 = sphi 0, %s65
      %s67 = sphi 0, %s65
      %s68 = sphi 0, %s67
      %s82 = sphi 0, %s68
      %s86 = sphi 0, %s86
      %s88 = sphi 0, %s86
      %s89 = sphi 0, %s88
      %s103 = sphi 0, %s89
      %s107 = sphi 0, %s107
      %s109 = sphi 0, %s107
      %s110 = sphi 0, %s109
      %s124 = sphi 0, %s110
      %s128 = sphi 0, %s128
      %s130 = sphi 0, %s128
      %s131 = sphi 0, %s130
      %s145 = sphi 0, %s131
      %s149 = sphi 0, %s149
      %s151 = sphi 0, %s149
      %s152 = sphi 0, %s151
      %s166 = sphi 0, %s152
      %s170 = sphi 0, %s170
      %s172 = sphi 0, %s170
      %s173 = sphi 0, %s172
      %s187 = sphi 0, %s173
      %s191 = sphi 0, %s191
      %s193 = sphi 0, %s191
      %s194 = sphi 0, %s193
      %s208 = sphi 0, %s194
      %s212 = sphi 0, %s212
      %s214 = sphi 0, %s212
      %s215 = sphi 0, %s214
      %s229 = sphi 0, %s215
      %s233 = sphi 0, %s233
      %s235 = sphi 0, %s233
      %s236 = sphi 0, %s235
      %s250 = sphi 0, %s236
      %s254 = sphi 0, %s254
      %s256 = sphi 0, %s254
      %s257 = sphi 0, %s256
      %s271 = sphi 0, %s257
      %s275 = sphi 0, %s275
      %s277 = sphi 0, %s275
      %s278 = sphi 0, %s277
      %s292 = sphi 0, %s278
      %s296 = sphi 0, %s296
      %s298 = sphi 0, %s296
      %s299 = sphi 0, %s298
      %s313 = sphi 0, %s299
      %s317 = sphi 0, %s317
      %s319 = sphi 0, %s317
      %s320 = sphi 0, %s319
      %s334 = sphi 0, %s320
      %s338 = sphi 0, %s338
      %s340 = sphi 0, %s338
      %s341 = sphi 0, %s340
      %s355 = sphi 0, %s341
      %s359 = sphi 0, %s359
      %s361 = sphi 0, %s359
      %s362 = sphi 0, %s361
      %s376 = sphi 0, %s362
      %s380 = sphi 0, %s380
      %s382 = sphi 0, %s380
      %s383 = sphi 0, %s382
      %s397 = sphi 0, %s383
      %s401 = sphi 0, %s401
      %s403 = sphi 0, %s401
      %s404 = sphi 0, %s403
      %s418 = sphi 0, %s404
      %s422 = sphi 0, %s422
      %s424 = sphi 0, %s422
      %s425 = sphi 0, %s424
      %s439 = sphi 0, %s425
      %s443 = sphi 0, %s443
      %s445 = sphi 0, %s443
      %s446 = sphi 0, %s445
      %s460 = sphi 0, %s446
      %s464 = sphi 0, %s464
      %s466 = sphi 0, %s464
      %s467 = sphi 0, %s466
      %s481 = sphi 0, %s467
      %s485 = sphi 0, %s485
      %s487 = sphi 0, %s485
      %s488 = sphi 0, %s487
      %s502 = sphi 0, %s488
      %s506 = sphi 0, %s506
      %s508 = sphi 0, %s506
      %s509 = sphi 0, %s508
      %s523 = sphi 0, %s509
      %s527 = sphi 0, %s527
      %s529 = sphi 0, %s527
      %s530 = sphi 0, %s529
      %s544 = sphi 0, %s530
      %s550 = sphi 0, %s552
      %s553 = sphi 0, %s550
      %s554 = sphi 0, %s553
      %s570 = sphi 0, %s554
    $region4: #{tpu_custom_call.1} parent=1 // loop_header_branch
      %34 = sbr.rel (%p32) target = $region8
    $region5: #{tpu_custom_call.1} parent=1 // loop_body
      %s36 = ssub.s32 %s31, 1
      %s37 = ssub.s32 %s31, 2
      %s38 = sadd.s32 %s31, 1
      %s39 = ssub.s32 %s31, %s38
      %p40 = scmp.eq.s32.totalorder %s39, 0
      %s42 = sadd.s32 %s41, 1
      %s43 = scalar_select %p40, %s41, %s42
      %p46 = pneg %p40
      %p47 = scmp.eq.s32.totalorder %s31, 1
      %p48 = por %p46, %p47
      %p49 = scmp.ne.s32.totalorder %s41, %s44
      %p50 = scmp.eq.s32.totalorder %s31, 0
      %p51 = por %p49, %p50
      %p52 = scmp.ne.s32.totalorder %s41, %s44
      %p53 = scmp.eq.s32.totalorder %s36, 1
      %p54 = por %p52, %p53
      %p55 = scmp.ne.s32.totalorder %s44, %s45
      %p56 = scmp.eq.s32.totalorder %s36, 0
      %p57 = por %p55, %p56
      %p58 = scmp.ne.s32.totalorder %s44, %s45
      %p59 = scmp.eq.s32.totalorder %s37, 1
      %p60 = por %p58, %p59
      %p62 = scmp.ne.s32.totalorder %s45, %s61
      %p63 = scmp.eq.s32.totalorder %s37, 0
      %p64 = por %p62, %p63
      %s66 = sadd.s32 %s65, 1
      %p69 = scmp.eq.s32.totalorder %s31, 1
      %p70 = scmp.ne.s32.totalorder %s65, %s67
      %p71 = scmp.eq.s32.totalorder %s31, 0
      %p72 = por %p70, %p71
      %p73 = scmp.ne.s32.totalorder %s65, %s67
      %p74 = scmp.eq.s32.totalorder %s36, 1
      %p75 = por %p73, %p74
      %p76 = scmp.ne.s32.totalorder %s67, %s68
      %p77 = scmp.eq.s32.totalorder %s36, 0
      %p78 = por %p76, %p77
      %p79 = scmp.ne.s32.totalorder %s67, %s68
      %p80 = scmp.eq.s32.totalorder %s37, 1
      %p81 = por %p79, %p80
      %p83 = scmp.ne.s32.totalorder %s68, %s82
      %p84 = scmp.eq.s32.totalorder %s37, 0
      %p85 = por %p83, %p84
      %s87 = sadd.s32 %s86, 1
      %p90 = scmp.eq.s32.totalorder %s31, 1
      %p91 = scmp.ne.s32.totalorder %s86, %s88
      %p92 = scmp.eq.s32.totalorder %s31, 0
      %p93 = por %p91, %p92
      %p94 = scmp.ne.s32.totalorder %s86, %s88
      %p95 = scmp.eq.s32.totalorder %s36, 1
      %p96 = por %p94, %p95
      %p97 = scmp.ne.s32.totalorder %s88, %s89
      %p98 = scmp.eq.s32.totalorder %s36, 0
      %p99 = por %p97, %p98
      %p100 = scmp.ne.s32.totalorder %s88, %s89
      %p101 = scmp.eq.s32.totalorder %s37, 1
      %p102 = por %p100, %p101
      %p104 = scmp.ne.s32.totalorder %s89, %s103
      %p105 = scmp.eq.s32.totalorder %s37, 0
      %p106 = por %p104, %p105
      %s108 = sadd.s32 %s107, 1
      %p111 = scmp.eq.s32.totalorder %s31, 1
      %p112 = scmp.ne.s32.totalorder %s107, %s109
      %p113 = scmp.eq.s32.totalorder %s31, 0
      %p114 = por %p112, %p113
      %p115 = scmp.ne.s32.totalorder %s107, %s109
      %p116 = scmp.eq.s32.totalorder %s36, 1
      %p117 = por %p115, %p116
      %p118 = scmp.ne.s32.totalorder %s109, %s110
      %p119 = scmp.eq.s32.totalorder %s36, 0
      %p120 = por %p118, %p119
      %p121 = scmp.ne.s32.totalorder %s109, %s110
      %p122 = scmp.eq.s32.totalorder %s37, 1
      %p123 = por %p121, %p122
      %p125 = scmp.ne.s32.totalorder %s110, %s124
      %p126 = scmp.eq.s32.totalorder %s37, 0
      %p127 = por %p125, %p126
      %s129 = sadd.s32 %s128, 1
      %p132 = scmp.eq.s32.totalorder %s31, 1
      %p133 = scmp.ne.s32.totalorder %s128, %s130
      %p134 = scmp.eq.s32.totalorder %s31, 0
      %p135 = por %p133, %p134
      %p136 = scmp.ne.s32.totalorder %s128, %s130
      %p137 = scmp.eq.s32.totalorder %s36, 1
      %p138 = por %p136, %p137
      %p139 = scmp.ne.s32.totalorder %s130, %s131
      %p140 = scmp.eq.s32.totalorder %s36, 0
      %p141 = por %p139, %p140
      %p142 = scmp.ne.s32.totalorder %s130, %s131
      %p143 = scmp.eq.s32.totalorder %s37, 1
      %p144 = por %p142, %p143
      %p146 = scmp.ne.s32.totalorder %s131, %s145
      %p147 = scmp.eq.s32.totalorder %s37, 0
      %p148 = por %p146, %p147
      %s150 = sadd.s32 %s149, 1
      %p153 = scmp.eq.s32.totalorder %s31, 1
      %p154 = scmp.ne.s32.totalorder %s149, %s151
      %p155 = scmp.eq.s32.totalorder %s31, 0
      %p156 = por %p154, %p155
      %p157 = scmp.ne.s32.totalorder %s149, %s151
      %p158 = scmp.eq.s32.totalorder %s36, 1
      %p159 = por %p157, %p158
      %p160 = scmp.ne.s32.totalorder %s151, %s152
      %p161 = scmp.eq.s32.totalorder %s36, 0
      %p162 = por %p160, %p161
      %p163 = scmp.ne.s32.totalorder %s151, %s152
      %p164 = scmp.eq.s32.totalorder %s37, 1
      %p165 = por %p163, %p164
      %p167 = scmp.ne.s32.totalorder %s152, %s166
      %p168 = scmp.eq.s32.totalorder %s37, 0
      %p169 = por %p167, %p168
      %s171 = sadd.s32 %s170, 1
      %p174 = scmp.eq.s32.totalorder %s31, 1
      %p175 = scmp.ne.s32.totalorder %s170, %s172
      %p176 = scmp.eq.s32.totalorder %s31, 0
      %p177 = por %p175, %p176
      %p178 = scmp.ne.s32.totalorder %s170, %s172
      %p179 = scmp.eq.s32.totalorder %s36, 1
      %p180 = por %p178, %p179
      %p181 = scmp.ne.s32.totalorder %s172, %s173
      %p182 = scmp.eq.s32.totalorder %s36, 0
      %p183 = por %p181, %p182
      %p184 = scmp.ne.s32.totalorder %s172, %s173
      %p185 = scmp.eq.s32.totalorder %s37, 1
      %p186 = por %p184, %p185
      %p188 = scmp.ne.s32.totalorder %s173, %s187
      %p189 = scmp.eq.s32.totalorder %s37, 0
      %p190 = por %p188, %p189
      %s192 = sadd.s32 %s191, 1
      %p195 = scmp.eq.s32.totalorder %s31, 1
      %p196 = scmp.ne.s32.totalorder %s191, %s193
      %p197 = scmp.eq.s32.totalorder %s31, 0
      %p198 = por %p196, %p197
      %p199 = scmp.ne.s32.totalorder %s191, %s193
      %p200 = scmp.eq.s32.totalorder %s36, 1
      %p201 = por %p199, %p200
      %p202 = scmp.ne.s32.totalorder %s193, %s194
      %p203 = scmp.eq.s32.totalorder %s36, 0
      %p204 = por %p202, %p203
      %p205 = scmp.ne.s32.totalorder %s193, %s194
      %p206 = scmp.eq.s32.totalorder %s37, 1
      %p207 = por %p205, %p206
      %p209 = scmp.ne.s32.totalorder %s194, %s208
      %p210 = scmp.eq.s32.totalorder %s37, 0
      %p211 = por %p209, %p210
      %s213 = sadd.s32 %s212, 1
      %p216 = scmp.eq.s32.totalorder %s31, 1
      %p217 = scmp.ne.s32.totalorder %s212, %s214
      %p218 = scmp.eq.s32.totalorder %s31, 0
      %p219 = por %p217, %p218
      %p220 = scmp.ne.s32.totalorder %s212, %s214
      %p221 = scmp.eq.s32.totalorder %s36, 1
      %p222 = por %p220, %p221
      %p223 = scmp.ne.s32.totalorder %s214, %s215
      %p224 = scmp.eq.s32.totalorder %s36, 0
      %p225 = por %p223, %p224
      %p226 = scmp.ne.s32.totalorder %s214, %s215
      %p227 = scmp.eq.s32.totalorder %s37, 1
      %p228 = por %p226, %p227
      %p230 = scmp.ne.s32.totalorder %s215, %s229
      %p231 = scmp.eq.s32.totalorder %s37, 0
      %p232 = por %p230, %p231
      %s234 = sadd.s32 %s233, 1
      %p237 = scmp.eq.s32.totalorder %s31, 1
      %p238 = scmp.ne.s32.totalorder %s233, %s235
      %p239 = scmp.eq.s32.totalorder %s31, 0
      %p240 = por %p238, %p239
      %p241 = scmp.ne.s32.totalorder %s233, %s235
      %p242 = scmp.eq.s32.totalorder %s36, 1
      %p243 = por %p241, %p242
      %p244 = scmp.ne.s32.totalorder %s235, %s236
      %p245 = scmp.eq.s32.totalorder %s36, 0
      %p246 = por %p244, %p245
      %p247 = scmp.ne.s32.totalorder %s235, %s236
      %p248 = scmp.eq.s32.totalorder %s37, 1
      %p249 = por %p247, %p248
      %p251 = scmp.ne.s32.totalorder %s236, %s250
      %p252 = scmp.eq.s32.totalorder %s37, 0
      %p253 = por %p251, %p252
      %s255 = sadd.s32 %s254, 1
      %p258 = scmp.eq.s32.totalorder %s31, 1
      %p259 = scmp.ne.s32.totalorder %s254, %s256
      %p260 = scmp.eq.s32.totalorder %s31, 0
      %p261 = por %p259, %p260
      %p262 = scmp.ne.s32.totalorder %s254, %s256
      %p263 = scmp.eq.s32.totalorder %s36, 1
      %p264 = por %p262, %p263
      %p265 = scmp.ne.s32.totalorder %s256, %s257
      %p266 = scmp.eq.s32.totalorder %s36, 0
      %p267 = por %p265, %p266
      %p268 = scmp.ne.s32.totalorder %s256, %s257
      %p269 = scmp.eq.s32.totalorder %s37, 1
      %p270 = por %p268, %p269
      %p272 = scmp.ne.s32.totalorder %s257, %s271
      %p273 = scmp.eq.s32.totalorder %s37, 0
      %p274 = por %p272, %p273
      %s276 = sadd.s32 %s275, 1
      %p279 = scmp.eq.s32.totalorder %s31, 1
      %p280 = scmp.ne.s32.totalorder %s275, %s277
      %p281 = scmp.eq.s32.totalorder %s31, 0
      %p282 = por %p280, %p281
      %p283 = scmp.ne.s32.totalorder %s275, %s277
      %p284 = scmp.eq.s32.totalorder %s36, 1
      %p285 = por %p283, %p284
      %p286 = scmp.ne.s32.totalorder %s277, %s278
      %p287 = scmp.eq.s32.totalorder %s36, 0
      %p288 = por %p286, %p287
      %p289 = scmp.ne.s32.totalorder %s277, %s278
      %p290 = scmp.eq.s32.totalorder %s37, 1
      %p291 = por %p289, %p290
      %p293 = scmp.ne.s32.totalorder %s278, %s292
      %p294 = scmp.eq.s32.totalorder %s37, 0
      %p295 = por %p293, %p294
      %s297 = sadd.s32 %s296, 1
      %p300 = scmp.eq.s32.totalorder %s31, 1
      %p301 = scmp.ne.s32.totalorder %s296, %s298
      %p302 = scmp.eq.s32.totalorder %s31, 0
      %p303 = por %p301, %p302
      %p304 = scmp.ne.s32.totalorder %s296, %s298
      %p305 = scmp.eq.s32.totalorder %s36, 1
      %p306 = por %p304, %p305
      %p307 = scmp.ne.s32.totalorder %s298, %s299
      %p308 = scmp.eq.s32.totalorder %s36, 0
      %p309 = por %p307, %p308
      %p310 = scmp.ne.s32.totalorder %s298, %s299
      %p311 = scmp.eq.s32.totalorder %s37, 1
      %p312 = por %p310, %p311
      %p314 = scmp.ne.s32.totalorder %s299, %s313
      %p315 = scmp.eq.s32.totalorder %s37, 0
      %p316 = por %p314, %p315
      %s318 = sadd.s32 %s317, 1
      %p321 = scmp.eq.s32.totalorder %s31, 1
      %p322 = scmp.ne.s32.totalorder %s317, %s319
      %p323 = scmp.eq.s32.totalorder %s31, 0
      %p324 = por %p322, %p323
      %p325 = scmp.ne.s32.totalorder %s317, %s319
      %p326 = scmp.eq.s32.totalorder %s36, 1
      %p327 = por %p325, %p326
      %p328 = scmp.ne.s32.totalorder %s319, %s320
      %p329 = scmp.eq.s32.totalorder %s36, 0
      %p330 = por %p328, %p329
      %p331 = scmp.ne.s32.totalorder %s319, %s320
      %p332 = scmp.eq.s32.totalorder %s37, 1
      %p333 = por %p331, %p332
      %p335 = scmp.ne.s32.totalorder %s320, %s334
      %p336 = scmp.eq.s32.totalorder %s37, 0
      %p337 = por %p335, %p336
      %s339 = sadd.s32 %s338, 1
      %p342 = scmp.eq.s32.totalorder %s31, 1
      %p343 = scmp.ne.s32.totalorder %s338, %s340
      %p344 = scmp.eq.s32.totalorder %s31, 0
      %p345 = por %p343, %p344
      %p346 = scmp.ne.s32.totalorder %s338, %s340
      %p347 = scmp.eq.s32.totalorder %s36, 1
      %p348 = por %p346, %p347
      %p349 = scmp.ne.s32.totalorder %s340, %s341
      %p350 = scmp.eq.s32.totalorder %s36, 0
      %p351 = por %p349, %p350
      %p352 = scmp.ne.s32.totalorder %s340, %s341
      %p353 = scmp.eq.s32.totalorder %s37, 1
      %p354 = por %p352, %p353
      %p356 = scmp.ne.s32.totalorder %s341, %s355
      %p357 = scmp.eq.s32.totalorder %s37, 0
      %p358 = por %p356, %p357
      %s360 = sadd.s32 %s359, 1
      %p363 = scmp.eq.s32.totalorder %s31, 1
      %p364 = scmp.ne.s32.totalorder %s359, %s361
      %p365 = scmp.eq.s32.totalorder %s31, 0
      %p366 = por %p364, %p365
      %p367 = scmp.ne.s32.totalorder %s359, %s361
      %p368 = scmp.eq.s32.totalorder %s36, 1
      %p369 = por %p367, %p368
      %p370 = scmp.ne.s32.totalorder %s361, %s362
      %p371 = scmp.eq.s32.totalorder %s36, 0
      %p372 = por %p370, %p371
      %p373 = scmp.ne.s32.totalorder %s361, %s362
      %p374 = scmp.eq.s32.totalorder %s37, 1
      %p375 = por %p373, %p374
      %p377 = scmp.ne.s32.totalorder %s362, %s376
      %p378 = scmp.eq.s32.totalorder %s37, 0
      %p379 = por %p377, %p378
      %s381 = sadd.s32 %s380, 1
      %p384 = scmp.eq.s32.totalorder %s31, 1
      %p385 = scmp.ne.s32.totalorder %s380, %s382
      %p386 = scmp.eq.s32.totalorder %s31, 0
      %p387 = por %p385, %p386
      %p388 = scmp.ne.s32.totalorder %s380, %s382
      %p389 = scmp.eq.s32.totalorder %s36, 1
      %p390 = por %p388, %p389
      %p391 = scmp.ne.s32.totalorder %s382, %s383
      %p392 = scmp.eq.s32.totalorder %s36, 0
      %p393 = por %p391, %p392
      %p394 = scmp.ne.s32.totalorder %s382, %s383
      %p395 = scmp.eq.s32.totalorder %s37, 1
      %p396 = por %p394, %p395
      %p398 = scmp.ne.s32.totalorder %s383, %s397
      %p399 = scmp.eq.s32.totalorder %s37, 0
      %p400 = por %p398, %p399
      %s402 = sadd.s32 %s401, 1
      %p405 = scmp.eq.s32.totalorder %s31, 1
      %p406 = scmp.ne.s32.totalorder %s401, %s403
      %p407 = scmp.eq.s32.totalorder %s31, 0
      %p408 = por %p406, %p407
      %p409 = scmp.ne.s32.totalorder %s401, %s403
      %p410 = scmp.eq.s32.totalorder %s36, 1
      %p411 = por %p409, %p410
      %p412 = scmp.ne.s32.totalorder %s403, %s404
      %p413 = scmp.eq.s32.totalorder %s36, 0
      %p414 = por %p412, %p413
      %p415 = scmp.ne.s32.totalorder %s403, %s404
      %p416 = scmp.eq.s32.totalorder %s37, 1
      %p417 = por %p415, %p416
      %p419 = scmp.ne.s32.totalorder %s404, %s418
      %p420 = scmp.eq.s32.totalorder %s37, 0
      %p421 = por %p419, %p420
      %s423 = sadd.s32 %s422, 1
      %p426 = scmp.eq.s32.totalorder %s31, 1
      %p427 = scmp.ne.s32.totalorder %s422, %s424
      %p428 = scmp.eq.s32.totalorder %s31, 0
      %p429 = por %p427, %p428
      %p430 = scmp.ne.s32.totalorder %s422, %s424
      %p431 = scmp.eq.s32.totalorder %s36, 1
      %p432 = por %p430, %p431
      %p433 = scmp.ne.s32.totalorder %s424, %s425
      %p434 = scmp.eq.s32.totalorder %s36, 0
      %p435 = por %p433, %p434
      %p436 = scmp.ne.s32.totalorder %s424, %s425
      %p437 = scmp.eq.s32.totalorder %s37, 1
      %p438 = por %p436, %p437
      %p440 = scmp.ne.s32.totalorder %s425, %s439
      %p441 = scmp.eq.s32.totalorder %s37, 0
      %p442 = por %p440, %p441
      %s444 = sadd.s32 %s443, 1
      %p447 = scmp.eq.s32.totalorder %s31, 1
      %p448 = scmp.ne.s32.totalorder %s443, %s445
      %p449 = scmp.eq.s32.totalorder %s31, 0
      %p450 = por %p448, %p449
      %p451 = scmp.ne.s32.totalorder %s443, %s445
      %p452 = scmp.eq.s32.totalorder %s36, 1
      %p453 = por %p451, %p452
      %p454 = scmp.ne.s32.totalorder %s445, %s446
      %p455 = scmp.eq.s32.totalorder %s36, 0
      %p456 = por %p454, %p455
      %p457 = scmp.ne.s32.totalorder %s445, %s446
      %p458 = scmp.eq.s32.totalorder %s37, 1
      %p459 = por %p457, %p458
      %p461 = scmp.ne.s32.totalorder %s446, %s460
      %p462 = scmp.eq.s32.totalorder %s37, 0
      %p463 = por %p461, %p462
      %s465 = sadd.s32 %s464, 1
      %p468 = scmp.eq.s32.totalorder %s31, 1
      %p469 = scmp.ne.s32.totalorder %s464, %s466
      %p470 = scmp.eq.s32.totalorder %s31, 0
      %p471 = por %p469, %p470
      %p472 = scmp.ne.s32.totalorder %s464, %s466
      %p473 = scmp.eq.s32.totalorder %s36, 1
      %p474 = por %p472, %p473
      %p475 = scmp.ne.s32.totalorder %s466, %s467
      %p476 = scmp.eq.s32.totalorder %s36, 0
      %p477 = por %p475, %p476
      %p478 = scmp.ne.s32.totalorder %s466, %s467
      %p479 = scmp.eq.s32.totalorder %s37, 1
      %p480 = por %p478, %p479
      %p482 = scmp.ne.s32.totalorder %s467, %s481
      %p483 = scmp.eq.s32.totalorder %s37, 0
      %p484 = por %p482, %p483
      %s486 = sadd.s32 %s485, 1
      %p489 = scmp.eq.s32.totalorder %s31, 1
      %p490 = scmp.ne.s32.totalorder %s485, %s487
      %p491 = scmp.eq.s32.totalorder %s31, 0
      %p492 = por %p490, %p491
      %p493 = scmp.ne.s32.totalorder %s485, %s487
      %p494 = scmp.eq.s32.totalorder %s36, 1
      %p495 = por %p493, %p494
      %p496 = scmp.ne.s32.totalorder %s487, %s488
      %p497 = scmp.eq.s32.totalorder %s36, 0
      %p498 = por %p496, %p497
      %p499 = scmp.ne.s32.totalorder %s487, %s488
      %p500 = scmp.eq.s32.totalorder %s37, 1
      %p501 = por %p499, %p500
      %p503 = scmp.ne.s32.totalorder %s488, %s502
      %p504 = scmp.eq.s32.totalorder %s37, 0
      %p505 = por %p503, %p504
      %s507 = sadd.s32 %s506, 1
      %p510 = scmp.eq.s32.totalorder %s31, 1
      %p511 = scmp.ne.s32.totalorder %s506, %s508
      %p512 = scmp.eq.s32.totalorder %s31, 0
      %p513 = por %p511, %p512
      %p514 = scmp.ne.s32.totalorder %s506, %s508
      %p515 = scmp.eq.s32.totalorder %s36, 1
      %p516 = por %p514, %p515
      %p517 = scmp.ne.s32.totalorder %s508, %s509
      %p518 = scmp.eq.s32.totalorder %s36, 0
      %p519 = por %p517, %p518
      %p520 = scmp.ne.s32.totalorder %s508, %s509
      %p521 = scmp.eq.s32.totalorder %s37, 1
      %p522 = por %p520, %p521
      %p524 = scmp.ne.s32.totalorder %s509, %s523
      %p525 = scmp.eq.s32.totalorder %s37, 0
      %p526 = por %p524, %p525
      %s528 = sadd.s32 %s527, 1
      %p531 = scmp.eq.s32.totalorder %s31, 1
      %p532 = scmp.ne.s32.totalorder %s527, %s529
      %p533 = scmp.eq.s32.totalorder %s31, 0
      %p534 = por %p532, %p533
      %p535 = scmp.ne.s32.totalorder %s527, %s529
      %p536 = scmp.eq.s32.totalorder %s36, 1
      %p537 = por %p535, %p536
      %p538 = scmp.ne.s32.totalorder %s529, %s530
      %p539 = scmp.eq.s32.totalorder %s36, 0
      %p540 = por %p538, %p539
      %p541 = scmp.ne.s32.totalorder %s529, %s530
      %p542 = scmp.eq.s32.totalorder %s37, 1
      %p543 = por %p541, %p542
      %p545 = scmp.ne.s32.totalorder %s530, %s544
      %p546 = scmp.eq.s32.totalorder %s37, 0
      %p547 = por %p545, %p546
      %s548 = ssub.s32 %s31, %s38
      %p549 = scmp.eq.s32.totalorder %s548, 0
      %s551 = sadd.s32 %s550, 1
      %s552 = scalar_select %p549, %s550, %s551
      %p555 = pneg %p549
      %p556 = scmp.eq.s32.totalorder %s31, 1
      %p557 = por %p555, %p556
      %p558 = scmp.ne.s32.totalorder %s550, %s553
      %p559 = scmp.eq.s32.totalorder %s31, 0
      %p560 = por %p558, %p559
      %p561 = scmp.ne.s32.totalorder %s550, %s553
      %p562 = scmp.eq.s32.totalorder %s36, 1
      %p563 = por %p561, %p562
      %p564 = scmp.ne.s32.totalorder %s553, %s554
      %p565 = scmp.eq.s32.totalorder %s36, 0
      %p566 = por %p564, %p565
      %p567 = scmp.ne.s32.totalorder %s553, %s554
      %p568 = scmp.eq.s32.totalorder %s37, 1
      %p569 = por %p567, %p568
      %p571 = scmp.ne.s32.totalorder %s554, %s570
      %p572 = scmp.eq.s32.totalorder %s37, 0
      %p573 = por %p571, %p572
      %p574 = scmp.le.s32.totalorder 1, %s31
      %p575 = scmp.lt.s32.totalorder %s31, 3
      %p576 = pnand %p574, %p575
      %p577 = pneg %p576
      // Predicated region
      $region9: #{tpu_custom_call.1} parent=5 // pred_check
        _
      $region10: #{tpu_custom_call.1} parent=5 // pred_check_branch
        %579 = sbr.rel (%p576) target = $region12
      $region11: #{tpu_custom_call.1} parent=5 // pred_region
        %s580 = ssub.s32 %s31, 1
        // Predicated region
        $region13: #{tpu_custom_call.1} parent=11 // pred_check
          %p581 = pneg %p78
        $region14: #{tpu_custom_call.1} parent=11 // pred_check_branch
          %583 = sbr.rel (%p581) target = $region16
        $region15: #{tpu_custom_call.1} parent=11 // pred_region
          %585 = vsyncadd [#allocation3], 0
          %s586 = sshll.u32 %s1, 4
          %s587 = int_to_ptr.hbm [resolvable:$true] %s586
          %s588 = sshll.u32 [#allocation2], 4
          %s589 = int_to_ptr.vmem [resolvable:$true] %s588
          %594 = dma.hbm_to_vmem [thread:$0]  %s587, 384, %s589, [#allocation3], 128, 128, 8
        $region16: #{tpu_custom_call.1} parent=11 // pred_fallthru
          _
        // Predicated region
        $region17: #{tpu_custom_call.1} parent=11 // pred_check
          %p595 = pneg %p99
        $region18: #{tpu_custom_call.1} parent=11 // pred_check_branch
          %597 = sbr.rel (%p595) target = $region20
        $region19: #{tpu_custom_call.1} parent=11 // pred_region
          _
        $region20: #{tpu_custom_call.1} parent=11 // pred_fallthru
          _
        // Predicated region
        $region21: #{tpu_custom_call.1} parent=11 // pred_check
          %p598 = pneg %p120
        $region22: #{tpu_custom_call.1} parent=11 // pred_check_branch
          %600 = sbr.rel (%p598) target = $region24
        $region23: #{tpu_custom_call.1} parent=11 // pred_region
          _
        $region24: #{tpu_custom_call.1} parent=11 // pred_fallthru
          _
        // Predicated region
        $region25: #{tpu_custom_call.1} parent=11 // pred_check
          %p601 = pneg %p141
        $region26: #{tpu_custom_call.1} parent=11 // pred_check_branch
          %603 = sbr.rel (%p601) target = $region28
        $region27: #{tpu_custom_call.1} parent=11 // pred_region
          _
        $region28: #{tpu_custom_call.1} parent=11 // pred_fallthru
          _
        // Predicated region
        $region29: #{tpu_custom_call.1} parent=11 // pred_check
          %p604 = pneg %p162
        $region30: #{tpu_custom_call.1} parent=11 // pred_check_branch
          %606 = sbr.rel (%p604) target = $region32
        $region31: #{tpu_custom_call.1} parent=11 // pred_region
          _
        $region32: #{tpu_custom_call.1} parent=11 // pred_fallthru
          _
        // Predicated region
        $region33: #{tpu_custom_call.1} parent=11 // pred_check
          %p607 = pneg %p183
        $region34: #{tpu_custom_call.1} parent=11 // pred_check_branch
          %609 = sbr.rel (%p607) target = $region36
        $region35: #{tpu_custom_call.1} parent=11 // pred_region
          _
        $region36: #{tpu_custom_call.1} parent=11 // pred_fallthru
          _
        // Predicated region
        $region37: #{tpu_custom_call.1} parent=11 // pred_check
          %p610 = pneg %p204
        $region38: #{tpu_custom_call.1} parent=11 // pred_check_branch
          %612 = sbr.rel (%p610) target = $region40
        $region39: #{tpu_custom_call.1} parent=11 // pred_region
          _
        $region40: #{tpu_custom_call.1} parent=11 // pred_fallthru
          _
        // Predicated region
        $region41: #{tpu_custom_call.1} parent=11 // pred_check
          %p613 = pneg %p225
        $region42: #{tpu_custom_call.1} parent=11 // pred_check_branch
          %615 = sbr.rel (%p613) target = $region44
        $region43: #{tpu_custom_call.1} parent=11 // pred_region
          _
        $region44: #{tpu_custom_call.1} parent=11 // pred_fallthru
          _
        // Predicated region
        $region45: #{tpu_custom_call.1} parent=11 // pred_check
          %p616 = pneg %p246
        $region46: #{tpu_custom_call.1} parent=11 // pred_check_branch
          %618 = sbr.rel (%p616) target = $region48
        $region47: #{tpu_custom_call.1} parent=11 // pred_region
          _
        $region48: #{tpu_custom_call.1} parent=11 // pred_fallthru
          _
        // Predicated region
        $region49: #{tpu_custom_call.1} parent=11 // pred_check
          %p619 = pneg %p267
        $region50: #{tpu_custom_call.1} parent=11 // pred_check_branch
          %621 = sbr.rel (%p619) target = $region52
        $region51: #{tpu_custom_call.1} parent=11 // pred_region
          _
        $region52: #{tpu_custom_call.1} parent=11 // pred_fallthru
          _
        // Predicated region
        $region53: #{tpu_custom_call.1} parent=11 // pred_check
          %p622 = pneg %p288
        $region54: #{tpu_custom_call.1} parent=11 // pred_check_branch
          %624 = sbr.rel (%p622) target = $region56
        $region55: #{tpu_custom_call.1} parent=11 // pred_region
          _
        $region56: #{tpu_custom_call.1} parent=11 // pred_fallthru
          _
        // Predicated region
        $region57: #{tpu_custom_call.1} parent=11 // pred_check
          %p625 = pneg %p309
        $region58: #{tpu_custom_call.1} parent=11 // pred_check_branch
          %627 = sbr.rel (%p625) target = $region60
        $region59: #{tpu_custom_call.1} parent=11 // pred_region
          _
        $region60: #{tpu_custom_call.1} parent=11 // pred_fallthru
          _
        // Predicated region
        $region61: #{tpu_custom_call.1} parent=11 // pred_check
          %p628 = pneg %p330
        $region62: #{tpu_custom_call.1} parent=11 // pred_check_branch
          %630 = sbr.rel (%p628) target = $region64
        $region63: #{tpu_custom_call.1} parent=11 // pred_region
          _
        $region64: #{tpu_custom_call.1} parent=11 // pred_fallthru
          _
        // Predicated region
        $region65: #{tpu_custom_call.1} parent=11 // pred_check
          %p631 = pneg %p351
        $region66: #{tpu_custom_call.1} parent=11 // pred_check_branch
          %633 = sbr.rel (%p631) target = $region68
        $region67: #{tpu_custom_call.1} parent=11 // pred_region
          _
        $region68: #{tpu_custom_call.1} parent=11 // pred_fallthru
          _
        // Predicated region
        $region69: #{tpu_custom_call.1} parent=11 // pred_check
          %p634 = pneg %p372
        $region70: #{tpu_custom_call.1} parent=11 // pred_check_branch
          %636 = sbr.rel (%p634) target = $region72
        $region71: #{tpu_custom_call.1} parent=11 // pred_region
          _
        $region72: #{tpu_custom_call.1} parent=11 // pred_fallthru
          _
        // Predicated region
        $region73: #{tpu_custom_call.1} parent=11 // pred_check
          %p637 = pneg %p393
        $region74: #{tpu_custom_call.1} parent=11 // pred_check_branch
          %639 = sbr.rel (%p637) target = $region76
        $region75: #{tpu_custom_call.1} parent=11 // pred_region
          _
        $region76: #{tpu_custom_call.1} parent=11 // pred_fallthru
          _
        // Predicated region
        $region77: #{tpu_custom_call.1} parent=11 // pred_check
          %p640 = pneg %p414
        $region78: #{tpu_custom_call.1} parent=11 // pred_check_branch
          %642 = sbr.rel (%p640) target = $region80
        $region79: #{tpu_custom_call.1} parent=11 // pred_region
          _
        $region80: #{tpu_custom_call.1} parent=11 // pred_fallthru
          _
        // Predicated region
        $region81: #{tpu_custom_call.1} parent=11 // pred_check
          %p643 = pneg %p435
        $region82: #{tpu_custom_call.1} parent=11 // pred_check_branch
          %645 = sbr.rel (%p643) target = $region84
        $region83: #{tpu_custom_call.1} parent=11 // pred_region
          _
        $region84: #{tpu_custom_call.1} parent=11 // pred_fallthru
          _
        // Predicated region
        $region85: #{tpu_custom_call.1} parent=11 // pred_check
          %p646 = pneg %p456
        $region86: #{tpu_custom_call.1} parent=11 // pred_check_branch
          %648 = sbr.rel (%p646) target = $region88
        $region87: #{tpu_custom_call.1} parent=11 // pred_region
          _
        $region88: #{tpu_custom_call.1} parent=11 // pred_fallthru
          _
        // Predicated region
        $region89: #{tpu_custom_call.1} parent=11 // pred_check
          %p649 = pneg %p477
        $region90: #{tpu_custom_call.1} parent=11 // pred_check_branch
          %651 = sbr.rel (%p649) target = $region92
        $region91: #{tpu_custom_call.1} parent=11 // pred_region
          _
        $region92: #{tpu_custom_call.1} parent=11 // pred_fallthru
          _
        // Predicated region
        $region93: #{tpu_custom_call.1} parent=11 // pred_check
          %p652 = pneg %p498
        $region94: #{tpu_custom_call.1} parent=11 // pred_check_branch
          %654 = sbr.rel (%p652) target = $region96
        $region95: #{tpu_custom_call.1} parent=11 // pred_region
          _
        $region96: #{tpu_custom_call.1} parent=11 // pred_fallthru
          _
        // Predicated region
        $region97: #{tpu_custom_call.1} parent=11 // pred_check
          %p655 = pneg %p519
        $region98: #{tpu_custom_call.1} parent=11 // pred_check_branch
          %657 = sbr.rel (%p655) target = $region100
        $region99: #{tpu_custom_call.1} parent=11 // pred_region
          _
        $region100: #{tpu_custom_call.1} parent=11 // pred_fallthru
          _
        // Predicated region
        $region101: #{tpu_custom_call.1} parent=11 // pred_check
          %p658 = pneg %p540
        $region102: #{tpu_custom_call.1} parent=11 // pred_check_branch
          %660 = sbr.rel (%p658) target = $region104
        $region103: #{tpu_custom_call.1} parent=11 // pred_region
          _
        $region104: #{tpu_custom_call.1} parent=11 // pred_fallthru
          _
      $region12: #{tpu_custom_call.1} parent=5 // pred_fallthru
        _
      %p661 = scmp.lt.s32.totalorder %s31, 2
      // Predicated region
      $region105: #{tpu_custom_call.1} parent=5 // pred_check
        %p662 = pneg %p661
      $region106: #{tpu_custom_call.1} parent=5 // pred_check_branch
        %664 = sbr.rel (%p662) target = $region108
      $region107: #{tpu_custom_call.1} parent=5 // pred_region
        // Predicated region
        $region109: #{tpu_custom_call.1} parent=107 // pred_check
          %p665 = pneg %p51
        $region110: #{tpu_custom_call.1} parent=107 // pred_check_branch
          %667 = sbr.rel (%p665) target = $region112
        $region111: #{tpu_custom_call.1} parent=107 // pred_region
          %s668 = smul.u32 3, %s31
          %p669 = scmp.lt.s32.totalorder %s668, 5
          %s670 = scalar_select %p669, %s668, 5
          %s671 = smul.addr %s670, 8
          %s672 = scalar_lea.vmem %s0, %s671
          %s673 = smul.u32 3, %s31
        $region112: #{tpu_custom_call.1} parent=107 // pred_fallthru
          _
      $region108: #{tpu_custom_call.1} parent=5 // pred_fallthru
        _
      %p674 = scmp.le.s32.totalorder 1, %s31
      %p675 = scmp.lt.s32.totalorder %s31, 3
      %p676 = pnand %p674, %p675
      %p677 = pneg %p676
      // Predicated region
      $region113: #{tpu_custom_call.1} parent=5 // pred_check
        _
      $region114: #{tpu_custom_call.1} parent=5 // pred_check_branch
        %679 = sbr.rel (%p676) target = $region116
      $region115: #{tpu_custom_call.1} parent=5 // pred_region
        %s680 = ssub.s32 %s31, 1
        // Predicated region
        $region117: #{tpu_custom_call.1} parent=115 // pred_check
          %p681 = pneg %p78
        $region118: #{tpu_custom_call.1} parent=115 // pred_check_branch
          %683 = sbr.rel (%p681) target = $region120
        $region119: #{tpu_custom_call.1} parent=115 // pred_region
          %685 = dma.done [#allocation3], 384
        $region120: #{tpu_custom_call.1} parent=115 // pred_fallthru
          _
        %s686 = smul.u32 3, %s36
        %p687 = scmp.lt.s32.totalorder %s686, 5
        %s688 = scalar_select %p687, %s686, 5
        %s689 = smul.addr %s688, 8
        %s690 = scalar_lea.vmem %s0, %s689
        %p691 = pneg %p57
        %p692 = pneg %p54
        %p693 = pneg %p78
        %p694 = pneg %p75
        %p695 = pneg %p99
        %p696 = pneg %p96
        %p697 = pneg %p120
        %p698 = pneg %p117
        %p699 = pneg %p141
        %p700 = pneg %p138
        %p701 = pneg %p162
        %p702 = pneg %p159
        %p703 = pneg %p183
        %p704 = pneg %p180
        %p705 = pneg %p204
        %p706 = pneg %p201
        %p707 = pneg %p225
        %p708 = pneg %p222
        %p709 = pneg %p246
        %p710 = pneg %p243
        %p711 = pneg %p267
        %p712 = pneg %p264
        %p713 = pneg %p288
        %p714 = pneg %p285
        %p715 = pneg %p309
        %p716 = pneg %p306
        %p717 = pneg %p330
        %p718 = pneg %p327
        %p719 = pneg %p351
        %p720 = pneg %p348
        %p721 = pneg %p372
        %p722 = pneg %p369
        %p723 = pneg %p393
        %p724 = pneg %p390
        %p725 = pneg %p414
        %p726 = pneg %p411
        %p727 = pneg %p435
        %p728 = pneg %p432
        %p729 = pneg %p456
        %p730 = pneg %p453
        %p731 = pneg %p477
        %p732 = pneg %p474
        %p733 = pneg %p498
        %p734 = pneg %p495
        %p735 = pneg %p519
        %p736 = pneg %p516
        %p737 = pneg %p540
        %p738 = pneg %p537
        %p739 = pneg %p566
        %p740 = pneg %p563
        %s741 = smul.u32 3, %s36
        %p742 = scmp.lt.s32.totalorder %s741, 5
        %s743 = scalar_select %p742, %s741, 5
        %s744 = smul.addr %s743, 8
        %s745 = scalar_lea.vmem %s24, %s744
        %s746 = smul.u32 3, %s36
        %p747 = scmp.lt.s32.totalorder %s746, 5
        %s748 = scalar_select %p747, %s746, 5
        %s749 = smul.addr %s748, 8
        %s750 = scalar_lea.vmem %s0, %s749
        %s751 = smul.u32 3, %s36
        %s752 = smul.u32 3, %s36
        %p753 = scmp.lt.s32.totalorder %s752, 5
        %s754 = scalar_select %p753, %s752, 5
        %s755 = smul.addr %s754, 8
        %s756 = scalar_lea.vmem %s24, %s755
        %s757 = smul.u32 3, %s36
        %v758 = vld [vmem:[#allocation2] sm:$0xff]
        %v759 = vld [vmem:[#allocation2 + $0x8] sm:$0xff]
        %v760 = vld [vmem:[#allocation2 + $0x10] sm:$0xff]
        %v761 = vld [vmem:[%s750] sm:$0xff]
        %v762 = vld [vmem:[%s750 + $0x8] sm:$0xff]
        %v763 = vld [vmem:[%s750 + $0x10] sm:$0xff]
        %v764 = vld [vmem:[%s2] sm:$0xff]
        %v765 = vld [vmem:[%s2 + $0x8] sm:$0xff]
        %v766 = vld [vmem:[%s2 + $0x10] sm:$0xff]
        %v767 = vld [vmem:[%s2 + $0x18] sm:$0xff]
        %v768 = vld [vmem:[%s3] sm:$0x1]
        %v770 = vperm.slane %v768, 0
        %vm772 = vcmask 261120
        %v774 = vsel %vm772, %v761, 0
        %v777 = vsel %vm772, %v762, 0
        %v780 = vsel %vm772, %v763, 0
        %782 = vmatpush.msra.mxu0 0.0
        %783 = vmatpush.msra.mxu0 0.0
        %784 = vmatpush.msra.mxu0 0.0
        %785 = vmatpush.msra.mxu0 0.0
        %786 = vmatpush.msra.mxu0 0.0
        %787 = vmatpush.msra.mxu0 0.0
        %788 = vmatpush.msra.mxu0 0.0
        %789 = vmatpush.msra.mxu0 0.0
        %790 = vmatpush.msra.mxu0 0.0
        %791 = vmatpush.msra.mxu0 0.0
        %792 = vmatpush.msra.mxu0 0.0
        %793 = vmatpush.msra.mxu0 0.0
        %794 = vmatpush.msra.mxu0 %v767
        %795 = vmatpush.msra.mxu0 %v766
        %796 = vmatpush.msra.mxu0 %v765
        %797 = vmatpush.msra.mxu0 %v764
        %798 = vmatmul.f32.gmra.mxu0 %v774
        %v799 = vpop.f32.mrf.mxu0
        %v800 = vadd.f32 %v770, %v799
        %801 = vmatmul.f32.gmra.mxu0 %v777
        %v802 = vpop.f32.mrf.mxu0
        %v803 = vadd.f32 %v770, %v802
        %804 = vmatmul.f32.gmra.mxu0 %v780
        %v805 = vpop.f32.mrf.mxu0
        %v806 = vadd.f32 %v770, %v805
        %807 = vdwg.mxu0
        %811 = vrot.lane.b32.xlu0 %v800, 104
        %v812 = vpop.permute.xlu0 %811
        %813 = vrot.lane.b32.xlu0 %v803, 104
        %v814 = vpop.permute.xlu0 %813
        %815 = vrot.lane.b32.xlu0 %v806, 104
        %v816 = vpop.permute.xlu0 %815
        %817 = vrot.lane.b32.xlu0 %v800, 80
        %v818 = vpop.permute.xlu0 %817
        %819 = vrot.lane.b32.xlu0 %v803, 80
        %v820 = vpop.permute.xlu0 %819
        %821 = vrot.lane.b32.xlu0 %v806, 80
        %v822 = vpop.permute.xlu0 %821
        %823 = vrot.lane.b32.xlu0 %v800, 56
        %v824 = vpop.permute.xlu0 %823
        %825 = vrot.lane.b32.xlu0 %v803, 56
        %v826 = vpop.permute.xlu0 %825
        %827 = vrot.lane.b32.xlu0 %v806, 56
        %v828 = vpop.permute.xlu0 %827
        %829 = vrot.lane.b32.xlu0 %v800, 120
        %v830 = vpop.permute.xlu0 %829
        %831 = vrot.lane.b32.xlu0 %v803, 120
        %v832 = vpop.permute.xlu0 %831
        %833 = vrot.lane.b32.xlu0 %v806, 120
        %v834 = vpop.permute.xlu0 %833
        %vm835 = vcmask 64512
        %v836 = vsel %vm835, %v800, 0
        %v838 = vsel %vm835, %v803, 0
        %v840 = vsel %vm835, %v806, 0
        %v842 = vsel %vm835, %v830, 0
        %v844 = vsel %vm835, %v832, 0
        %v846 = vsel %vm835, %v834, 0
        %848 = vmatpush.xpose.msra.mxu0 0.0
        %849 = vmatpush.xpose.msra.mxu0 0.0
        %850 = vmatpush.xpose.msra.mxu0 0.0
        %851 = vmatpush.xpose.msra.mxu0 0.0
        %852 = vmatpush.xpose.msra.mxu0 0.0
        %853 = vmatpush.xpose.msra.mxu0 0.0
        %854 = vmatpush.xpose.msra.mxu0 0.0
        %855 = vmatpush.xpose.msra.mxu0 0.0
        %856 = vmatpush.xpose.msra.mxu0 0.0
        %857 = vmatpush.xpose.msra.mxu0 0.0
        %858 = vmatpush.xpose.msra.mxu0 0.0
        %859 = vmatpush.xpose.msra.mxu0 0.0
        %860 = vmatpush.xpose.msra.mxu0 0.0
        %861 = vmatpush.xpose.msra.mxu0 %v846
        %862 = vmatpush.xpose.msra.mxu0 %v844
        %863 = vmatpush.xpose.msra.mxu0 %v842
        %864 = vmatmul.f32.gmra.mxu0 %v836
        %v865 = vpop.f32.mrf.mxu0
        %v866 = vadd.f32 %v758, %v865
        %867 = vmatmul.f32.gmra.mxu0 %v838
        %v868 = vpop.f32.mrf.mxu0
        %v869 = vadd.f32 %v759, %v868
        %870 = vmatmul.f32.gmra.mxu0 %v840
        %v871 = vpop.f32.mrf.mxu0
        %v872 = vadd.f32 %v760, %v871
        %873 = vdwg.mxu0
        %874 = vrot.lane.b32.xlu0 %v812, 120
        %v875 = vpop.permute.xlu0 %874
        %876 = vrot.lane.b32.xlu0 %v814, 120
        %v877 = vpop.permute.xlu0 %876
        %878 = vrot.lane.b32.xlu0 %v816, 120
        %v879 = vpop.permute.xlu0 %878
        %v880 = vsel %vm835, %v812, 0
        %v882 = vsel %vm835, %v814, 0
        %v884 = vsel %vm835, %v816, 0
        %v886 = vsel %vm835, %v875, 0
        %v888 = vsel %vm835, %v877, 0
        %v890 = vsel %vm835, %v879, 0
        %892 = vmatpush.xpose.msra.mxu0 0.0
        %893 = vmatpush.xpose.msra.mxu0 0.0
        %894 = vmatpush.xpose.msra.mxu0 0.0
        %895 = vmatpush.xpose.msra.mxu0 0.0
        %896 = vmatpush.xpose.msra.mxu0 0.0
        %897 = vmatpush.xpose.msra.mxu0 0.0
        %898 = vmatpush.xpose.msra.mxu0 0.0
        %899 = vmatpush.xpose.msra.mxu0 0.0
        %900 = vmatpush.xpose.msra.mxu0 0.0
        %901 = vmatpush.xpose.msra.mxu0 0.0
        %902 = vmatpush.xpose.msra.mxu0 0.0
        %903 = vmatpush.xpose.msra.mxu0 0.0
        %904 = vmatpush.xpose.msra.mxu0 0.0
        %905 = vmatpush.xpose.msra.mxu0 %v890
        %906 = vmatpush.xpose.msra.mxu0 %v888
        %907 = vmatpush.xpose.msra.mxu0 %v886
        %908 = vmatmul.f32.gmra.mxu0 %v880
        %v909 = vpop.f32.mrf.mxu0
        %v910 = vadd.f32 %v758, %v909
        %911 = vmatmul.f32.gmra.mxu0 %v882
        %v912 = vpop.f32.mrf.mxu0
        %v913 = vadd.f32 %v759, %v912
        %914 = vmatmul.f32.gmra.mxu0 %v884
        %v915 = vpop.f32.mrf.mxu0
        %v916 = vadd.f32 %v760, %v915
        %917 = vdwg.mxu0
        %918 = vrot.lane.b32.xlu0 %v818, 120
        %v919 = vpop.permute.xlu0 %918
        %920 = vrot.lane.b32.xlu0 %v820, 120
        %v921 = vpop.permute.xlu0 %920
        %922 = vrot.lane.b32.xlu0 %v822, 120
        %v923 = vpop.permute.xlu0 %922
        %v924 = vsel %vm835, %v818, 0
        %v926 = vsel %vm835, %v820, 0
        %v928 = vsel %vm835, %v822, 0
        %v930 = vsel %vm835, %v919, 0
        %v932 = vsel %vm835, %v921, 0
        %v934 = vsel %vm835, %v923, 0
        %936 = vmatpush.xpose.msra.mxu0 0.0
        %937 = vmatpush.xpose.msra.mxu0 0.0
        %938 = vmatpush.xpose.msra.mxu0 0.0
        %939 = vmatpush.xpose.msra.mxu0 0.0
        %940 = vmatpush.xpose.msra.mxu0 0.0
        %941 = vmatpush.xpose.msra.mxu0 0.0
        %942 = vmatpush.xpose.msra.mxu0 0.0
        %943 = vmatpush.xpose.msra.mxu0 0.0
        %944 = vmatpush.xpose.msra.mxu0 0.0
        %945 = vmatpush.xpose.msra.mxu0 0.0
        %946 = vmatpush.xpose.msra.mxu0 0.0
        %947 = vmatpush.xpose.msra.mxu0 0.0
        %948 = vmatpush.xpose.msra.mxu0 0.0
        %949 = vmatpush.xpose.msra.mxu0 %v934
        %950 = vmatpush.xpose.msra.mxu0 %v932
        %951 = vmatpush.xpose.msra.mxu0 %v930
        %952 = vmatmul.f32.gmra.mxu0 %v924
        %v953 = vpop.f32.mrf.mxu0
        %v954 = vadd.f32 %v758, %v953
        %955 = vmatmul.f32.gmra.mxu0 %v926
        %v956 = vpop.f32.mrf.mxu0
        %v957 = vadd.f32 %v759, %v956
        %958 = vmatmul.f32.gmra.mxu0 %v928
        %v959 = vpop.f32.mrf.mxu0
        %v960 = vadd.f32 %v760, %v959
        %961 = vdwg.mxu0
        %962 = vrot.lane.b32.xlu0 %v824, 120
        %v963 = vpop.permute.xlu0 %962
        %964 = vrot.lane.b32.xlu0 %v826, 120
        %v965 = vpop.permute.xlu0 %964
        %966 = vrot.lane.b32.xlu0 %v828, 120
        %v967 = vpop.permute.xlu0 %966
        %v968 = vsel %vm835, %v824, 0
        %v970 = vsel %vm835, %v826, 0
        %v972 = vsel %vm835, %v828, 0
        %v974 = vsel %vm835, %v963, 0
        %v976 = vsel %vm835, %v965, 0
        %v978 = vsel %vm835, %v967, 0
        %980 = vmatpush.xpose.msra.mxu0 0.0
        %981 = vmatpush.xpose.msra.mxu0 0.0
        %982 = vmatpush.xpose.msra.mxu0 0.0
        %983 = vmatpush.xpose.msra.mxu0 0.0
        %984 = vmatpush.xpose.msra.mxu0 0.0
        %985 = vmatpush.xpose.msra.mxu0 0.0
        %986 = vmatpush.xpose.msra.mxu0 0.0
        %987 = vmatpush.xpose.msra.mxu0 0.0
        %988 = vmatpush.xpose.msra.mxu0 0.0
        %989 = vmatpush.xpose.msra.mxu0 0.0
        %990 = vmatpush.xpose.msra.mxu0 0.0
        %991 = vmatpush.xpose.msra.mxu0 0.0
        %992 = vmatpush.xpose.msra.mxu0 0.0
        %993 = vmatpush.xpose.msra.mxu0 %v978
        %994 = vmatpush.xpose.msra.mxu0 %v976
        %995 = vmatpush.xpose.msra.mxu0 %v974
        %996 = vmatmul.f32.gmra.mxu0 %v968
        %v997 = vpop.f32.mrf.mxu0
        %v998 = vadd.f32 %v758, %v997
        %999 = vmatmul.f32.gmra.mxu0 %v970
        %v1000 = vpop.f32.mrf.mxu0
        %v1001 = vadd.f32 %v759, %v1000
        %1002 = vmatmul.f32.gmra.mxu0 %v972
        %v1003 = vpop.f32.mrf.mxu0
        %v1004 = vadd.f32 %v760, %v1003
        %1005 = vdwg.mxu0
        %vm1006 = vcmask 195584
        %v1007 = vsel %vm1006, %v866, -inf
        %1008 = vmax.xlane.f32.xlu0 %v1007
        %v1009 = vpop.xlane.xlu0 %1008
        %v1010 = vsel %vm1006, %v869, -inf
        %1011 = vmax.xlane.f32.xlu0 %v1010
        %v1012 = vpop.xlane.xlu0 %1011
        %v1013 = vsel %vm1006, %v872, -inf
        %1014 = vmax.xlane.f32.xlu0 %v1013
        %v1015 = vpop.xlane.xlu0 %1014
        %v1016 = vsel %vm1006, %v910, -inf
        %1017 = vmax.xlane.f32.xlu0 %v1016
        %v1018 = vpop.xlane.xlu0 %1017
        %v1019 = vsel %vm1006, %v913, -inf
        %1020 = vmax.xlane.f32.xlu0 %v1019
        %v1021 = vpop.xlane.xlu0 %1020
        %v1022 = vsel %vm1006, %v916, -inf
        %1023 = vmax.xlane.f32.xlu0 %v1022
        %v1024 = vpop.xlane.xlu0 %1023
        %v1025 = vsel %vm1006, %v954, -inf
        %1026 = vmax.xlane.f32.xlu0 %v1025
        %v1027 = vpop.xlane.xlu0 %1026
        %v1028 = vsel %vm1006, %v957, -inf
        %1029 = vmax.xlane.f32.xlu0 %v1028
        %v1030 = vpop.xlane.xlu0 %1029
        %v1031 = vsel %vm1006, %v960, -inf
        %1032 = vmax.xlane.f32.xlu0 %v1031
        %v1033 = vpop.xlane.xlu0 %1032
        %v1034 = vsel %vm1006, %v998, -inf
        %1035 = vmax.xlane.f32.xlu0 %v1034
        %v1036 = vpop.xlane.xlu0 %1035
        %v1037 = vsel %vm1006, %v1001, -inf
        %1038 = vmax.xlane.f32.xlu0 %v1037
        %v1039 = vpop.xlane.xlu0 %1038
        %v1040 = vsel %vm1006, %v1004, -inf
        %1041 = vmax.xlane.f32.xlu0 %v1040
        %v1042 = vpop.xlane.xlu0 %1041
        %v1043 = vsub.f32 %v866, %v1009
        %v1044 = vsub.f32 %v869, %v1012
        %v1045 = vsub.f32 %v872, %v1015
        %v1046 = vsub.f32 %v910, %v1018
        %v1047 = vsub.f32 %v913, %v1021
        %v1048 = vsub.f32 %v916, %v1024
        %v1049 = vsub.f32 %v954, %v1027
        %v1050 = vsub.f32 %v957, %v1030
        %v1051 = vsub.f32 %v960, %v1033
        %v1052 = vsub.f32 %v998, %v1036
        %v1053 = vsub.f32 %v1001, %v1039
        %v1054 = vsub.f32 %v1004, %v1042
        %v1055 = vmul.f32 %v1043, 1.442695
        %v1056 = vpow.pop %v1055
        %v1057 = vmul.f32 %v1044, 1.442695
        %v1058 = vpow.pop %v1057
        %v1059 = vmul.f32 %v1045, 1.442695
        %v1060 = vpow.pop %v1059
        %v1061 = vmul.f32 %v1046, 1.442695
        %v1062 = vpow.pop %v1061
        %v1063 = vmul.f32 %v1047, 1.442695
        %v1064 = vpow.pop %v1063
        %v1065 = vmul.f32 %v1048, 1.442695
        %v1066 = vpow.pop %v1065
        %v1067 = vmul.f32 %v1049, 1.442695
        %v1068 = vpow.pop %v1067
        %v1069 = vmul.f32 %v1050, 1.442695
        %v1070 = vpow.pop %v1069
        %v1071 = vmul.f32 %v1051, 1.442695
        %v1072 = vpow.pop %v1071
        %v1073 = vmul.f32 %v1052, 1.442695
        %v1074 = vpow.pop %v1073
        %v1075 = vmul.f32 %v1053, 1.442695
        %v1076 = vpow.pop %v1075
        %v1077 = vmul.f32 %v1054, 1.442695
        %v1078 = vpow.pop %v1077
        %v1079 = vsel %vm1006, %v1056, 0.0
        %1080 = vadd.xlane.f32.xlu0 %v1079
        %v1081 = vpop.xlane.xlu0 %1080
        %v1082 = vsel %vm1006, %v1058, 0.0
        %1083 = vadd.xlane.f32.xlu0 %v1082
        %v1084 = vpop.xlane.xlu0 %1083
        %v1085 = vsel %vm1006, %v1060, 0.0
        %1086 = vadd.xlane.f32.xlu0 %v1085
        %v1087 = vpop.xlane.xlu0 %1086
        %v1088 = vsel %vm1006, %v1062, 0.0
        %1089 = vadd.xlane.f32.xlu0 %v1088
        %v1090 = vpop.xlane.xlu0 %1089
        %v1091 = vsel %vm1006, %v1064, 0.0
        %1092 = vadd.xlane.f32.xlu0 %v1091
        %v1093 = vpop.xlane.xlu0 %1092
        %v1094 = vsel %vm1006, %v1066, 0.0
        %1095 = vadd.xlane.f32.xlu0 %v1094
        %v1096 = vpop.xlane.xlu0 %1095
        %v1097 = vsel %vm1006, %v1068, 0.0
        %1098 = vadd.xlane.f32.xlu0 %v1097
        %v1099 = vpop.xlane.xlu0 %1098
        %v1100 = vsel %vm1006, %v1070, 0.0
        %1101 = vadd.xlane.f32.xlu0 %v1100
        %v1102 = vpop.xlane.xlu0 %1101
        %v1103 = vsel %vm1006, %v1072, 0.0
        %1104 = vadd.xlane.f32.xlu0 %v1103
        %v1105 = vpop.xlane.xlu0 %1104
        %v1106 = vsel %vm1006, %v1074, 0.0
        %1107 = vadd.xlane.f32.xlu0 %v1106
        %v1108 = vpop.xlane.xlu0 %1107
        %v1109 = vsel %vm1006, %v1076, 0.0
        %1110 = vadd.xlane.f32.xlu0 %v1109
        %v1111 = vpop.xlane.xlu0 %1110
        %v1112 = vsel %vm1006, %v1078, 0.0
        %1113 = vadd.xlane.f32.xlu0 %v1112
        %v1114 = vpop.xlane.xlu0 %1113
        %v1115 = vrcp.pop %v1081
        %v1116 = vrcp.pop %v1084
        %v1117 = vrcp.pop %v1087
        %v1118 = vrcp.pop %v1090
        %v1119 = vrcp.pop %v1093
        %v1120 = vrcp.pop %v1096
        %v1121 = vrcp.pop %v1099
        %v1122 = vrcp.pop %v1102
        %v1123 = vrcp.pop %v1105
        %v1124 = vrcp.pop %v1108
        %v1125 = vrcp.pop %v1111
        %v1126 = vrcp.pop %v1114
        %v1127 = vmul.f32 %v1056, %v1115
        %v1128 = vmul.f32 %v1058, %v1116
        %v1129 = vmul.f32 %v1060, %v1117
        %v1130 = vmul.f32 %v1062, %v1118
        %v1131 = vmul.f32 %v1064, %v1119
        %v1132 = vmul.f32 %v1066, %v1120
        %v1133 = vmul.f32 %v1068, %v1121
        %v1134 = vmul.f32 %v1070, %v1122
        %v1135 = vmul.f32 %v1072, %v1123
        %v1136 = vmul.f32 %v1074, %v1124
        %v1137 = vmul.f32 %v1076, %v1125
        %v1138 = vmul.f32 %v1078, %v1126
        %v1139 = vadd.f32 %v1127, %v758
        %v1140 = vadd.f32 %v1128, %v759
        %v1141 = vadd.f32 %v1129, %v760
        %v1142 = vadd.f32 %v1130, %v758
        %v1143 = vadd.f32 %v1131, %v759
        %v1144 = vadd.f32 %v1132, %v760
        %v1145 = vadd.f32 %v1133, %v758
        %v1146 = vadd.f32 %v1134, %v759
        %v1147 = vadd.f32 %v1135, %v760
        %v1148 = vadd.f32 %v1136, %v758
        %v1149 = vadd.f32 %v1137, %v759
        %v1150 = vadd.f32 %v1138, %v760
        %v1151 = vsel %vm1006, %v1139, -inf
        %1152 = vmax.xlane.f32.xlu0 %v1151
        %v1153 = vpop.xlane.xlu0 %1152
        %v1154 = vsel %vm1006, %v1140, -inf
        %1155 = vmax.xlane.f32.xlu0 %v1154
        %v1156 = vpop.xlane.xlu0 %1155
        %v1157 = vsel %vm1006, %v1141, -inf
        %1158 = vmax.xlane.f32.xlu0 %v1157
        %v1159 = vpop.xlane.xlu0 %1158
        %v1160 = vsel %vm1006, %v1142, -inf
        %1161 = vmax.xlane.f32.xlu0 %v1160
        %v1162 = vpop.xlane.xlu0 %1161
        %v1163 = vsel %vm1006, %v1143, -inf
        %1164 = vmax.xlane.f32.xlu0 %v1163
        %v1165 = vpop.xlane.xlu0 %1164
        %v1166 = vsel %vm1006, %v1144, -inf
        %1167 = vmax.xlane.f32.xlu0 %v1166
        %v1168 = vpop.xlane.xlu0 %1167
        %v1169 = vsel %vm1006, %v1145, -inf
        %1170 = vmax.xlane.f32.xlu0 %v1169
        %v1171 = vpop.xlane.xlu0 %1170
        %v1172 = vsel %vm1006, %v1146, -inf
        %1173 = vmax.xlane.f32.xlu0 %v1172
        %v1174 = vpop.xlane.xlu0 %1173
        %v1175 = vsel %vm1006, %v1147, -inf
        %1176 = vmax.xlane.f32.xlu0 %v1175
        %v1177 = vpop.xlane.xlu0 %1176
        %v1178 = vsel %vm1006, %v1148, -inf
        %1179 = vmax.xlane.f32.xlu0 %v1178
        %v1180 = vpop.xlane.xlu0 %1179
        %v1181 = vsel %vm1006, %v1149, -inf
        %1182 = vmax.xlane.f32.xlu0 %v1181
        %v1183 = vpop.xlane.xlu0 %1182
        %v1184 = vsel %vm1006, %v1150, -inf
        %1185 = vmax.xlane.f32.xlu0 %v1184
        %v1186 = vpop.xlane.xlu0 %1185
        %v1187 = vsub.f32 %v1139, %v1153
        %v1188 = vsub.f32 %v1140, %v1156
        %v1189 = vsub.f32 %v1141, %v1159
        %v1190 = vsub.f32 %v1142, %v1162
        %v1191 = vsub.f32 %v1143, %v1165
        %v1192 = vsub.f32 %v1144, %v1168
        %v1193 = vsub.f32 %v1145, %v1171
        %v1194 = vsub.f32 %v1146, %v1174
        %v1195 = vsub.f32 %v1147, %v1177
        %v1196 = vsub.f32 %v1148, %v1180
        %v1197 = vsub.f32 %v1149, %v1183
        %v1198 = vsub.f32 %v1150, %v1186
        %v1199 = vmul.f32 %v1187, 1.442695
        %v1200 = vpow.pop %v1199
        %v1201 = vmul.f32 %v1188, 1.442695
        %v1202 = vpow.pop %v1201
        %v1203 = vmul.f32 %v1189, 1.442695
        %v1204 = vpow.pop %v1203
        %v1205 = vmul.f32 %v1190, 1.442695
        %v1206 = vpow.pop %v1205
        %v1207 = vmul.f32 %v1191, 1.442695
        %v1208 = vpow.pop %v1207
        %v1209 = vmul.f32 %v1192, 1.442695
        %v1210 = vpow.pop %v1209
        %v1211 = vmul.f32 %v1193, 1.442695
        %v1212 = vpow.pop %v1211
        %v1213 = vmul.f32 %v1194, 1.442695
        %v1214 = vpow.pop %v1213
        %v1215 = vmul.f32 %v1195, 1.442695
        %v1216 = vpow.pop %v1215
        %v1217 = vmul.f32 %v1196, 1.442695
        %v1218 = vpow.pop %v1217
        %v1219 = vmul.f32 %v1197, 1.442695
        %v1220 = vpow.pop %v1219
        %v1221 = vmul.f32 %v1198, 1.442695
        %v1222 = vpow.pop %v1221
        %v1223 = vsel %vm1006, %v1200, 0.0
        %1224 = vadd.xlane.f32.xlu0 %v1223
        %v1225 = vpop.xlane.xlu0 %1224
        %v1226 = vsel %vm1006, %v1202, 0.0
        %1227 = vadd.xlane.f32.xlu0 %v1226
        %v1228 = vpop.xlane.xlu0 %1227
        %v1229 = vsel %vm1006, %v1204, 0.0
        %1230 = vadd.xlane.f32.xlu0 %v1229
        %v1231 = vpop.xlane.xlu0 %1230
        %v1232 = vsel %vm1006, %v1206, 0.0
        %1233 = vadd.xlane.f32.xlu0 %v1232
        %v1234 = vpop.xlane.xlu0 %1233
        %v1235 = vsel %vm1006, %v1208, 0.0
        %1236 = vadd.xlane.f32.xlu0 %v1235
        %v1237 = vpop.xlane.xlu0 %1236
        %v1238 = vsel %vm1006, %v1210, 0.0
        %1239 = vadd.xlane.f32.xlu0 %v1238
        %v1240 = vpop.xlane.xlu0 %1239
        %v1241 = vsel %vm1006, %v1212, 0.0
        %1242 = vadd.xlane.f32.xlu0 %v1241
        %v1243 = vpop.xlane.xlu0 %1242
        %v1244 = vsel %vm1006, %v1214, 0.0
        %1245 = vadd.xlane.f32.xlu0 %v1244
        %v1246 = vpop.xlane.xlu0 %1245
        %v1247 = vsel %vm1006, %v1216, 0.0
        %1248 = vadd.xlane.f32.xlu0 %v1247
        %v1249 = vpop.xlane.xlu0 %1248
        %v1250 = vsel %vm1006, %v1218, 0.0
        %1251 = vadd.xlane.f32.xlu0 %v1250
        %v1252 = vpop.xlane.xlu0 %1251
        %v1253 = vsel %vm1006, %v1220, 0.0
        %1254 = vadd.xlane.f32.xlu0 %v1253
        %v1255 = vpop.xlane.xlu0 %1254
        %v1256 = vsel %vm1006, %v1222, 0.0
        %1257 = vadd.xlane.f32.xlu0 %v1256
        %v1258 = vpop.xlane.xlu0 %1257
        %v1259 = vrcp.pop %v1225
        %v1260 = vrcp.pop %v1228
        %v1261 = vrcp.pop %v1231
        %v1262 = vrcp.pop %v1234
        %v1263 = vrcp.pop %v1237
        %v1264 = vrcp.pop %v1240
        %v1265 = vrcp.pop %v1243
        %v1266 = vrcp.pop %v1246
        %v1267 = vrcp.pop %v1249
        %v1268 = vrcp.pop %v1252
        %v1269 = vrcp.pop %v1255
        %v1270 = vrcp.pop %v1258
        %v1271 = vmul.f32 %v1200, %v1259
        %v1272 = vmul.f32 %v1202, %v1260
        %v1273 = vmul.f32 %v1204, %v1261
        %v1274 = vmul.f32 %v1206, %v1262
        %v1275 = vmul.f32 %v1208, %v1263
        %v1276 = vmul.f32 %v1210, %v1264
        %v1277 = vmul.f32 %v1212, %v1265
        %v1278 = vmul.f32 %v1214, %v1266
        %v1279 = vmul.f32 %v1216, %v1267
        %v1280 = vmul.f32 %v1218, %v1268
        %v1281 = vmul.f32 %v1220, %v1269
        %v1282 = vmul.f32 %v1222, %v1270
        %1283 = vrot.lane.b32.xlu0 %v800, 112
        %v1284 = vpop.permute.xlu0 %1283
        %1285 = vrot.lane.b32.xlu0 %v803, 112
        %v1286 = vpop.permute.xlu0 %1285
        %1287 = vrot.lane.b32.xlu0 %v806, 112
        %v1288 = vpop.permute.xlu0 %1287
        %v1293 = vsel %vm1006, %v1271, 0
        %v1296 = vsel %vm1006, %v1272, 0
        %v1299 = vsel %vm1006, %v1273, 0
        %1301 = vmatpush.msra.mxu0 0.0
        %1302 = vmatpush.msra.mxu0 0.0
        %1303 = vmatpush.msra.mxu0 0.0
        %1304 = vmatpush.msra.mxu0 0.0
        %1305 = vmatpush.msra.mxu0 0.0
        %1306 = vmatpush.msra.mxu0 0.0
        %1307 = vmatpush.msra.mxu0 0.0
        %1308 = vmatpush.msra.mxu0 0.0
        %1309 = vmatpush.msra.mxu0 0.0
        %1310 = vmatpush.msra.mxu0 0.0
        %1311 = vmatpush.msra.mxu0 0.0
        %1312 = vmatpush.msra.mxu0 0.0
        %1313 = vmatpush.msra.mxu0 0.0
        %1314 = vmatpush.msra.mxu0 %v1288
        %1315 = vmatpush.msra.mxu0 %v1286
        %1316 = vmatpush.msra.mxu0 %v1284
        %1317 = vmatmul.f32.gmra.mxu0 %v1293
        %v1318 = vpop.f32.mrf.mxu0
        %v1319 = vadd.f32 0.0, %v1318
        %1320 = vmatmul.f32.gmra.mxu0 %v1296
        %v1321 = vpop.f32.mrf.mxu0
        %v1322 = vadd.f32 0.0, %v1321
        %1323 = vmatmul.f32.gmra.mxu0 %v1299
        %v1324 = vpop.f32.mrf.mxu0
        %v1325 = vadd.f32 0.0, %v1324
        %1326 = vdwg.mxu0
        %1327 = vrot.lane.b32.xlu0 %v812, 112
        %v1328 = vpop.permute.xlu0 %1327
        %1329 = vrot.lane.b32.xlu0 %v814, 112
        %v1330 = vpop.permute.xlu0 %1329
        %1331 = vrot.lane.b32.xlu0 %v816, 112
        %v1332 = vpop.permute.xlu0 %1331
        %v1337 = vsel %vm1006, %v1274, 0
        %v1340 = vsel %vm1006, %v1275, 0
        %v1343 = vsel %vm1006, %v1276, 0
        %1345 = vmatpush.msra.mxu0 0.0
        %1346 = vmatpush.msra.mxu0 0.0
        %1347 = vmatpush.msra.mxu0 0.0
        %1348 = vmatpush.msra.mxu0 0.0
        %1349 = vmatpush.msra.mxu0 0.0
        %1350 = vmatpush.msra.mxu0 0.0
        %1351 = vmatpush.msra.mxu0 0.0
        %1352 = vmatpush.msra.mxu0 0.0
        %1353 = vmatpush.msra.mxu0 0.0
        %1354 = vmatpush.msra.mxu0 0.0
        %1355 = vmatpush.msra.mxu0 0.0
        %1356 = vmatpush.msra.mxu0 0.0
        %1357 = vmatpush.msra.mxu0 0.0
        %1358 = vmatpush.msra.mxu0 %v1332
        %1359 = vmatpush.msra.mxu0 %v1330
        %1360 = vmatpush.msra.mxu0 %v1328
        %1361 = vmatmul.f32.gmra.mxu0 %v1337
        %v1362 = vpop.f32.mrf.mxu0
        %v1363 = vadd.f32 0.0, %v1362
        %1364 = vmatmul.f32.gmra.mxu0 %v1340
        %v1365 = vpop.f32.mrf.mxu0
        %v1366 = vadd.f32 0.0, %v1365
        %1367 = vmatmul.f32.gmra.mxu0 %v1343
        %v1368 = vpop.f32.mrf.mxu0
        %v1369 = vadd.f32 0.0, %v1368
        %1370 = vdwg.mxu0
        %1371 = vrot.lane.b32.xlu0 %v818, 112
        %v1372 = vpop.permute.xlu0 %1371
        %1373 = vrot.lane.b32.xlu0 %v820, 112
        %v1374 = vpop.permute.xlu0 %1373
        %1375 = vrot.lane.b32.xlu0 %v822, 112
        %v1376 = vpop.permute.xlu0 %1375
        %v1381 = vsel %vm1006, %v1277, 0
        %v1384 = vsel %vm1006, %v1278, 0
        %v1387 = vsel %vm1006, %v1279, 0
        %1389 = vmatpush.msra.mxu0 0.0
        %1390 = vmatpush.msra.mxu0 0.0
        %1391 = vmatpush.msra.mxu0 0.0
        %1392 = vmatpush.msra.mxu0 0.0
        %1393 = vmatpush.msra.mxu0 0.0
        %1394 = vmatpush.msra.mxu0 0.0
        %1395 = vmatpush.msra.mxu0 0.0
        %1396 = vmatpush.msra.mxu0 0.0
        %1397 = vmatpush.msra.mxu0 0.0
        %1398 = vmatpush.msra.mxu0 0.0
        %1399 = vmatpush.msra.mxu0 0.0
        %1400 = vmatpush.msra.mxu0 0.0
        %1401 = vmatpush.msra.mxu0 0.0
        %1402 = vmatpush.msra.mxu0 %v1376
        %1403 = vmatpush.msra.mxu0 %v1374
        %1404 = vmatpush.msra.mxu0 %v1372
        %1405 = vmatmul.f32.gmra.mxu0 %v1381
        %v1406 = vpop.f32.mrf.mxu0
        %v1407 = vadd.f32 0.0, %v1406
        %1408 = vmatmul.f32.gmra.mxu0 %v1384
        %v1409 = vpop.f32.mrf.mxu0
        %v1410 = vadd.f32 0.0, %v1409
        %1411 = vmatmul.f32.gmra.mxu0 %v1387
        %v1412 = vpop.f32.mrf.mxu0
        %v1413 = vadd.f32 0.0, %v1412
        %1414 = vdwg.mxu0
        %1415 = vrot.lane.b32.xlu0 %v824, 112
        %v1416 = vpop.permute.xlu0 %1415
        %1417 = vrot.lane.b32.xlu0 %v826, 112
        %v1418 = vpop.permute.xlu0 %1417
        %1419 = vrot.lane.b32.xlu0 %v828, 112
        %v1420 = vpop.permute.xlu0 %1419
        %v1425 = vsel %vm1006, %v1280, 0
        %v1428 = vsel %vm1006, %v1281, 0
        %v1431 = vsel %vm1006, %v1282, 0
        %1433 = vmatpush.msra.mxu0 0.0
        %1434 = vmatpush.msra.mxu0 0.0
        %1435 = vmatpush.msra.mxu0 0.0
        %1436 = vmatpush.msra.mxu0 0.0
        %1437 = vmatpush.msra.mxu0 0.0
        %1438 = vmatpush.msra.mxu0 0.0
        %1439 = vmatpush.msra.mxu0 0.0
        %1440 = vmatpush.msra.mxu0 0.0
        %1441 = vmatpush.msra.mxu0 0.0
        %1442 = vmatpush.msra.mxu0 0.0
        %1443 = vmatpush.msra.mxu0 0.0
        %1444 = vmatpush.msra.mxu0 0.0
        %1445 = vmatpush.msra.mxu0 0.0
        %1446 = vmatpush.msra.mxu0 %v1420
        %1447 = vmatpush.msra.mxu0 %v1418
        %1448 = vmatpush.msra.mxu0 %v1416
        %1449 = vmatmul.f32.gmra.mxu0 %v1425
        %v1450 = vpop.f32.mrf.mxu0
        %v1451 = vadd.f32 0.0, %v1450
        %1452 = vmatmul.f32.gmra.mxu0 %v1428
        %v1453 = vpop.f32.mrf.mxu0
        %v1454 = vadd.f32 0.0, %v1453
        %1455 = vmatmul.f32.gmra.mxu0 %v1431
        %v1456 = vpop.f32.mrf.mxu0
        %v1457 = vadd.f32 0.0, %v1456
        %1458 = vdwg.mxu0
        %1462 = vrot.lane.b32.xlu0 %v1363, 8
        %v1463 = vpop.permute.xlu0 %1462
        %1464 = vrot.lane.b32.xlu0 %v1366, 8
        %v1465 = vpop.permute.xlu0 %1464
        %1466 = vrot.lane.b32.xlu0 %v1369, 8
        %v1467 = vpop.permute.xlu0 %1466
        %1474 = vrot.lane.b32.xlu0 %v1407, 16
        %v1475 = vpop.permute.xlu0 %1474
        %1476 = vrot.lane.b32.xlu0 %v1410, 16
        %v1477 = vpop.permute.xlu0 %1476
        %1478 = vrot.lane.b32.xlu0 %v1413, 16
        %v1479 = vpop.permute.xlu0 %1478
        %1486 = vrot.lane.b32.xlu0 %v1451, 24
        %v1487 = vpop.permute.xlu0 %1486
        %1488 = vrot.lane.b32.xlu0 %v1454, 24
        %v1489 = vpop.permute.xlu0 %1488
        %1490 = vrot.lane.b32.xlu0 %v1457, 24
        %v1491 = vpop.permute.xlu0 %1490
        %v1495 = vsel %vm835, %v1319, %v1463
        %v1496 = vsel %vm835, %v1322, %v1465
        %v1497 = vsel %vm835, %v1325, %v1467
        %vm1498 = vcmask 130048
        %v1499 = vsel %vm1498, %v1495, %v1475
        %v1500 = vsel %vm1498, %v1496, %v1477
        %v1501 = vsel %vm1498, %v1497, %v1479
        %v1502 = vsel %vm1006, %v1499, %v1487
        %v1503 = vsel %vm1006, %v1500, %v1489
        %v1504 = vsel %vm1006, %v1501, %v1491
        %v1505 = vld [vmem:[%s4] sm:$0xff]
        %v1506 = vld [vmem:[%s4 + $0x8] sm:$0xff]
        %v1507 = vld [vmem:[%s4 + $0x10] sm:$0xff]
        %v1508 = vld [vmem:[%s4 + $0x18] sm:$0xff]
        %v1509 = vld [vmem:[%s5] sm:$0x1]
        %v1511 = vperm.slane %v1509, 0
        %v1514 = vsel %vm772, %v1502, 0
        %v1517 = vsel %vm772, %v1503, 0
        %v1520 = vsel %vm772, %v1504, 0
        %1522 = vmatpush.msra.mxu0 0.0
        %1523 = vmatpush.msra.mxu0 0.0
        %1524 = vmatpush.msra.mxu0 0.0
        %1525 = vmatpush.msra.mxu0 0.0
        %1526 = vmatpush.msra.mxu0 0.0
        %1527 = vmatpush.msra.mxu0 0.0
        %1528 = vmatpush.msra.mxu0 0.0
        %1529 = vmatpush.msra.mxu0 0.0
        %1530 = vmatpush.msra.mxu0 0.0
        %1531 = vmatpush.msra.mxu0 0.0
        %1532 = vmatpush.msra.mxu0 0.0
        %1533 = vmatpush.msra.mxu0 0.0
        %1534 = vmatpush.msra.mxu0 %v1508
        %1535 = vmatpush.msra.mxu0 %v1507
        %1536 = vmatpush.msra.mxu0 %v1506
        %1537 = vmatpush.msra.mxu0 %v1505
        %1538 = vmatmul.f32.gmra.mxu0 %v1514
        %v1539 = vpop.f32.mrf.mxu0
        %v1540 = vadd.f32 %v1511, %v1539
        %1541 = vmatmul.f32.gmra.mxu0 %v1517
        %v1542 = vpop.f32.mrf.mxu0
        %v1543 = vadd.f32 %v1511, %v1542
        %1544 = vmatmul.f32.gmra.mxu0 %v1520
        %v1545 = vpop.f32.mrf.mxu0
        %v1546 = vadd.f32 %v1511, %v1545
        %1547 = vdwg.mxu0
        %v1548 = vadd.f32 %v761, %v1540
        %v1549 = vadd.f32 %v762, %v1543
        %v1550 = vadd.f32 %v763, %v1546
        %v1551 = vld [vmem:[%s6] sm:$0x1]
        %v1552 = vld [vmem:[%s7] sm:$0x1]
        %v1553 = vsel %vm772, %v1548, 0.0
        %1554 = vadd.xlane.f32.xlu0 %v1553
        %v1555 = vpop.xlane.xlu0 %1554
        %v1556 = vsel %vm772, %v1549, 0.0
        %1557 = vadd.xlane.f32.xlu0 %v1556
        %v1558 = vpop.xlane.xlu0 %1557
        %v1559 = vsel %vm772, %v1550, 0.0
        %1560 = vadd.xlane.f32.xlu0 %v1559
        %v1561 = vpop.xlane.xlu0 %1560
        %v1562 = vrcp.pop 32.0
        %v1563 = vmul.f32 32.0, %v1562
        %v1564 = vsub.f32 1.0, %v1563
        %v1565 = vmul.f32 %v1562, %v1564
        %v1566 = vadd.f32 %v1562, %v1565
        %vm1567 = vweird.f32 %v1562
        %v1568 = vsel %vm1567, %v1562, %v1566
        %v1569 = vmul.f32 %v1555, %v1568
        %v1570 = vmul.f32 %v1558, %v1568
        %v1571 = vmul.f32 %v1561, %v1568
        %v1572 = vsub.f32 %v1548, %v1569
        %v1573 = vsub.f32 %v1549, %v1570
        %v1574 = vsub.f32 %v1550, %v1571
        %v1575 = vmul.f32 %v1572, %v1572
        %v1576 = vmul.f32 %v1573, %v1573
        %v1577 = vmul.f32 %v1574, %v1574
        %v1578 = vsel %vm772, %v1575, 0.0
        %1579 = vadd.xlane.f32.xlu0 %v1578
        %v1580 = vpop.xlane.xlu0 %1579
        %v1581 = vsel %vm772, %v1576, 0.0
        %1582 = vadd.xlane.f32.xlu0 %v1581
        %v1583 = vpop.xlane.xlu0 %1582
        %v1584 = vsel %vm772, %v1577, 0.0
        %1585 = vadd.xlane.f32.xlu0 %v1584
        %v1586 = vpop.xlane.xlu0 %1585
        %v1587 = vmul.f32 %v1580, %v1568
        %v1588 = vmul.f32 %v1583, %v1568
        %v1589 = vmul.f32 %v1586, %v1568
        %v1590 = vadd.f32 %v1587, 1e-05
        %v1591 = vadd.f32 %v1588, 1e-05
        %v1592 = vadd.f32 %v1589, 1e-05
        %v1593 = vrsqrt.pop %v1590
        %v1594 = vmul.f32 %v1593, %v1590
        %v1595 = vmul.f32 %v1594, %v1593
        %v1596 = vmul.f32 0.5, %v1595
        %v1597 = vsub.f32 1.5, %v1596
        %v1598 = vmul.f32 %v1593, %v1597
        %vm1599 = vweird.f32 %v1590
        %vm1600 = vweird.f32 %v1593
        %vm1601 = vmor %vm1599, %vm1600
        %v1602 = vsel %vm1601, %v1593, %v1598
        %v1603 = vrsqrt.pop %v1591
        %v1604 = vmul.f32 %v1603, %v1591
        %v1605 = vmul.f32 %v1604, %v1603
        %v1606 = vmul.f32 0.5, %v1605
        %v1607 = vsub.f32 1.5, %v1606
        %v1608 = vmul.f32 %v1603, %v1607
        %vm1609 = vweird.f32 %v1591
        %vm1610 = vweird.f32 %v1603
        %vm1611 = vmor %vm1609, %vm1610
        %v1612 = vsel %vm1611, %v1603, %v1608
        %v1613 = vrsqrt.pop %v1592
        %v1614 = vmul.f32 %v1613, %v1592
        %v1615 = vmul.f32 %v1614, %v1613
        %v1616 = vmul.f32 0.5, %v1615
        %v1617 = vsub.f32 1.5, %v1616
        %v1618 = vmul.f32 %v1613, %v1617
        %vm1619 = vweird.f32 %v1592
        %vm1620 = vweird.f32 %v1613
        %vm1621 = vmor %vm1619, %vm1620
        %v1622 = vsel %vm1621, %v1613, %v1618
        %v1623 = vmul.f32 %v1572, %v1602
        %v1624 = vmul.f32 %v1573, %v1612
        %v1625 = vmul.f32 %v1574, %v1622
        %v1627 = vperm.slane %v1551, 0
        %v1629 = vmul.f32 %v1623, %v1627
        %v1630 = vmul.f32 %v1624, %v1627
        %v1631 = vmul.f32 %v1625, %v1627
        %v1633 = vperm.slane %v1552, 0
        %v1635 = vadd.f32 %v1629, %v1633
        %v1636 = vadd.f32 %v1630, %v1633
        %v1637 = vadd.f32 %v1631, %v1633
        %v1638 = vld [vmem:[%s8] sm:$0xff]
        %v1639 = vld [vmem:[%s8 + $0x8] sm:$0xff]
        %v1640 = vld [vmem:[%s8 + $0x10] sm:$0xff]
        %v1641 = vld [vmem:[%s8 + $0x18] sm:$0xff]
        %v1642 = vld [vmem:[%s9] sm:$0x1]
        %v1644 = vperm.slane %v1642, 0
        %v1647 = vsel %vm772, %v1635, 0
        %v1650 = vsel %vm772, %v1636, 0
        %v1653 = vsel %vm772, %v1637, 0
        %1655 = vmatpush.msra.mxu0 0.0
        %1656 = vmatpush.msra.mxu0 0.0
        %1657 = vmatpush.msra.mxu0 0.0
        %1658 = vmatpush.msra.mxu0 0.0
        %1659 = vmatpush.msra.mxu0 0.0
        %1660 = vmatpush.msra.mxu0 0.0
        %1661 = vmatpush.msra.mxu0 0.0
        %1662 = vmatpush.msra.mxu0 0.0
        %1663 = vmatpush.msra.mxu0 0.0
        %1664 = vmatpush.msra.mxu0 0.0
        %1665 = vmatpush.msra.mxu0 0.0
        %1666 = vmatpush.msra.mxu0 0.0
        %1667 = vmatpush.msra.mxu0 %v1641
        %1668 = vmatpush.msra.mxu0 %v1640
        %1669 = vmatpush.msra.mxu0 %v1639
        %1670 = vmatpush.msra.mxu0 %v1638
        %1671 = vmatmul.f32.gmra.mxu0 %v1647
        %v1672 = vpop.f32.mrf.mxu0
        %v1673 = vadd.f32 %v1644, %v1672
        %1674 = vmatmul.f32.gmra.mxu0 %v1650
        %v1675 = vpop.f32.mrf.mxu0
        %v1676 = vadd.f32 %v1644, %v1675
        %1677 = vmatmul.f32.gmra.mxu0 %v1653
        %v1678 = vpop.f32.mrf.mxu0
        %v1679 = vadd.f32 %v1644, %v1678
        %1680 = vdwg.mxu0
        %v1681 = vmax.f32 %v1673, 0.0
        %v1682 = vmax.f32 %v1676, 0.0
        %v1683 = vmax.f32 %v1679, 0.0
        %1687 = vrot.lane.b32.xlu0 %v1681, 64
        %v1688 = vpop.permute.xlu0 %1687
        %1689 = vrot.lane.b32.xlu0 %v1682, 64
        %v1690 = vpop.permute.xlu0 %1689
        %1691 = vrot.lane.b32.xlu0 %v1683, 64
        %v1692 = vpop.permute.xlu0 %1691
        %v1696 = vmul.f32 %v1673, %v1688
        %v1697 = vmul.f32 %v1676, %v1690
        %v1698 = vmul.f32 %v1679, %v1692
        %v1699 = vld [vmem:[%s10] sm:$0xff]
        %v1700 = vld [vmem:[%s10 + $0x8] sm:$0xff]
        %v1701 = vld [vmem:[%s10 + $0x10] sm:$0xff]
        %v1702 = vld [vmem:[%s10 + $0x18] sm:$0xff]
        %v1703 = vld [vmem:[%s10 + $0x20] sm:$0xff]
        %v1704 = vld [vmem:[%s10 + $0x28] sm:$0xff]
        %v1705 = vld [vmem:[%s10 + $0x30] sm:$0xff]
        %v1706 = vld [vmem:[%s10 + $0x38] sm:$0xff]
        %v1707 = vld [vmem:[%s11] sm:$0x1]
        %v1709 = vperm.slane %v1707, 0
        %vm1711 = vcmask 523264
        %v1713 = vsel %vm1711, %v1696, 0
        %v1716 = vsel %vm1711, %v1697, 0
        %v1719 = vsel %vm1711, %v1698, 0
        %1721 = vmatpush.msra.mxu0 0.0
        %1722 = vmatpush.msra.mxu0 0.0
        %1723 = vmatpush.msra.mxu0 0.0
        %1724 = vmatpush.msra.mxu0 0.0
        %1725 = vmatpush.msra.mxu0 0.0
        %1726 = vmatpush.msra.mxu0 0.0
        %1727 = vmatpush.msra.mxu0 0.0
        %1728 = vmatpush.msra.mxu0 0.0
        %1729 = vmatpush.msra.mxu0 %v1706
        %1730 = vmatpush.msra.mxu0 %v1705
        %1731 = vmatpush.msra.mxu0 %v1704
        %1732 = vmatpush.msra.mxu0 %v1703
        %1733 = vmatpush.msra.mxu0 %v1702
        %1734 = vmatpush.msra.mxu0 %v1701
        %1735 = vmatpush.msra.mxu0 %v1700
        %1736 = vmatpush.msra.mxu0 %v1699
        %1737 = vmatmul.f32.gmra.mxu0 %v1713
        %v1738 = vpop.f32.mrf.mxu0
        %v1739 = vadd.f32 %v1709, %v1738
        %1740 = vmatmul.f32.gmra.mxu0 %v1716
        %v1741 = vpop.f32.mrf.mxu0
        %v1742 = vadd.f32 %v1709, %v1741
        %1743 = vmatmul.f32.gmra.mxu0 %v1719
        %v1744 = vpop.f32.mrf.mxu0
        %v1745 = vadd.f32 %v1709, %v1744
        %1746 = vdwg.mxu0
        %v1747 = vadd.f32 %v1548, %v1739
        %v1748 = vadd.f32 %v1549, %v1742
        %v1749 = vadd.f32 %v1550, %v1745
        %v1750 = vld [vmem:[%s12] sm:$0x1]
        %v1751 = vld [vmem:[%s13] sm:$0x1]
        %v1752 = vsel %vm772, %v1747, 0.0
        %1753 = vadd.xlane.f32.xlu0 %v1752
        %v1754 = vpop.xlane.xlu0 %1753
        %v1755 = vsel %vm772, %v1748, 0.0
        %1756 = vadd.xlane.f32.xlu0 %v1755
        %v1757 = vpop.xlane.xlu0 %1756
        %v1758 = vsel %vm772, %v1749, 0.0
        %1759 = vadd.xlane.f32.xlu0 %v1758
        %v1760 = vpop.xlane.xlu0 %1759
        %v1761 = vmul.f32 %v1754, %v1568
        %v1762 = vmul.f32 %v1757, %v1568
        %v1763 = vmul.f32 %v1760, %v1568
        %v1764 = vsub.f32 %v1747, %v1761
        %v1765 = vsub.f32 %v1748, %v1762
        %v1766 = vsub.f32 %v1749, %v1763
        %v1767 = vmul.f32 %v1764, %v1764
        %v1768 = vmul.f32 %v1765, %v1765
        %v1769 = vmul.f32 %v1766, %v1766
        %v1770 = vsel %vm772, %v1767, 0.0
        %1771 = vadd.xlane.f32.xlu0 %v1770
        %v1772 = vpop.xlane.xlu0 %1771
        %v1773 = vsel %vm772, %v1768, 0.0
        %1774 = vadd.xlane.f32.xlu0 %v1773
        %v1775 = vpop.xlane.xlu0 %1774
        %v1776 = vsel %vm772, %v1769, 0.0
        %1777 = vadd.xlane.f32.xlu0 %v1776
        %v1778 = vpop.xlane.xlu0 %1777
        %v1779 = vmul.f32 %v1772, %v1568
        %v1780 = vmul.f32 %v1775, %v1568
        %v1781 = vmul.f32 %v1778, %v1568
        %v1782 = vadd.f32 %v1779, 1e-05
        %v1783 = vadd.f32 %v1780, 1e-05
        %v1784 = vadd.f32 %v1781, 1e-05
        %v1785 = vrsqrt.pop %v1782
        %v1786 = vmul.f32 %v1785, %v1782
        %v1787 = vmul.f32 %v1786, %v1785
        %v1788 = vmul.f32 0.5, %v1787
        %v1789 = vsub.f32 1.5, %v1788
        %v1790 = vmul.f32 %v1785, %v1789
        %vm1791 = vweird.f32 %v1782
        %vm1792 = vweird.f32 %v1785
        %vm1793 = vmor %vm1791, %vm1792
        %v1794 = vsel %vm1793, %v1785, %v1790
        %v1795 = vrsqrt.pop %v1783
        %v1796 = vmul.f32 %v1795, %v1783
        %v1797 = vmul.f32 %v1796, %v1795
        %v1798 = vmul.f32 0.5, %v1797
        %v1799 = vsub.f32 1.5, %v1798
        %v1800 = vmul.f32 %v1795, %v1799
        %vm1801 = vweird.f32 %v1783
        %vm1802 = vweird.f32 %v1795
        %vm1803 = vmor %vm1801, %vm1802
        %v1804 = vsel %vm1803, %v1795, %v1800
        %v1805 = vrsqrt.pop %v1784
        %v1806 = vmul.f32 %v1805, %v1784
        %v1807 = vmul.f32 %v1806, %v1805
        %v1808 = vmul.f32 0.5, %v1807
        %v1809 = vsub.f32 1.5, %v1808
        %v1810 = vmul.f32 %v1805, %v1809
        %vm1811 = vweird.f32 %v1784
        %vm1812 = vweird.f32 %v1805
        %vm1813 = vmor %vm1811, %vm1812
        %v1814 = vsel %vm1813, %v1805, %v1810
        %v1815 = vmul.f32 %v1764, %v1794
        %v1816 = vmul.f32 %v1765, %v1804
        %v1817 = vmul.f32 %v1766, %v1814
        %v1819 = vperm.slane %v1750, 0
        %v1821 = vmul.f32 %v1815, %v1819
        %v1822 = vmul.f32 %v1816, %v1819
        %v1823 = vmul.f32 %v1817, %v1819
        %v1825 = vperm.slane %v1751, 0
        %v1827 = vadd.f32 %v1821, %v1825
        %v1828 = vadd.f32 %v1822, %v1825
        %v1829 = vadd.f32 %v1823, %v1825
        %v1830 = vld [vmem:[%s14] sm:$0xff]
        %v1831 = vld [vmem:[%s14 + $0x8] sm:$0xff]
        %v1832 = vld [vmem:[%s14 + $0x10] sm:$0xff]
        %v1833 = vld [vmem:[%s14 + $0x18] sm:$0xff]
        %v1834 = vld [vmem:[%s15] sm:$0x1]
        %v1836 = vperm.slane %v1834, 0
        %v1839 = vsel %vm772, %v1827, 0
        %v1842 = vsel %vm772, %v1828, 0
        %v1845 = vsel %vm772, %v1829, 0
        %1847 = vmatpush.msra.mxu0 0.0
        %1848 = vmatpush.msra.mxu0 0.0
        %1849 = vmatpush.msra.mxu0 0.0
        %1850 = vmatpush.msra.mxu0 0.0
        %1851 = vmatpush.msra.mxu0 0.0
        %1852 = vmatpush.msra.mxu0 0.0
        %1853 = vmatpush.msra.mxu0 0.0
        %1854 = vmatpush.msra.mxu0 0.0
        %1855 = vmatpush.msra.mxu0 0.0
        %1856 = vmatpush.msra.mxu0 0.0
        %1857 = vmatpush.msra.mxu0 0.0
        %1858 = vmatpush.msra.mxu0 0.0
        %1859 = vmatpush.msra.mxu0 %v1833
        %1860 = vmatpush.msra.mxu0 %v1832
        %1861 = vmatpush.msra.mxu0 %v1831
        %1862 = vmatpush.msra.mxu0 %v1830
        %1863 = vmatmul.f32.gmra.mxu0 %v1839
        %v1864 = vpop.f32.mrf.mxu0
        %v1865 = vadd.f32 %v1836, %v1864
        %1866 = vmatmul.f32.gmra.mxu0 %v1842
        %v1867 = vpop.f32.mrf.mxu0
        %v1868 = vadd.f32 %v1836, %v1867
        %1869 = vmatmul.f32.gmra.mxu0 %v1845
        %v1870 = vpop.f32.mrf.mxu0
        %v1871 = vadd.f32 %v1836, %v1870
        %1872 = vdwg.mxu0
        %1876 = vrot.lane.b32.xlu0 %v1865, 104
        %v1877 = vpop.permute.xlu0 %1876
        %1878 = vrot.lane.b32.xlu0 %v1868, 104
        %v1879 = vpop.permute.xlu0 %1878
        %1880 = vrot.lane.b32.xlu0 %v1871, 104
        %v1881 = vpop.permute.xlu0 %1880
        %1882 = vrot.lane.b32.xlu0 %v1865, 80
        %v1883 = vpop.permute.xlu0 %1882
        %1884 = vrot.lane.b32.xlu0 %v1868, 80
        %v1885 = vpop.permute.xlu0 %1884
        %1886 = vrot.lane.b32.xlu0 %v1871, 80
        %v1887 = vpop.permute.xlu0 %1886
        %1888 = vrot.lane.b32.xlu0 %v1865, 56
        %v1889 = vpop.permute.xlu0 %1888
        %1890 = vrot.lane.b32.xlu0 %v1868, 56
        %v1891 = vpop.permute.xlu0 %1890
        %1892 = vrot.lane.b32.xlu0 %v1871, 56
        %v1893 = vpop.permute.xlu0 %1892
        %1894 = vrot.lane.b32.xlu0 %v1865, 120
        %v1895 = vpop.permute.xlu0 %1894
        %1896 = vrot.lane.b32.xlu0 %v1868, 120
        %v1897 = vpop.permute.xlu0 %1896
        %1898 = vrot.lane.b32.xlu0 %v1871, 120
        %v1899 = vpop.permute.xlu0 %1898
        %v1900 = vsel %vm835, %v1865, 0
        %v1902 = vsel %vm835, %v1868, 0
        %v1904 = vsel %vm835, %v1871, 0
        %v1906 = vsel %vm835, %v1895, 0
        %v1908 = vsel %vm835, %v1897, 0
        %v1910 = vsel %vm835, %v1899, 0
        %1912 = vmatpush.xpose.msra.mxu0 0.0
        %1913 = vmatpush.xpose.msra.mxu0 0.0
        %1914 = vmatpush.xpose.msra.mxu0 0.0
        %1915 = vmatpush.xpose.msra.mxu0 0.0
        %1916 = vmatpush.xpose.msra.mxu0 0.0
        %1917 = vmatpush.xpose.msra.mxu0 0.0
        %1918 = vmatpush.xpose.msra.mxu0 0.0
        %1919 = vmatpush.xpose.msra.mxu0 0.0
        %1920 = vmatpush.xpose.msra.mxu0 0.0
        %1921 = vmatpush.xpose.msra.mxu0 0.0
        %1922 = vmatpush.xpose.msra.mxu0 0.0
        %1923 = vmatpush.xpose.msra.mxu0 0.0
        %1924 = vmatpush.xpose.msra.mxu0 0.0
        %1925 = vmatpush.xpose.msra.mxu0 %v1910
        %1926 = vmatpush.xpose.msra.mxu0 %v1908
        %1927 = vmatpush.xpose.msra.mxu0 %v1906
        %1928 = vmatmul.f32.gmra.mxu0 %v1900
        %v1929 = vpop.f32.mrf.mxu0
        %v1930 = vadd.f32 %v758, %v1929
        %1931 = vmatmul.f32.gmra.mxu0 %v1902
        %v1932 = vpop.f32.mrf.mxu0
        %v1933 = vadd.f32 %v759, %v1932
        %1934 = vmatmul.f32.gmra.mxu0 %v1904
        %v1935 = vpop.f32.mrf.mxu0
        %v1936 = vadd.f32 %v760, %v1935
        %1937 = vdwg.mxu0
        %1938 = vrot.lane.b32.xlu0 %v1877, 120
        %v1939 = vpop.permute.xlu0 %1938
        %1940 = vrot.lane.b32.xlu0 %v1879, 120
        %v1941 = vpop.permute.xlu0 %1940
        %1942 = vrot.lane.b32.xlu0 %v1881, 120
        %v1943 = vpop.permute.xlu0 %1942
        %v1944 = vsel %vm835, %v1877, 0
        %v1946 = vsel %vm835, %v1879, 0
        %v1948 = vsel %vm835, %v1881, 0
        %v1950 = vsel %vm835, %v1939, 0
        %v1952 = vsel %vm835, %v1941, 0
        %v1954 = vsel %vm835, %v1943, 0
        %1956 = vmatpush.xpose.msra.mxu0 0.0
        %1957 = vmatpush.xpose.msra.mxu0 0.0
        %1958 = vmatpush.xpose.msra.mxu0 0.0
        %1959 = vmatpush.xpose.msra.mxu0 0.0
        %1960 = vmatpush.xpose.msra.mxu0 0.0
        %1961 = vmatpush.xpose.msra.mxu0 0.0
        %1962 = vmatpush.xpose.msra.mxu0 0.0
        %1963 = vmatpush.xpose.msra.mxu0 0.0
        %1964 = vmatpush.xpose.msra.mxu0 0.0
        %1965 = vmatpush.xpose.msra.mxu0 0.0
        %1966 = vmatpush.xpose.msra.mxu0 0.0
        %1967 = vmatpush.xpose.msra.mxu0 0.0
        %1968 = vmatpush.xpose.msra.mxu0 0.0
        %1969 = vmatpush.xpose.msra.mxu0 %v1954
        %1970 = vmatpush.xpose.msra.mxu0 %v1952
        %1971 = vmatpush.xpose.msra.mxu0 %v1950
        %1972 = vmatmul.f32.gmra.mxu0 %v1944
        %v1973 = vpop.f32.mrf.mxu0
        %v1974 = vadd.f32 %v758, %v1973
        %1975 = vmatmul.f32.gmra.mxu0 %v1946
        %v1976 = vpop.f32.mrf.mxu0
        %v1977 = vadd.f32 %v759, %v1976
        %1978 = vmatmul.f32.gmra.mxu0 %v1948
        %v1979 = vpop.f32.mrf.mxu0
        %v1980 = vadd.f32 %v760, %v1979
        %1981 = vdwg.mxu0
        %1982 = vrot.lane.b32.xlu0 %v1883, 120
        %v1983 = vpop.permute.xlu0 %1982
        %1984 = vrot.lane.b32.xlu0 %v1885, 120
        %v1985 = vpop.permute.xlu0 %1984
        %1986 = vrot.lane.b32.xlu0 %v1887, 120
        %v1987 = vpop.permute.xlu0 %1986
        %v1988 = vsel %vm835, %v1883, 0
        %v1990 = vsel %vm835, %v1885, 0
        %v1992 = vsel %vm835, %v1887, 0
        %v1994 = vsel %vm835, %v1983, 0
        %v1996 = vsel %vm835, %v1985, 0
        %v1998 = vsel %vm835, %v1987, 0
        %2000 = vmatpush.xpose.msra.mxu0 0.0
        %2001 = vmatpush.xpose.msra.mxu0 0.0
        %2002 = vmatpush.xpose.msra.mxu0 0.0
        %2003 = vmatpush.xpose.msra.mxu0 0.0
        %2004 = vmatpush.xpose.msra.mxu0 0.0
        %2005 = vmatpush.xpose.msra.mxu0 0.0
        %2006 = vmatpush.xpose.msra.mxu0 0.0
        %2007 = vmatpush.xpose.msra.mxu0 0.0
        %2008 = vmatpush.xpose.msra.mxu0 0.0
        %2009 = vmatpush.xpose.msra.mxu0 0.0
        %2010 = vmatpush.xpose.msra.mxu0 0.0
        %2011 = vmatpush.xpose.msra.mxu0 0.0
        %2012 = vmatpush.xpose.msra.mxu0 0.0
        %2013 = vmatpush.xpose.msra.mxu0 %v1998
        %2014 = vmatpush.xpose.msra.mxu0 %v1996
        %2015 = vmatpush.xpose.msra.mxu0 %v1994
        %2016 = vmatmul.f32.gmra.mxu0 %v1988
        %v2017 = vpop.f32.mrf.mxu0
        %v2018 = vadd.f32 %v758, %v2017
        %2019 = vmatmul.f32.gmra.mxu0 %v1990
        %v2020 = vpop.f32.mrf.mxu0
        %v2021 = vadd.f32 %v759, %v2020
        %2022 = vmatmul.f32.gmra.mxu0 %v1992
        %v2023 = vpop.f32.mrf.mxu0
        %v2024 = vadd.f32 %v760, %v2023
        %2025 = vdwg.mxu0
        %2026 = vrot.lane.b32.xlu0 %v1889, 120
        %v2027 = vpop.permute.xlu0 %2026
        %2028 = vrot.lane.b32.xlu0 %v1891, 120
        %v2029 = vpop.permute.xlu0 %2028
        %2030 = vrot.lane.b32.xlu0 %v1893, 120
        %v2031 = vpop.permute.xlu0 %2030
        %v2032 = vsel %vm835, %v1889, 0
        %v2034 = vsel %vm835, %v1891, 0
        %v2036 = vsel %vm835, %v1893, 0
        %v2038 = vsel %vm835, %v2027, 0
        %v2040 = vsel %vm835, %v2029, 0
        %v2042 = vsel %vm835, %v2031, 0
        %2044 = vmatpush.xpose.msra.mxu0 0.0
        %2045 = vmatpush.xpose.msra.mxu0 0.0
        %2046 = vmatpush.xpose.msra.mxu0 0.0
        %2047 = vmatpush.xpose.msra.mxu0 0.0
        %2048 = vmatpush.xpose.msra.mxu0 0.0
        %2049 = vmatpush.xpose.msra.mxu0 0.0
        %2050 = vmatpush.xpose.msra.mxu0 0.0
        %2051 = vmatpush.xpose.msra.mxu0 0.0
        %2052 = vmatpush.xpose.msra.mxu0 0.0
        %2053 = vmatpush.xpose.msra.mxu0 0.0
        %2054 = vmatpush.xpose.msra.mxu0 0.0
        %2055 = vmatpush.xpose.msra.mxu0 0.0
        %2056 = vmatpush.xpose.msra.mxu0 0.0
        %2057 = vmatpush.xpose.msra.mxu0 %v2042
        %2058 = vmatpush.xpose.msra.mxu0 %v2040
        %2059 = vmatpush.xpose.msra.mxu0 %v2038
        %2060 = vmatmul.f32.gmra.mxu0 %v2032
        %v2061 = vpop.f32.mrf.mxu0
        %v2062 = vadd.f32 %v758, %v2061
        %2063 = vmatmul.f32.gmra.mxu0 %v2034
        %v2064 = vpop.f32.mrf.mxu0
        %v2065 = vadd.f32 %v759, %v2064
        %2066 = vmatmul.f32.gmra.mxu0 %v2036
        %v2067 = vpop.f32.mrf.mxu0
        %v2068 = vadd.f32 %v760, %v2067
        %2069 = vdwg.mxu0
        %v2070 = vsel %vm1006, %v1930, -inf
        %2071 = vmax.xlane.f32.xlu0 %v2070
        %v2072 = vpop.xlane.xlu0 %2071
        %v2073 = vsel %vm1006, %v1933, -inf
        %2074 = vmax.xlane.f32.xlu0 %v2073
        %v2075 = vpop.xlane.xlu0 %2074
        %v2076 = vsel %vm1006, %v1936, -inf
        %2077 = vmax.xlane.f32.xlu0 %v2076
        %v2078 = vpop.xlane.xlu0 %2077
        %v2079 = vsel %vm1006, %v1974, -inf
        %2080 = vmax.xlane.f32.xlu0 %v2079
        %v2081 = vpop.xlane.xlu0 %2080
        %v2082 = vsel %vm1006, %v1977, -inf
        %2083 = vmax.xlane.f32.xlu0 %v2082
        %v2084 = vpop.xlane.xlu0 %2083
        %v2085 = vsel %vm1006, %v1980, -inf
        %2086 = vmax.xlane.f32.xlu0 %v2085
        %v2087 = vpop.xlane.xlu0 %2086
        %v2088 = vsel %vm1006, %v2018, -inf
        %2089 = vmax.xlane.f32.xlu0 %v2088
        %v2090 = vpop.xlane.xlu0 %2089
        %v2091 = vsel %vm1006, %v2021, -inf
        %2092 = vmax.xlane.f32.xlu0 %v2091
        %v2093 = vpop.xlane.xlu0 %2092
        %v2094 = vsel %vm1006, %v2024, -inf
        %2095 = vmax.xlane.f32.xlu0 %v2094
        %v2096 = vpop.xlane.xlu0 %2095
        %v2097 = vsel %vm1006, %v2062, -inf
        %2098 = vmax.xlane.f32.xlu0 %v2097
        %v2099 = vpop.xlane.xlu0 %2098
        %v2100 = vsel %vm1006, %v2065, -inf
        %2101 = vmax.xlane.f32.xlu0 %v2100
        %v2102 = vpop.xlane.xlu0 %2101
        %v2103 = vsel %vm1006, %v2068, -inf
        %2104 = vmax.xlane.f32.xlu0 %v2103
        %v2105 = vpop.xlane.xlu0 %2104
        %v2106 = vsub.f32 %v1930, %v2072
        %v2107 = vsub.f32 %v1933, %v2075
        %v2108 = vsub.f32 %v1936, %v2078
        %v2109 = vsub.f32 %v1974, %v2081
        %v2110 = vsub.f32 %v1977, %v2084
        %v2111 = vsub.f32 %v1980, %v2087
        %v2112 = vsub.f32 %v2018, %v2090
        %v2113 = vsub.f32 %v2021, %v2093
        %v2114 = vsub.f32 %v2024, %v2096
        %v2115 = vsub.f32 %v2062, %v2099
        %v2116 = vsub.f32 %v2065, %v2102
        %v2117 = vsub.f32 %v2068, %v2105
        %v2118 = vmul.f32 %v2106, 1.442695
        %v2119 = vpow.pop %v2118
        %v2120 = vmul.f32 %v2107, 1.442695
        %v2121 = vpow.pop %v2120
        %v2122 = vmul.f32 %v2108, 1.442695
        %v2123 = vpow.pop %v2122
        %v2124 = vmul.f32 %v2109, 1.442695
        %v2125 = vpow.pop %v2124
        %v2126 = vmul.f32 %v2110, 1.442695
        %v2127 = vpow.pop %v2126
        %v2128 = vmul.f32 %v2111, 1.442695
        %v2129 = vpow.pop %v2128
        %v2130 = vmul.f32 %v2112, 1.442695
        %v2131 = vpow.pop %v2130
        %v2132 = vmul.f32 %v2113, 1.442695
        %v2133 = vpow.pop %v2132
        %v2134 = vmul.f32 %v2114, 1.442695
        %v2135 = vpow.pop %v2134
        %v2136 = vmul.f32 %v2115, 1.442695
        %v2137 = vpow.pop %v2136
        %v2138 = vmul.f32 %v2116, 1.442695
        %v2139 = vpow.pop %v2138
        %v2140 = vmul.f32 %v2117, 1.442695
        %v2141 = vpow.pop %v2140
        %v2142 = vsel %vm1006, %v2119, 0.0
        %2143 = vadd.xlane.f32.xlu0 %v2142
        %v2144 = vpop.xlane.xlu0 %2143
        %v2145 = vsel %vm1006, %v2121, 0.0
        %2146 = vadd.xlane.f32.xlu0 %v2145
        %v2147 = vpop.xlane.xlu0 %2146
        %v2148 = vsel %vm1006, %v2123, 0.0
        %2149 = vadd.xlane.f32.xlu0 %v2148
        %v2150 = vpop.xlane.xlu0 %2149
        %v2151 = vsel %vm1006, %v2125, 0.0
        %2152 = vadd.xlane.f32.xlu0 %v2151
        %v2153 = vpop.xlane.xlu0 %2152
        %v2154 = vsel %vm1006, %v2127, 0.0
        %2155 = vadd.xlane.f32.xlu0 %v2154
        %v2156 = vpop.xlane.xlu0 %2155
        %v2157 = vsel %vm1006, %v2129, 0.0
        %2158 = vadd.xlane.f32.xlu0 %v2157
        %v2159 = vpop.xlane.xlu0 %2158
        %v2160 = vsel %vm1006, %v2131, 0.0
        %2161 = vadd.xlane.f32.xlu0 %v2160
        %v2162 = vpop.xlane.xlu0 %2161
        %v2163 = vsel %vm1006, %v2133, 0.0
        %2164 = vadd.xlane.f32.xlu0 %v2163
        %v2165 = vpop.xlane.xlu0 %2164
        %v2166 = vsel %vm1006, %v2135, 0.0
        %2167 = vadd.xlane.f32.xlu0 %v2166
        %v2168 = vpop.xlane.xlu0 %2167
        %v2169 = vsel %vm1006, %v2137, 0.0
        %2170 = vadd.xlane.f32.xlu0 %v2169
        %v2171 = vpop.xlane.xlu0 %2170
        %v2172 = vsel %vm1006, %v2139, 0.0
        %2173 = vadd.xlane.f32.xlu0 %v2172
        %v2174 = vpop.xlane.xlu0 %2173
        %v2175 = vsel %vm1006, %v2141, 0.0
        %2176 = vadd.xlane.f32.xlu0 %v2175
        %v2177 = vpop.xlane.xlu0 %2176
        %v2178 = vrcp.pop %v2144
        %v2179 = vrcp.pop %v2147
        %v2180 = vrcp.pop %v2150
        %v2181 = vrcp.pop %v2153
        %v2182 = vrcp.pop %v2156
        %v2183 = vrcp.pop %v2159
        %v2184 = vrcp.pop %v2162
        %v2185 = vrcp.pop %v2165
        %v2186 = vrcp.pop %v2168
        %v2187 = vrcp.pop %v2171
        %v2188 = vrcp.pop %v2174
        %v2189 = vrcp.pop %v2177
        %v2190 = vmul.f32 %v2119, %v2178
        %v2191 = vmul.f32 %v2121, %v2179
        %v2192 = vmul.f32 %v2123, %v2180
        %v2193 = vmul.f32 %v2125, %v2181
        %v2194 = vmul.f32 %v2127, %v2182
        %v2195 = vmul.f32 %v2129, %v2183
        %v2196 = vmul.f32 %v2131, %v2184
        %v2197 = vmul.f32 %v2133, %v2185
        %v2198 = vmul.f32 %v2135, %v2186
        %v2199 = vmul.f32 %v2137, %v2187
        %v2200 = vmul.f32 %v2139, %v2188
        %v2201 = vmul.f32 %v2141, %v2189
        %v2202 = vadd.f32 %v2190, %v758
        %v2203 = vadd.f32 %v2191, %v759
        %v2204 = vadd.f32 %v2192, %v760
        %v2205 = vadd.f32 %v2193, %v758
        %v2206 = vadd.f32 %v2194, %v759
        %v2207 = vadd.f32 %v2195, %v760
        %v2208 = vadd.f32 %v2196, %v758
        %v2209 = vadd.f32 %v2197, %v759
        %v2210 = vadd.f32 %v2198, %v760
        %v2211 = vadd.f32 %v2199, %v758
        %v2212 = vadd.f32 %v2200, %v759
        %v2213 = vadd.f32 %v2201, %v760
        %v2214 = vsel %vm1006, %v2202, -inf
        %2215 = vmax.xlane.f32.xlu0 %v2214
        %v2216 = vpop.xlane.xlu0 %2215
        %v2217 = vsel %vm1006, %v2203, -inf
        %2218 = vmax.xlane.f32.xlu0 %v2217
        %v2219 = vpop.xlane.xlu0 %2218
        %v2220 = vsel %vm1006, %v2204, -inf
        %2221 = vmax.xlane.f32.xlu0 %v2220
        %v2222 = vpop.xlane.xlu0 %2221
        %v2223 = vsel %vm1006, %v2205, -inf
        %2224 = vmax.xlane.f32.xlu0 %v2223
        %v2225 = vpop.xlane.xlu0 %2224
        %v2226 = vsel %vm1006, %v2206, -inf
        %2227 = vmax.xlane.f32.xlu0 %v2226
        %v2228 = vpop.xlane.xlu0 %2227
        %v2229 = vsel %vm1006, %v2207, -inf
        %2230 = vmax.xlane.f32.xlu0 %v2229
        %v2231 = vpop.xlane.xlu0 %2230
        %v2232 = vsel %vm1006, %v2208, -inf
        %2233 = vmax.xlane.f32.xlu0 %v2232
        %v2234 = vpop.xlane.xlu0 %2233
        %v2235 = vsel %vm1006, %v2209, -inf
        %2236 = vmax.xlane.f32.xlu0 %v2235
        %v2237 = vpop.xlane.xlu0 %2236
        %v2238 = vsel %vm1006, %v2210, -inf
        %2239 = vmax.xlane.f32.xlu0 %v2238
        %v2240 = vpop.xlane.xlu0 %2239
        %v2241 = vsel %vm1006, %v2211, -inf
        %2242 = vmax.xlane.f32.xlu0 %v2241
        %v2243 = vpop.xlane.xlu0 %2242
        %v2244 = vsel %vm1006, %v2212, -inf
        %2245 = vmax.xlane.f32.xlu0 %v2244
        %v2246 = vpop.xlane.xlu0 %2245
        %v2247 = vsel %vm1006, %v2213, -inf
        %2248 = vmax.xlane.f32.xlu0 %v2247
        %v2249 = vpop.xlane.xlu0 %2248
        %v2250 = vsub.f32 %v2202, %v2216
        %v2251 = vsub.f32 %v2203, %v2219
        %v2252 = vsub.f32 %v2204, %v2222
        %v2253 = vsub.f32 %v2205, %v2225
        %v2254 = vsub.f32 %v2206, %v2228
        %v2255 = vsub.f32 %v2207, %v2231
        %v2256 = vsub.f32 %v2208, %v2234
        %v2257 = vsub.f32 %v2209, %v2237
        %v2258 = vsub.f32 %v2210, %v2240
        %v2259 = vsub.f32 %v2211, %v2243
        %v2260 = vsub.f32 %v2212, %v2246
        %v2261 = vsub.f32 %v2213, %v2249
        %v2262 = vmul.f32 %v2250, 1.442695
        %v2263 = vpow.pop %v2262
        %v2264 = vmul.f32 %v2251, 1.442695
        %v2265 = vpow.pop %v2264
        %v2266 = vmul.f32 %v2252, 1.442695
        %v2267 = vpow.pop %v2266
        %v2268 = vmul.f32 %v2253, 1.442695
        %v2269 = vpow.pop %v2268
        %v2270 = vmul.f32 %v2254, 1.442695
        %v2271 = vpow.pop %v2270
        %v2272 = vmul.f32 %v2255, 1.442695
        %v2273 = vpow.pop %v2272
        %v2274 = vmul.f32 %v2256, 1.442695
        %v2275 = vpow.pop %v2274
        %v2276 = vmul.f32 %v2257, 1.442695
        %v2277 = vpow.pop %v2276
        %v2278 = vmul.f32 %v2258, 1.442695
        %v2279 = vpow.pop %v2278
        %v2280 = vmul.f32 %v2259, 1.442695
        %v2281 = vpow.pop %v2280
        %v2282 = vmul.f32 %v2260, 1.442695
        %v2283 = vpow.pop %v2282
        %v2284 = vmul.f32 %v2261, 1.442695
        %v2285 = vpow.pop %v2284
        %v2286 = vsel %vm1006, %v2263, 0.0
        %2287 = vadd.xlane.f32.xlu0 %v2286
        %v2288 = vpop.xlane.xlu0 %2287
        %v2289 = vsel %vm1006, %v2265, 0.0
        %2290 = vadd.xlane.f32.xlu0 %v2289
        %v2291 = vpop.xlane.xlu0 %2290
        %v2292 = vsel %vm1006, %v2267, 0.0
        %2293 = vadd.xlane.f32.xlu0 %v2292
        %v2294 = vpop.xlane.xlu0 %2293
        %v2295 = vsel %vm1006, %v2269, 0.0
        %2296 = vadd.xlane.f32.xlu0 %v2295
        %v2297 = vpop.xlane.xlu0 %2296
        %v2298 = vsel %vm1006, %v2271, 0.0
        %2299 = vadd.xlane.f32.xlu0 %v2298
        %v2300 = vpop.xlane.xlu0 %2299
        %v2301 = vsel %vm1006, %v2273, 0.0
        %2302 = vadd.xlane.f32.xlu0 %v2301
        %v2303 = vpop.xlane.xlu0 %2302
        %v2304 = vsel %vm1006, %v2275, 0.0
        %2305 = vadd.xlane.f32.xlu0 %v2304
        %v2306 = vpop.xlane.xlu0 %2305
        %v2307 = vsel %vm1006, %v2277, 0.0
        %2308 = vadd.xlane.f32.xlu0 %v2307
        %v2309 = vpop.xlane.xlu0 %2308
        %v2310 = vsel %vm1006, %v2279, 0.0
        %2311 = vadd.xlane.f32.xlu0 %v2310
        %v2312 = vpop.xlane.xlu0 %2311
        %v2313 = vsel %vm1006, %v2281, 0.0
        %2314 = vadd.xlane.f32.xlu0 %v2313
        %v2315 = vpop.xlane.xlu0 %2314
        %v2316 = vsel %vm1006, %v2283, 0.0
        %2317 = vadd.xlane.f32.xlu0 %v2316
        %v2318 = vpop.xlane.xlu0 %2317
        %v2319 = vsel %vm1006, %v2285, 0.0
        %2320 = vadd.xlane.f32.xlu0 %v2319
        %v2321 = vpop.xlane.xlu0 %2320
        %v2322 = vrcp.pop %v2288
        %v2323 = vrcp.pop %v2291
        %v2324 = vrcp.pop %v2294
        %v2325 = vrcp.pop %v2297
        %v2326 = vrcp.pop %v2300
        %v2327 = vrcp.pop %v2303
        %v2328 = vrcp.pop %v2306
        %v2329 = vrcp.pop %v2309
        %v2330 = vrcp.pop %v2312
        %v2331 = vrcp.pop %v2315
        %v2332 = vrcp.pop %v2318
        %v2333 = vrcp.pop %v2321
        %v2334 = vmul.f32 %v2263, %v2322
        %v2335 = vmul.f32 %v2265, %v2323
        %v2336 = vmul.f32 %v2267, %v2324
        %v2337 = vmul.f32 %v2269, %v2325
        %v2338 = vmul.f32 %v2271, %v2326
        %v2339 = vmul.f32 %v2273, %v2327
        %v2340 = vmul.f32 %v2275, %v2328
        %v2341 = vmul.f32 %v2277, %v2329
        %v2342 = vmul.f32 %v2279, %v2330
        %v2343 = vmul.f32 %v2281, %v2331
        %v2344 = vmul.f32 %v2283, %v2332
        %v2345 = vmul.f32 %v2285, %v2333
        %2346 = vrot.lane.b32.xlu0 %v1865, 112
        %v2347 = vpop.permute.xlu0 %2346
        %2348 = vrot.lane.b32.xlu0 %v1868, 112
        %v2349 = vpop.permute.xlu0 %2348
        %2350 = vrot.lane.b32.xlu0 %v1871, 112
        %v2351 = vpop.permute.xlu0 %2350
        %v2356 = vsel %vm1006, %v2334, 0
        %v2359 = vsel %vm1006, %v2335, 0
        %v2362 = vsel %vm1006, %v2336, 0
        %2364 = vmatpush.msra.mxu0 0.0
        %2365 = vmatpush.msra.mxu0 0.0
        %2366 = vmatpush.msra.mxu0 0.0
        %2367 = vmatpush.msra.mxu0 0.0
        %2368 = vmatpush.msra.mxu0 0.0
        %2369 = vmatpush.msra.mxu0 0.0
        %2370 = vmatpush.msra.mxu0 0.0
        %2371 = vmatpush.msra.mxu0 0.0
        %2372 = vmatpush.msra.mxu0 0.0
        %2373 = vmatpush.msra.mxu0 0.0
        %2374 = vmatpush.msra.mxu0 0.0
        %2375 = vmatpush.msra.mxu0 0.0
        %2376 = vmatpush.msra.mxu0 0.0
        %2377 = vmatpush.msra.mxu0 %v2351
        %2378 = vmatpush.msra.mxu0 %v2349
        %2379 = vmatpush.msra.mxu0 %v2347
        %2380 = vmatmul.f32.gmra.mxu0 %v2356
        %v2381 = vpop.f32.mrf.mxu0
        %v2382 = vadd.f32 0.0, %v2381
        %2383 = vmatmul.f32.gmra.mxu0 %v2359
        %v2384 = vpop.f32.mrf.mxu0
        %v2385 = vadd.f32 0.0, %v2384
        %2386 = vmatmul.f32.gmra.mxu0 %v2362
        %v2387 = vpop.f32.mrf.mxu0
        %v2388 = vadd.f32 0.0, %v2387
        %2389 = vdwg.mxu0
        %2390 = vrot.lane.b32.xlu0 %v1877, 112
        %v2391 = vpop.permute.xlu0 %2390
        %2392 = vrot.lane.b32.xlu0 %v1879, 112
        %v2393 = vpop.permute.xlu0 %2392
        %2394 = vrot.lane.b32.xlu0 %v1881, 112
        %v2395 = vpop.permute.xlu0 %2394
        %v2400 = vsel %vm1006, %v2337, 0
        %v2403 = vsel %vm1006, %v2338, 0
        %v2406 = vsel %vm1006, %v2339, 0
        %2408 = vmatpush.msra.mxu0 0.0
        %2409 = vmatpush.msra.mxu0 0.0
        %2410 = vmatpush.msra.mxu0 0.0
        %2411 = vmatpush.msra.mxu0 0.0
        %2412 = vmatpush.msra.mxu0 0.0
        %2413 = vmatpush.msra.mxu0 0.0
        %2414 = vmatpush.msra.mxu0 0.0
        %2415 = vmatpush.msra.mxu0 0.0
        %2416 = vmatpush.msra.mxu0 0.0
        %2417 = vmatpush.msra.mxu0 0.0
        %2418 = vmatpush.msra.mxu0 0.0
        %2419 = vmatpush.msra.mxu0 0.0
        %2420 = vmatpush.msra.mxu0 0.0
        %2421 = vmatpush.msra.mxu0 %v2395
        %2422 = vmatpush.msra.mxu0 %v2393
        %2423 = vmatpush.msra.mxu0 %v2391
        %2424 = vmatmul.f32.gmra.mxu0 %v2400
        %v2425 = vpop.f32.mrf.mxu0
        %v2426 = vadd.f32 0.0, %v2425
        %2427 = vmatmul.f32.gmra.mxu0 %v2403
        %v2428 = vpop.f32.mrf.mxu0
        %v2429 = vadd.f32 0.0, %v2428
        %2430 = vmatmul.f32.gmra.mxu0 %v2406
        %v2431 = vpop.f32.mrf.mxu0
        %v2432 = vadd.f32 0.0, %v2431
        %2433 = vdwg.mxu0
        %2434 = vrot.lane.b32.xlu0 %v1883, 112
        %v2435 = vpop.permute.xlu0 %2434
        %2436 = vrot.lane.b32.xlu0 %v1885, 112
        %v2437 = vpop.permute.xlu0 %2436
        %2438 = vrot.lane.b32.xlu0 %v1887, 112
        %v2439 = vpop.permute.xlu0 %2438
        %v2444 = vsel %vm1006, %v2340, 0
        %v2447 = vsel %vm1006, %v2341, 0
        %v2450 = vsel %vm1006, %v2342, 0
        %2452 = vmatpush.msra.mxu0 0.0
        %2453 = vmatpush.msra.mxu0 0.0
        %2454 = vmatpush.msra.mxu0 0.0
        %2455 = vmatpush.msra.mxu0 0.0
        %2456 = vmatpush.msra.mxu0 0.0
        %2457 = vmatpush.msra.mxu0 0.0
        %2458 = vmatpush.msra.mxu0 0.0
        %2459 = vmatpush.msra.mxu0 0.0
        %2460 = vmatpush.msra.mxu0 0.0
        %2461 = vmatpush.msra.mxu0 0.0
        %2462 = vmatpush.msra.mxu0 0.0
        %2463 = vmatpush.msra.mxu0 0.0
        %2464 = vmatpush.msra.mxu0 0.0
        %2465 = vmatpush.msra.mxu0 %v2439
        %2466 = vmatpush.msra.mxu0 %v2437
        %2467 = vmatpush.msra.mxu0 %v2435
        %2468 = vmatmul.f32.gmra.mxu0 %v2444
        %v2469 = vpop.f32.mrf.mxu0
        %v2470 = vadd.f32 0.0, %v2469
        %2471 = vmatmul.f32.gmra.mxu0 %v2447
        %v2472 = vpop.f32.mrf.mxu0
        %v2473 = vadd.f32 0.0, %v2472
        %2474 = vmatmul.f32.gmra.mxu0 %v2450
        %v2475 = vpop.f32.mrf.mxu0
        %v2476 = vadd.f32 0.0, %v2475
        %2477 = vdwg.mxu0
        %2478 = vrot.lane.b32.xlu0 %v1889, 112
        %v2479 = vpop.permute.xlu0 %2478
        %2480 = vrot.lane.b32.xlu0 %v1891, 112
        %v2481 = vpop.permute.xlu0 %2480
        %2482 = vrot.lane.b32.xlu0 %v1893, 112
        %v2483 = vpop.permute.xlu0 %2482
        %v2488 = vsel %vm1006, %v2343, 0
        %v2491 = vsel %vm1006, %v2344, 0
        %v2494 = vsel %vm1006, %v2345, 0
        %2496 = vmatpush.msra.mxu0 0.0
        %2497 = vmatpush.msra.mxu0 0.0
        %2498 = vmatpush.msra.mxu0 0.0
        %2499 = vmatpush.msra.mxu0 0.0
        %2500 = vmatpush.msra.mxu0 0.0
        %2501 = vmatpush.msra.mxu0 0.0
        %2502 = vmatpush.msra.mxu0 0.0
        %2503 = vmatpush.msra.mxu0 0.0
        %2504 = vmatpush.msra.mxu0 0.0
        %2505 = vmatpush.msra.mxu0 0.0
        %2506 = vmatpush.msra.mxu0 0.0
        %2507 = vmatpush.msra.mxu0 0.0
        %2508 = vmatpush.msra.mxu0 0.0
        %2509 = vmatpush.msra.mxu0 %v2483
        %2510 = vmatpush.msra.mxu0 %v2481
        %2511 = vmatpush.msra.mxu0 %v2479
        %2512 = vmatmul.f32.gmra.mxu0 %v2488
        %v2513 = vpop.f32.mrf.mxu0
        %v2514 = vadd.f32 0.0, %v2513
        %2515 = vmatmul.f32.gmra.mxu0 %v2491
        %v2516 = vpop.f32.mrf.mxu0
        %v2517 = vadd.f32 0.0, %v2516
        %2518 = vmatmul.f32.gmra.mxu0 %v2494
        %v2519 = vpop.f32.mrf.mxu0
        %v2520 = vadd.f32 0.0, %v2519
        %2521 = vdwg.mxu0
        %2525 = vrot.lane.b32.xlu0 %v2426, 8
        %v2526 = vpop.permute.xlu0 %2525
        %2527 = vrot.lane.b32.xlu0 %v2429, 8
        %v2528 = vpop.permute.xlu0 %2527
        %2529 = vrot.lane.b32.xlu0 %v2432, 8
        %v2530 = vpop.permute.xlu0 %2529
        %2537 = vrot.lane.b32.xlu0 %v2470, 16
        %v2538 = vpop.permute.xlu0 %2537
        %2539 = vrot.lane.b32.xlu0 %v2473, 16
        %v2540 = vpop.permute.xlu0 %2539
        %2541 = vrot.lane.b32.xlu0 %v2476, 16
        %v2542 = vpop.permute.xlu0 %2541
        %2549 = vrot.lane.b32.xlu0 %v2514, 24
        %v2550 = vpop.permute.xlu0 %2549
        %2551 = vrot.lane.b32.xlu0 %v2517, 24
        %v2552 = vpop.permute.xlu0 %2551
        %2553 = vrot.lane.b32.xlu0 %v2520, 24
        %v2554 = vpop.permute.xlu0 %2553
        %v2558 = vsel %vm835, %v2382, %v2526
        %v2559 = vsel %vm835, %v2385, %v2528
        %v2560 = vsel %vm835, %v2388, %v2530
        %v2561 = vsel %vm1498, %v2558, %v2538
        %v2562 = vsel %vm1498, %v2559, %v2540
        %v2563 = vsel %vm1498, %v2560, %v2542
        %v2564 = vsel %vm1006, %v2561, %v2550
        %v2565 = vsel %vm1006, %v2562, %v2552
        %v2566 = vsel %vm1006, %v2563, %v2554
        %v2567 = vld [vmem:[%s16] sm:$0xff]
        %v2568 = vld [vmem:[%s16 + $0x8] sm:$0xff]
        %v2569 = vld [vmem:[%s16 + $0x10] sm:$0xff]
        %v2570 = vld [vmem:[%s16 + $0x18] sm:$0xff]
        %v2571 = vld [vmem:[%s17] sm:$0x1]
        %v2573 = vperm.slane %v2571, 0
        %v2576 = vsel %vm772, %v2564, 0
        %v2579 = vsel %vm772, %v2565, 0
        %v2582 = vsel %vm772, %v2566, 0
        %2584 = vmatpush.msra.mxu0 0.0
        %2585 = vmatpush.msra.mxu0 0.0
        %2586 = vmatpush.msra.mxu0 0.0
        %2587 = vmatpush.msra.mxu0 0.0
        %2588 = vmatpush.msra.mxu0 0.0
        %2589 = vmatpush.msra.mxu0 0.0
        %2590 = vmatpush.msra.mxu0 0.0
        %2591 = vmatpush.msra.mxu0 0.0
        %2592 = vmatpush.msra.mxu0 0.0
        %2593 = vmatpush.msra.mxu0 0.0
        %2594 = vmatpush.msra.mxu0 0.0
        %2595 = vmatpush.msra.mxu0 0.0
        %2596 = vmatpush.msra.mxu0 %v2570
        %2597 = vmatpush.msra.mxu0 %v2569
        %2598 = vmatpush.msra.mxu0 %v2568
        %2599 = vmatpush.msra.mxu0 %v2567
        %2600 = vmatmul.f32.gmra.mxu0 %v2576
        %v2601 = vpop.f32.mrf.mxu0
        %v2602 = vadd.f32 %v2573, %v2601
        %2603 = vmatmul.f32.gmra.mxu0 %v2579
        %v2604 = vpop.f32.mrf.mxu0
        %v2605 = vadd.f32 %v2573, %v2604
        %2606 = vmatmul.f32.gmra.mxu0 %v2582
        %v2607 = vpop.f32.mrf.mxu0
        %v2608 = vadd.f32 %v2573, %v2607
        %2609 = vdwg.mxu0
        %v2610 = vadd.f32 %v1747, %v2602
        %v2611 = vadd.f32 %v1748, %v2605
        %v2612 = vadd.f32 %v1749, %v2608
        %v2613 = vld [vmem:[%s18] sm:$0x1]
        %v2614 = vld [vmem:[%s19] sm:$0x1]
        %v2615 = vsel %vm772, %v2610, 0.0
        %2616 = vadd.xlane.f32.xlu0 %v2615
        %v2617 = vpop.xlane.xlu0 %2616
        %v2618 = vsel %vm772, %v2611, 0.0
        %2619 = vadd.xlane.f32.xlu0 %v2618
        %v2620 = vpop.xlane.xlu0 %2619
        %v2621 = vsel %vm772, %v2612, 0.0
        %2622 = vadd.xlane.f32.xlu0 %v2621
        %v2623 = vpop.xlane.xlu0 %2622
        %v2624 = vmul.f32 %v2617, %v1568
        %v2625 = vmul.f32 %v2620, %v1568
        %v2626 = vmul.f32 %v2623, %v1568
        %v2627 = vsub.f32 %v2610, %v2624
        %v2628 = vsub.f32 %v2611, %v2625
        %v2629 = vsub.f32 %v2612, %v2626
        %v2630 = vmul.f32 %v2627, %v2627
        %v2631 = vmul.f32 %v2628, %v2628
        %v2632 = vmul.f32 %v2629, %v2629
        %v2633 = vsel %vm772, %v2630, 0.0
        %2634 = vadd.xlane.f32.xlu0 %v2633
        %v2635 = vpop.xlane.xlu0 %2634
        %v2636 = vsel %vm772, %v2631, 0.0
        %2637 = vadd.xlane.f32.xlu0 %v2636
        %v2638 = vpop.xlane.xlu0 %2637
        %v2639 = vsel %vm772, %v2632, 0.0
        %2640 = vadd.xlane.f32.xlu0 %v2639
        %v2641 = vpop.xlane.xlu0 %2640
        %v2642 = vmul.f32 %v2635, %v1568
        %v2643 = vmul.f32 %v2638, %v1568
        %v2644 = vmul.f32 %v2641, %v1568
        %v2645 = vadd.f32 %v2642, 1e-05
        %v2646 = vadd.f32 %v2643, 1e-05
        %v2647 = vadd.f32 %v2644, 1e-05
        %v2648 = vrsqrt.pop %v2645
        %v2649 = vmul.f32 %v2648, %v2645
        %v2650 = vmul.f32 %v2649, %v2648
        %v2651 = vmul.f32 0.5, %v2650
        %v2652 = vsub.f32 1.5, %v2651
        %v2653 = vmul.f32 %v2648, %v2652
        %vm2654 = vweird.f32 %v2645
        %vm2655 = vweird.f32 %v2648
        %vm2656 = vmor %vm2654, %vm2655
        %v2657 = vsel %vm2656, %v2648, %v2653
        %v2658 = vrsqrt.pop %v2646
        %v2659 = vmul.f32 %v2658, %v2646
        %v2660 = vmul.f32 %v2659, %v2658
        %v2661 = vmul.f32 0.5, %v2660
        %v2662 = vsub.f32 1.5, %v2661
        %v2663 = vmul.f32 %v2658, %v2662
        %vm2664 = vweird.f32 %v2646
        %vm2665 = vweird.f32 %v2658
        %vm2666 = vmor %vm2664, %vm2665
        %v2667 = vsel %vm2666, %v2658, %v2663
        %v2668 = vrsqrt.pop %v2647
        %v2669 = vmul.f32 %v2668, %v2647
        %v2670 = vmul.f32 %v2669, %v2668
        %v2671 = vmul.f32 0.5, %v2670
        %v2672 = vsub.f32 1.5, %v2671
        %v2673 = vmul.f32 %v2668, %v2672
        %vm2674 = vweird.f32 %v2647
        %vm2675 = vweird.f32 %v2668
        %vm2676 = vmor %vm2674, %vm2675
        %v2677 = vsel %vm2676, %v2668, %v2673
        %v2678 = vmul.f32 %v2627, %v2657
        %v2679 = vmul.f32 %v2628, %v2667
        %v2680 = vmul.f32 %v2629, %v2677
        %v2682 = vperm.slane %v2613, 0
        %v2684 = vmul.f32 %v2678, %v2682
        %v2685 = vmul.f32 %v2679, %v2682
        %v2686 = vmul.f32 %v2680, %v2682
        %v2688 = vperm.slane %v2614, 0
        %v2690 = vadd.f32 %v2684, %v2688
        %v2691 = vadd.f32 %v2685, %v2688
        %v2692 = vadd.f32 %v2686, %v2688
        %v2693 = vld [vmem:[%s20] sm:$0xff]
        %v2694 = vld [vmem:[%s20 + $0x8] sm:$0xff]
        %v2695 = vld [vmem:[%s20 + $0x10] sm:$0xff]
        %v2696 = vld [vmem:[%s20 + $0x18] sm:$0xff]
        %v2697 = vld [vmem:[%s21] sm:$0x1]
        %v2699 = vperm.slane %v2697, 0
        %v2702 = vsel %vm772, %v2690, 0
        %v2705 = vsel %vm772, %v2691, 0
        %v2708 = vsel %vm772, %v2692, 0
        %2710 = vmatpush.msra.mxu0 0.0
        %2711 = vmatpush.msra.mxu0 0.0
        %2712 = vmatpush.msra.mxu0 0.0
        %2713 = vmatpush.msra.mxu0 0.0
        %2714 = vmatpush.msra.mxu0 0.0
        %2715 = vmatpush.msra.mxu0 0.0
        %2716 = vmatpush.msra.mxu0 0.0
        %2717 = vmatpush.msra.mxu0 0.0
        %2718 = vmatpush.msra.mxu0 0.0
        %2719 = vmatpush.msra.mxu0 0.0
        %2720 = vmatpush.msra.mxu0 0.0
        %2721 = vmatpush.msra.mxu0 0.0
        %2722 = vmatpush.msra.mxu0 %v2696
        %2723 = vmatpush.msra.mxu0 %v2695
        %2724 = vmatpush.msra.mxu0 %v2694
        %2725 = vmatpush.msra.mxu0 %v2693
        %2726 = vmatmul.f32.gmra.mxu0 %v2702
        %v2727 = vpop.f32.mrf.mxu0
        %v2728 = vadd.f32 %v2699, %v2727
        %2729 = vmatmul.f32.gmra.mxu0 %v2705
        %v2730 = vpop.f32.mrf.mxu0
        %v2731 = vadd.f32 %v2699, %v2730
        %2732 = vmatmul.f32.gmra.mxu0 %v2708
        %v2733 = vpop.f32.mrf.mxu0
        %v2734 = vadd.f32 %v2699, %v2733
        %2735 = vdwg.mxu0
        %v2736 = vmax.f32 %v2728, 0.0
        %v2737 = vmax.f32 %v2731, 0.0
        %v2738 = vmax.f32 %v2734, 0.0
        %2742 = vrot.lane.b32.xlu0 %v2736, 64
        %v2743 = vpop.permute.xlu0 %2742
        %2744 = vrot.lane.b32.xlu0 %v2737, 64
        %v2745 = vpop.permute.xlu0 %2744
        %2746 = vrot.lane.b32.xlu0 %v2738, 64
        %v2747 = vpop.permute.xlu0 %2746
        %v2751 = vmul.f32 %v2728, %v2743
        %v2752 = vmul.f32 %v2731, %v2745
        %v2753 = vmul.f32 %v2734, %v2747
        %v2754 = vld [vmem:[%s22] sm:$0xff]
        %v2755 = vld [vmem:[%s22 + $0x8] sm:$0xff]
        %v2756 = vld [vmem:[%s22 + $0x10] sm:$0xff]
        %v2757 = vld [vmem:[%s22 + $0x18] sm:$0xff]
        %v2758 = vld [vmem:[%s22 + $0x20] sm:$0xff]
        %v2759 = vld [vmem:[%s22 + $0x28] sm:$0xff]
        %v2760 = vld [vmem:[%s22 + $0x30] sm:$0xff]
        %v2761 = vld [vmem:[%s22 + $0x38] sm:$0xff]
        %v2762 = vld [vmem:[%s23] sm:$0x1]
        %v2764 = vperm.slane %v2762, 0
        %v2767 = vsel %vm1711, %v2751, 0
        %v2770 = vsel %vm1711, %v2752, 0
        %v2773 = vsel %vm1711, %v2753, 0
        %2775 = vmatpush.msra.mxu0 0.0
        %2776 = vmatpush.msra.mxu0 0.0
        %2777 = vmatpush.msra.mxu0 0.0
        %2778 = vmatpush.msra.mxu0 0.0
        %2779 = vmatpush.msra.mxu0 0.0
        %2780 = vmatpush.msra.mxu0 0.0
        %2781 = vmatpush.msra.mxu0 0.0
        %2782 = vmatpush.msra.mxu0 0.0
        %2783 = vmatpush.msra.mxu0 %v2761
        %2784 = vmatpush.msra.mxu0 %v2760
        %2785 = vmatpush.msra.mxu0 %v2759
        %2786 = vmatpush.msra.mxu0 %v2758
        %2787 = vmatpush.msra.mxu0 %v2757
        %2788 = vmatpush.msra.mxu0 %v2756
        %2789 = vmatpush.msra.mxu0 %v2755
        %2790 = vmatpush.msra.mxu0 %v2754
        %2791 = vmatmul.f32.gmra.mxu0 %v2767
        %v2792 = vpop.f32.mrf.mxu0
        %v2793 = vadd.f32 %v2764, %v2792
        %2794 = vmatmul.f32.gmra.mxu0 %v2770
        %v2795 = vpop.f32.mrf.mxu0
        %v2796 = vadd.f32 %v2764, %v2795
        %2797 = vmatmul.f32.gmra.mxu0 %v2773
        %v2798 = vpop.f32.mrf.mxu0
        %v2799 = vadd.f32 %v2764, %v2798
        %2800 = vdwg.mxu0
        %v2801 = vadd.f32 %v2610, %v2793
        %v2802 = vadd.f32 %v2611, %v2796
        %v2803 = vadd.f32 %v2612, %v2799
        %2804 = vst.msk [vmem:[%s756] sm:$0xff] %vm772, %v2801
        %2805 = vst.msk [vmem:[%s756 + $0x8] sm:$0xff] %vm772, %v2802
        %2806 = vst.msk [vmem:[%s756 + $0x10] sm:$0xff] %vm772, %v2803
        %s2807 = smul.u32 3, %s36
        %p2808 = scmp.lt.s32.totalorder %s2807, 5
        %s2809 = scalar_select %p2808, %s2807, 5
        %s2810 = smul.addr %s2809, 8
        %s2811 = scalar_lea.vmem %s24, %s2810
        // Predicated region
        $region121: #{tpu_custom_call.1} parent=115 // pred_check
          %p2812 = pneg %p563
        $region122: #{tpu_custom_call.1} parent=115 // pred_check_branch
          %2814 = sbr.rel (%p2812) target = $region124
        $region123: #{tpu_custom_call.1} parent=115 // pred_region
          %s2815 = smul.u32 3, %s36
        $region124: #{tpu_custom_call.1} parent=115 // pred_fallthru
          _
      $region116: #{tpu_custom_call.1} parent=5 // pred_fallthru
        _
      %p2816 = scmp.le.s32.totalorder 2, %s31
      // Predicated region
      $region125: #{tpu_custom_call.1} parent=5 // pred_check
        %p2817 = pneg %p2816
      $region126: #{tpu_custom_call.1} parent=5 // pred_check_branch
        %2819 = sbr.rel (%p2817) target = $region128
      $region127: #{tpu_custom_call.1} parent=5 // pred_region
        %s2820 = ssub.s32 %s31, 2
        // Predicated region
        $region129: #{tpu_custom_call.1} parent=127 // pred_check
          %p2821 = pneg %p569
        $region130: #{tpu_custom_call.1} parent=127 // pred_check_branch
          %2823 = sbr.rel (%p2821) target = $region132
        $region131: #{tpu_custom_call.1} parent=127 // pred_region
          %s2824 = smul.u32 3, %s37
          %p2825 = scmp.lt.s32.totalorder %s2824, 5
          %s2826 = scalar_select %p2825, %s2824, 5
          %s2827 = smul.addr %s2826, 8
          %s2828 = scalar_lea.vmem %s24, %s2827
        $region132: #{tpu_custom_call.1} parent=127 // pred_fallthru
          _
      $region128: #{tpu_custom_call.1} parent=5 // pred_fallthru
        _
    $region6: #{tpu_custom_call.1} parent=1 // loop_footer
      %s35 = sadd.s32 1, %s31
    $region7: #{tpu_custom_call.1} parent=1 // loop_footer_branch
      %30 = sbr.rel target = $region3
    $region8: #{tpu_custom_call.1} parent=1 // loop_exit
      _
    %2829 = vsyncpa [#allocation3], 1
    %s2830 = scalar_lea.sflag [#allocation3], 1
    %2831 = vsyncpa %s2830, 1

</llo_original>
